<compile_context>
chip_gen: v6e
topology: v6e:2x2x1
jax: 0.10.0
libtpu: 0.0.40
codegen_flags: <defaults>
</compile_context>

<pallas_src>
import functools

import jax
import jax.numpy as jnp
from jax import lax
from jax.experimental import pallas as pl
from jax.experimental.pallas import tpu as pltpu


def _round_up(x, m):
    return (x + m - 1) // m * m


def _pad_axis(x, axis, multiple):
    size = x.shape[axis]
    target = _round_up(size, multiple)
    if target == size:
        return x
    pads = [(0, 0)] * x.ndim
    pads[axis] = (0, target - size)
    return jnp.pad(x, pads)


# ----------------------------------------------------------------------------
# Pallas kernel: fused  (X @ W) + shift  ->  ReLU / Tanh.
#   * ConvTranspose bias + eval-mode BN are pre-folded into W / shift.
#   * Operands are bf16 on the optimized path; accumulation and the epilogue
#     stay f32 (v5e has no bf16 VPU/EUP path).
# ----------------------------------------------------------------------------
def _fused_matmul_kernel(x_ref, w_ref, shift_ref, o_ref, *, activation):
    z = jnp.dot(x_ref[...], w_ref[...], preferred_element_type=jnp.float32)
    z = z + shift_ref[...]                 # (1, C) or (M, 1) broadcast, f32
    if activation == "relu":
        z = jnp.maximum(z, 0.0)
    elif activation == "tanh":
        z = jnp.tanh(z)
    o_ref[...] = z.astype(o_ref.dtype)


def fused_matmul(x, w, shift, activation, out_dtype):
    """x: (M, K), w: (K, C), shift: (1, C) or (M, 1)  ->  (M, C)."""
    M, K = x.shape
    Kw, C = w.shape
    assert K == Kw, (K, Kw)
    kernel = functools.partial(_fused_matmul_kernel, activation=activation)
    # Problem sizes are tiny (largest operand < 1 MiB): one full-array block
    # per call, fully VMEM resident, no grid needed.  If batch were scaled up,
    # add a grid over M (block M a multiple of 8) with
    # dimension_semantics=("parallel",) so v7x can shard across both cores.
    return pl.pallas_call(
        kernel,
        out_shape=jax.ShapeDtypeStruct((M, C), out_dtype),
        in_specs=[pl.BlockSpec(memory_space=pltpu.MemorySpace.VMEM)] * 3,
        out_specs=pl.BlockSpec(memory_space=pltpu.MemorySpace.VMEM),
    )(x, w, shift)


# ----------------------------------------------------------------------------
# Generator forward (whole thing jitted; cfg and compute dtype are static).
# ----------------------------------------------------------------------------
@functools.partial(jax.jit, static_argnames=("cfg", "compute_dtype"))
def generator_forward(noise, weights, shifts, *, cfg, compute_dtype=jnp.bfloat16):
    """noise: (N, input_dim) -> (N, im_chan, 28, 28) in NCHW (PyTorch layout)."""
    N = noise.shape[0]
    w1, w2, w3, w4 = weights
    s1, s2, s3, s4 = shifts
    (k1, _, c1, act1), cfg2, cfg3, (k4, st4, c4, act4) = cfg

    # ---- Block 1: 1x1 spatial input -> plain matmul (no im2col / dilation):
    #   out[n, a, b, co] = shift[co] + sum_ci noise[n, ci] * (w[ci, co, a, b]*scale[co])
    x0 = _pad_axis(_pad_axis(noise.astype(compute_dtype), 0, 8), 1, 128)
    y1 = fused_matmul(x0, w1.astype(compute_dtype), s1, act1, compute_dtype)
    x = y1[:N, : k1 * k1 * c1].reshape(N, k1, k1, c1)           # NHWC (N,3,3,4h)

    # ---- Blocks 2 & 3: conv_transpose == conv(dilate+pad(x), rot180(w)).
    # Dilation + padding is one lax.pad with interior padding (no strided
    # scatter); im2col is K*K static shifted slices; matmul+BN+ReLU fused in
    # the Pallas kernel.  K / Cout padded to 128-multiples, M to 8-multiples.
    def block(x, w, shift, layer_cfg):
        k, s, cout, act = layer_cfg
        n, h, _, cin = x.shape
        oh = (h - 1) * s + k
        zero = jnp.zeros((), x.dtype)
        xp = lax.pad(x, zero, ((0, 0, 0), (k - 1, k - 1, s - 1),
                               (k - 1, k - 1, s - 1), (0, 0, 0)))
        taps = [xp[:, a:a + oh, b:b + oh, :] for a in range(k) for b in range(k)]
        xcol = jnp.stack(taps, axis=3).reshape(n * oh * oh, k * k * cin)
        xcol = _pad_axis(_pad_axis(xcol, 0, 8), 1, 128)
        y = fused_matmul(xcol, w.astype(compute_dtype), shift, act, compute_dtype)
        return y[: n * oh * oh, :cout].reshape(n, oh, oh, cout)

    x = block(x, w2, s2, cfg2)                                   # (N, 6, 6, 2h)
    x = block(x, w3, s3, cfg3)                                   # (N, 13, 13, h)

    # ---- Block 4 (Cout = im_chan = 1): computed transposed so the kernel
    # output is lane-dense -- (im_chan padded to 8, N*28*28) instead of
    # (N*28*28, 1) -- avoiding one-valid-lane masked stores.
    n, h, _, cin = x.shape
    oh = (h - 1) * st4 + k4                                      # 28
    zero = jnp.zeros((), x.dtype)
    xp = lax.pad(x, zero, ((0, 0, 0), (k4 - 1, k4 - 1, st4 - 1),
                           (k4 - 1, k4 - 1, st4 - 1), (0, 0, 0)))  # (N,31,31,h)
    taps = [jnp.transpose(xp[:, a:a + oh, b:b + oh, :], (3, 0, 1, 2))
              .reshape(cin, n * oh * oh)
            for a in range(k4) for b in range(k4)]
    xcol_t = jnp.concatenate(taps, axis=0)                       # (K*K*Cin, N*OH*OW)
    xcol_t = _pad_axis(_pad_axis(xcol_t, 0, 128), 1, 128)
    y4 = fused_matmul(w4.astype(compute_dtype), xcol_t, s4, act4, jnp.float32)
    y4 = y4[:c4, : n * oh * oh].reshape(c4, n, oh, oh)
    return jnp.transpose(y4, (1, 0, 2, 3))                       # NCHW (N,1,28,28)


# ----------------------------------------------------------------------------
# Parameters (deterministic, in-script).
# ----------------------------------------------------------------------------
def init_params(key, input_dim, hidden_dim, im_chan):
    cfgs = [
        (input_dim,      hidden_dim * 4, 3, 2, False),
        (hidden_dim * 4, hidden_dim * 2, 4, 1, False),
        (hidden_dim * 2, hidden_dim,     3, 2, False),
        (hidden_dim,     im_chan,        4, 2, True),
    ]
    raw = []
    for cin, cout, k, s, final in cfgs:
        key, k1, k2, k3, k4, k5, k6 = jax.random.split(key, 7)
        p = dict(
            w=jax.random.normal(k1, (cin, cout, k, k), jnp.float32) * 0.05,
            b=jax.random.normal(k2, (cout,), jnp.float32) * 0.05,
            stride=s, ksize=k, cin=cin, cout=cout, final=final)
        if not final:
            p["gamma"] = 1.0 + 0.1 * jax.random.normal(k3, (cout,), jnp.float32)
            p["beta"] = 0.1 * jax.random.normal(k4, (cout,), jnp.float32)
            p["mean"] = 0.1 * jax.random.normal(k5, (cout,), jnp.float32)
            p["var"] = jnp.abs(jax.random.normal(k6, (cout,), jnp.float32)) + 0.5
        raw.append(p)
    return raw


def prepare_params(raw):
    """Fold ConvTranspose bias + eval-mode BN into (weight, shift) and build the
    padded, matmul-ready weight matrices (all done once, outside the jit)."""
    weights, shifts, cfg = [], [], []
    eps = 1e-5
    for li, p in enumerate(raw):
        w, b, k, s = p["w"], p["b"], p["ksize"], p["stride"]
        cin, cout = p["cin"], p["cout"]
        if p["final"]:
            scale = jnp.ones((cout,), jnp.float32)
            shift = b
            act = "tanh"
        else:
            scale = p["gamma"] / jnp.sqrt(p["var"] + eps)
            shift = p["beta"] + (b - p["mean"]) * scale
            act = "relu"
        w_s = w * scale[None, :, None, None]          # fold BN scale into weights
        if li == 0:
            # 1x1-input layer: columns ordered (a, b, co).
            wmat = jnp.transpose(w_s, (0, 2, 3, 1)).reshape(cin, k * k * cout)
            wmat = _pad_axis(_pad_axis(wmat, 0, 128), 1, 128)
            sh = _pad_axis(jnp.tile(shift, k * k)[None, :], 1, 128)
        else:
            # conv(dilate+pad(x), rot180(w)): rows ordered (a, b, ci).
            wf = jnp.flip(w_s, axis=(2, 3))
            wmat = jnp.transpose(wf, (2, 3, 0, 1)).reshape(k * k * cin, cout)
            if li < 3:
                wmat = _pad_axis(_pad_axis(wmat, 0, 128), 1, 128)
                sh = _pad_axis(shift[None, :], 1, 128)
            else:
                # Final layer stored transposed (lane-dense output path).
                wmat = _pad_axis(_pad_axis(wmat.T, 0, 8), 1, 128)
                sh = _pad_axis(shift[:, None], 0, 8)
        weights.append(wmat)
        shifts.append(sh)
        cfg.append((k, s, cout, act))
    return tuple(weights), tuple(shifts), tuple(cfg)


# ----------------------------------------------------------------------------
# Pure-JAX reference (lax.conv_general_dilated) for correctness checking.
# ----------------------------------------------------------------------------
def reference_forward(noise, raw):
    N = noise.shape[0]
    x = noise.reshape(N, raw[0]["cin"], 1, 1)                    # NCHW
    for p in raw:
        w, b, k, s = p["w"], p["b"], p["ksize"], p["stride"]
        # ConvTranspose2d(stride=s, pad=0) == conv(dilate_s(x), rot180(w) io-swapped).
        wf = jnp.transpose(jnp.flip(w, (2, 3)), (1, 0, 2, 3))    # (Cout, Cin, K, K)
        y = lax.conv_general_dilated(
            x, wf, window_strides=(1, 1),
            padding=((k - 1, k - 1), (k - 1, k - 1)),
            lhs_dilation=(s, s),
            dimension_numbers=("NCHW", "OIHW", "NCHW"),
            precision=lax.Precision.HIGHEST)
        y = y + b[None, :, None, None]
        if p["final"]:
            x = jnp.tanh(y)
        else:
            inv = 1.0 / jnp.sqrt(p["var"] + 1e-5)
            y = (y - p["mean"][None, :, None, None]) * inv[None, :, None, None]
            x = jnp.maximum(p["gamma"][None, :, None, None] * y
                            + p["beta"][None, :, None, None], 0.0)
    return x


if __name__ == "__main__":
    input_dim, hidden_dim, im_chan, batch = 10, 16, 1, 2

    key = jax.random.PRNGKey(0)
    k_params, k_noise = jax.random.split(key)
    raw = init_params(k_params, input_dim, hidden_dim, im_chan)
    weights, shifts, cfg = prepare_params(raw)
    noise = jax.random.normal(k_noise, (batch, input_dim), jnp.float32)

    # Correctness: f32-operand kernel path vs the pure-JAX conv reference.
    out_f32 = generator_forward(noise, weights, shifts, cfg=cfg,
                                compute_dtype=jnp.float32)
    ref = reference_forward(noise, raw)
    assert out_f32.shape == ref.shape == (batch, im_chan, 28, 28)
    max_err = float(jnp.max(jnp.abs(out_f32 - ref)))
    assert max_err < 5e-2, f"kernel/reference mismatch: {max_err}"

    # Optimized path: bf16 MXU operands, f32 accumulation + f32 epilogue.
    out = generator_forward(noise, weights, shifts, cfg=cfg,
                            compute_dtype=jnp.bfloat16)
    out = jax.block_until_ready(out)

    assert out.shape == (batch, im_chan, 28, 28), out.shape
    assert bool(jnp.all(jnp.isfinite(out)))
    assert bool(jnp.all(jnp.abs(out) <= 1.0 + 1e-6))   # tanh output range
    print("KERNEL_OK")
</pallas_src>

<mosaic_0001>
module attributes {stable_mosaic.version = 11 : i64} {
  func.func @_fused_matmul_kernel(%arg0: memref<8x128xf32, #tpu.memory_space<vmem>>, %arg1: memref<128x640xf32, #tpu.memory_space<vmem>>, %arg2: memref<1x640xf32, #tpu.memory_space<vmem>>, %arg3: memref<8x640xf32, #tpu.memory_space<vmem>>) attributes {dimension_semantics = [], scalar_prefetch = 0 : i64, scratch_operands = 0 : i64, tpu.core_type = #tpu.core_type<tc>} {
    %c0 = arith.constant 0 : index
    %c0_0 = arith.constant 0 : index
    %0 = vector.load %arg0[%c0, %c0_0] : memref<8x128xf32, #tpu.memory_space<vmem>>, vector<8x128xf32>
    %c0_1 = arith.constant 0 : index
    %c0_2 = arith.constant 0 : index
    %1 = vector.load %arg1[%c0_1, %c0_2] : memref<128x640xf32, #tpu.memory_space<vmem>>, vector<128x640xf32>
    %cst = arith.constant dense<0.000000e+00> : vector<8x640xf32>
    %2 = tpu.matmul %0, %1, %cst {dimension_numbers = #tpu.dot_dimension_numbers<[1], [0], [0], [1], [0, 0, 1, 1], [], []>} : vector<8x128xf32>, vector<128x640xf32>, vector<8x640xf32> -> vector<8x640xf32>
    %c0_3 = arith.constant 0 : index
    %c0_4 = arith.constant 0 : index
    %3 = vector.load %arg2[%c0_3, %c0_4] : memref<1x640xf32, #tpu.memory_space<vmem>>, vector<1x640xf32>
    %4 = vector.broadcast %3 : vector<1x640xf32> to vector<8x640xf32>
    %5 = arith.addf %2, %4 : vector<8x640xf32>
    %cst_5 = arith.constant 0.000000e+00 : f32
    %6 = vector.broadcast %cst_5 : f32 to vector<8x640xf32>
    %7 = arith.maximumf %5, %6 : vector<8x640xf32>
    %c0_6 = arith.constant 0 : index
    %c0_7 = arith.constant 0 : index
    %8 = vector.load %arg3[%c0_6, %c0_7] : memref<8x640xf32, #tpu.memory_space<vmem>>, vector<8x640xf32>
    tpu.vector_store %arg3[%c0_6, %c0_7], %7 {strides = array<i32>} : memref<8x640xf32, #tpu.memory_space<vmem>>, vector<8x640xf32>,
    return
  }
}

module attributes {stable_mosaic.version = 11 : i64} {
  func.func @_fused_matmul_kernel(%arg0: memref<72x1024xf32, #tpu.memory_space<vmem>>, %arg1: memref<1024x128xf32, #tpu.memory_space<vmem>>, %arg2: memref<1x128xf32, #tpu.memory_space<vmem>>, %arg3: memref<72x128xf32, #tpu.memory_space<vmem>>) attributes {dimension_semantics = [], scalar_prefetch = 0 : i64, scratch_operands = 0 : i64, tpu.core_type = #tpu.core_type<tc>} {
    %c0 = arith.constant 0 : index
    %c0_0 = arith.constant 0 : index
    %0 = vector.load %arg0[%c0, %c0_0] : memref<72x1024xf32, #tpu.memory_space<vmem>>, vector<72x1024xf32>
    %c0_1 = arith.constant 0 : index
    %c0_2 = arith.constant 0 : index
    %1 = vector.load %arg1[%c0_1, %c0_2] : memref<1024x128xf32, #tpu.memory_space<vmem>>, vector<1024x128xf32>
    %cst = arith.constant dense<0.000000e+00> : vector<72x128xf32>
    %2 = tpu.matmul %0, %1, %cst {dimension_numbers = #tpu.dot_dimension_numbers<[1], [0], [0], [1], [0, 0, 1, 1], [], []>} : vector<72x1024xf32>, vector<1024x128xf32>, vector<72x128xf32> -> vector<72x128xf32>
    %c0_3 = arith.constant 0 : index
    %c0_4 = arith.constant 0 : index
    %3 = vector.load %arg2[%c0_3, %c0_4] : memref<1x128xf32, #tpu.memory_space<vmem>>, vector<1x128xf32>
    %4 = vector.broadcast %3 : vector<1x128xf32> to vector<72x128xf32>
    %5 = arith.addf %2, %4 : vector<72x128xf32>
    %cst_5 = arith.constant 0.000000e+00 : f32
    %6 = vector.broadcast %cst_5 : f32 to vector<72x128xf32>
    %7 = arith.maximumf %5, %6 : vector<72x128xf32>
    %c0_6 = arith.constant 0 : index
    %c0_7 = arith.constant 0 : index
    %8 = vector.load %arg3[%c0_6, %c0_7] : memref<72x128xf32, #tpu.memory_space<vmem>>, vector<72x128xf32>
    tpu.vector_store %arg3[%c0_6, %c0_7], %7 {strides = array<i32>} : memref<72x128xf32, #tpu.memory_space<vmem>>, vector<72x128xf32>,
    return
  }
}

module attributes {stable_mosaic.version = 11 : i64} {
  func.func @_fused_matmul_kernel(%arg0: memref<344x384xf32, #tpu.memory_space<vmem>>, %arg1: memref<384x128xf32, #tpu.memory_space<vmem>>, %arg2: memref<1x128xf32, #tpu.memory_space<vmem>>, %arg3: memref<344x128xf32, #tpu.memory_space<vmem>>) attributes {dimension_semantics = [], scalar_prefetch = 0 : i64, scratch_operands = 0 : i64, tpu.core_type = #tpu.core_type<tc>} {
    %c0 = arith.constant 0 : index
    %c0_0 = arith.constant 0 : index
    %0 = vector.load %arg0[%c0, %c0_0] : memref<344x384xf32, #tpu.memory_space<vmem>>, vector<344x384xf32>
    %c0_1 = arith.constant 0 : index
    %c0_2 = arith.constant 0 : index
    %1 = vector.load %arg1[%c0_1, %c0_2] : memref<384x128xf32, #tpu.memory_space<vmem>>, vector<384x128xf32>
    %cst = arith.constant dense<0.000000e+00> : vector<344x128xf32>
    %2 = tpu.matmul %0, %1, %cst {dimension_numbers = #tpu.dot_dimension_numbers<[1], [0], [0], [1], [0, 0, 1, 1], [], []>} : vector<344x384xf32>, vector<384x128xf32>, vector<344x128xf32> -> vector<344x128xf32>
    %c0_3 = arith.constant 0 : index
    %c0_4 = arith.constant 0 : index
    %3 = vector.load %arg2[%c0_3, %c0_4] : memref<1x128xf32, #tpu.memory_space<vmem>>, vector<1x128xf32>
    %4 = vector.broadcast %3 : vector<1x128xf32> to vector<344x128xf32>
    %5 = arith.addf %2, %4 : vector<344x128xf32>
    %cst_5 = arith.constant 0.000000e+00 : f32
    %6 = vector.broadcast %cst_5 : f32 to vector<344x128xf32>
    %7 = arith.maximumf %5, %6 : vector<344x128xf32>
    %c0_6 = arith.constant 0 : index
    %c0_7 = arith.constant 0 : index
    %8 = vector.load %arg3[%c0_6, %c0_7] : memref<344x128xf32, #tpu.memory_space<vmem>>, vector<344x128xf32>
    tpu.vector_store %arg3[%c0_6, %c0_7], %7 {strides = array<i32>} : memref<344x128xf32, #tpu.memory_space<vmem>>, vector<344x128xf32>,
    return
  }
}

module attributes {stable_mosaic.version = 11 : i64} {
  func.func @_fused_matmul_kernel(%arg0: memref<8x256xf32, #tpu.memory_space<vmem>>, %arg1: memref<256x1664xf32, #tpu.memory_space<vmem>>, %arg2: memref<8x1xf32, #tpu.memory_space<vmem>>, %arg3: memref<8x1664xf32, #tpu.memory_space<vmem>>) attributes {dimension_semantics = [], scalar_prefetch = 0 : i64, scratch_operands = 0 : i64, tpu.core_type = #tpu.core_type<tc>} {
    %c0 = arith.constant 0 : index
    %c0_0 = arith.constant 0 : index
    %0 = vector.load %arg0[%c0, %c0_0] : memref<8x256xf32, #tpu.memory_space<vmem>>, vector<8x256xf32>
    %c0_1 = arith.constant 0 : index
    %c0_2 = arith.constant 0 : index
    %1 = vector.load %arg1[%c0_1, %c0_2] : memref<256x1664xf32, #tpu.memory_space<vmem>>, vector<256x1664xf32>
    %cst = arith.constant dense<0.000000e+00> : vector<8x1664xf32>
    %2 = tpu.matmul %0, %1, %cst {dimension_numbers = #tpu.dot_dimension_numbers<[1], [0], [0], [1], [0, 0, 1, 1], [], []>} : vector<8x256xf32>, vector<256x1664xf32>, vector<8x1664xf32> -> vector<8x1664xf32>
    %c0_3 = arith.constant 0 : index
    %c0_4 = arith.constant 0 : index
    %3 = vector.load %arg2[%c0_3, %c0_4] : memref<8x1xf32, #tpu.memory_space<vmem>>, vector<8x1xf32>
    %4 = vector.broadcast %3 : vector<8x1xf32> to vector<8x1664xf32>
    %5 = arith.addf %2, %4 : vector<8x1664xf32>
    %6 = math.tanh %5 : vector<8x1664xf32>
    %c0_5 = arith.constant 0 : index
    %c0_6 = arith.constant 0 : index
    %7 = vector.load %arg3[%c0_5, %c0_6] : memref<8x1664xf32, #tpu.memory_space<vmem>>, vector<8x1664xf32>
    tpu.vector_store %arg3[%c0_5, %c0_6], %6 {strides = array<i32>} : memref<8x1664xf32, #tpu.memory_space<vmem>>, vector<8x1664xf32>,
    return
  }
}

</mosaic_0001>

<llo_original>
// kernel: generator_forward.4
$region0: #{generator_forward.4}
  #allocation0 [shape = 'u32[]', space=smem, size = 0x4, offset = 0x4, fixed_abs, tag = 'smem constant byte address 0x4 - core index']
  #allocation1 [shape = 'u32[144,128]{1,0:T(1,128)}', space=vmem, size = 0x12000, scoped, tag = 'internal scratch']
  %s0 = inlined_call_operand.vmem [shape: f32[8,128], index: 0, kind: input, shape index: {}]
  %s1 = inlined_call_operand.hbm [shape: f32[128,640], index: 1, kind: input, shape index: {}]
  %s2 = inlined_call_operand.hbm [shape: f32[1,640], index: 2, kind: input, shape index: {}]
  %s3 = inlined_call_operand.vmem [shape: f32[8,640], index: 3, kind: output, shape index: {}]
  %s4 = sld [smem:[#allocation0]]
  $region30: #{generator_forward.4} parent=0
    _
  %s6 = ssub.s32 1, %s4
  %s7 = scalar_select 0, %s6, %s4
  $region1: #{generator_forward.4} parent=0
    #allocation2 [shape = 'u8[327680]{0}', space=vmem, size = 0x50000, scoped, tag = 'input window, operand 1, single buffered']
    #allocation3 [shape = 's32[1]{0}', space=sflag, size = 0x4, scoped, tag = 'scoped memory for generator_forward.4']
    #allocation4 [shape = 'u8[2560]{0}', space=vmem, size = 0xc00, scoped, tag = 'input window, operand 2, single buffered']
    #allocation5 [shape = 's32[1]{0}', space=sflag, size = 0x4, scoped, tag = 'scoped memory for generator_forward.4']
    %8 = vsyncpa [#allocation3], 0
    %9 = vsyncpa [#allocation5], 0
    // Predicated region
    $region2: #{generator_forward.4} parent=1 // pred_check
      _
    $region3: #{generator_forward.4} parent=1 // pred_check_branch
      %11 = sbr.rel (0) target = $region5
    $region4: #{generator_forward.4} parent=1 // pred_region
      _
    $region5: #{generator_forward.4} parent=1 // pred_fallthru
      _
    // Predicated region
    $region6: #{generator_forward.4} parent=1 // pred_check
      _
    $region7: #{generator_forward.4} parent=1 // pred_check_branch
      %13 = sbr.rel (0) target = $region9
    $region8: #{generator_forward.4} parent=1 // pred_region
      %s15 = ssub.s32 10240, 10240
      %16 = vsyncadd [#allocation3], %s15
      %s17 = sshll.u32 [#allocation2], 4
      %s18 = int_to_ptr.vmem [resolvable:$true] %s17
      %23 = dma.hbm_to_vmem [thread:$0]  %s1, 10240, %s18, [#allocation3], 640, 640, 40
    $region9: #{generator_forward.4} parent=1 // pred_fallthru
      _
    // Predicated region
    $region10: #{generator_forward.4} parent=1 // pred_check
      _
    $region11: #{generator_forward.4} parent=1 // pred_check_branch
      %25 = sbr.rel (0) target = $region13
    $region12: #{generator_forward.4} parent=1 // pred_region
      %s27 = ssub.s32 80, 80
      %28 = vsyncadd [#allocation5], %s27
      %s30 = sshll.u32 [#allocation4], 4
      %s31 = int_to_ptr.vmem [resolvable:$true] %s30
      %33 = dma.hbm_to_vmem [thread:$0]  %s2, 80, %s31, [#allocation5]
    $region13: #{generator_forward.4} parent=1 // pred_fallthru
      _
    // Predicated region
    $region14: #{generator_forward.4} parent=1 // pred_check
      _
    $region15: #{generator_forward.4} parent=1 // pred_check_branch
      %35 = sbr.rel (0) target = $region17
    $region16: #{generator_forward.4} parent=1 // pred_region
      %36 = dma.done [#allocation3], 10240
    $region17: #{generator_forward.4} parent=1 // pred_fallthru
      _
    // Predicated region
    $region18: #{generator_forward.4} parent=1 // pred_check
      _
    $region19: #{generator_forward.4} parent=1 // pred_check_branch
      %38 = sbr.rel (0) target = $region21
    $region20: #{generator_forward.4} parent=1 // pred_region
      %39 = dma.done [#allocation5], 80
    $region21: #{generator_forward.4} parent=1 // pred_fallthru
      _
    %v40 = vld [vmem:[%s0] sm:$0xff]
    %v41 = vld [vmem:[#allocation2] sm:$0xff]
    %v42 = vld [vmem:[#allocation2 + $0x8] sm:$0xff]
    %v43 = vld [vmem:[#allocation2 + $0x10] sm:$0xff]
    %v44 = vld [vmem:[#allocation2 + $0x18] sm:$0xff]
    %v45 = vld [vmem:[#allocation2 + $0x20] sm:$0xff]
    %v46 = vld [vmem:[#allocation2 + $0x28] sm:$0xff]
    %v47 = vld [vmem:[#allocation2 + $0x30] sm:$0xff]
    %v48 = vld [vmem:[#allocation2 + $0x38] sm:$0xff]
    %v49 = vld [vmem:[#allocation2 + $0x40] sm:$0xff]
    %v50 = vld [vmem:[#allocation2 + $0x48] sm:$0xff]
    %v51 = vld [vmem:[#allocation2 + $0x50] sm:$0xff]
    %v52 = vld [vmem:[#allocation2 + $0x58] sm:$0xff]
    %v53 = vld [vmem:[#allocation2 + $0x60] sm:$0xff]
    %v54 = vld [vmem:[#allocation2 + $0x68] sm:$0xff]
    %v55 = vld [vmem:[#allocation2 + $0x70] sm:$0xff]
    %v56 = vld [vmem:[#allocation2 + $0x78] sm:$0xff]
    %v57 = vld [vmem:[#allocation2 + $0x80] sm:$0xff]
    %v58 = vld [vmem:[#allocation2 + $0x88] sm:$0xff]
    %v59 = vld [vmem:[#allocation2 + $0x90] sm:$0xff]
    %v60 = vld [vmem:[#allocation2 + $0x98] sm:$0xff]
    %v61 = vld [vmem:[#allocation2 + $0xa0] sm:$0xff]
    %v62 = vld [vmem:[#allocation2 + $0xa8] sm:$0xff]
    %v63 = vld [vmem:[#allocation2 + $0xb0] sm:$0xff]
    %v64 = vld [vmem:[#allocation2 + $0xb8] sm:$0xff]
    %v65 = vld [vmem:[#allocation2 + $0xc0] sm:$0xff]
    %v66 = vld [vmem:[#allocation2 + $0xc8] sm:$0xff]
    %v67 = vld [vmem:[#allocation2 + $0xd0] sm:$0xff]
    %v68 = vld [vmem:[#allocation2 + $0xd8] sm:$0xff]
    %v69 = vld [vmem:[#allocation2 + $0xe0] sm:$0xff]
    %v70 = vld [vmem:[#allocation2 + $0xe8] sm:$0xff]
    %v71 = vld [vmem:[#allocation2 + $0xf0] sm:$0xff]
    %v72 = vld [vmem:[#allocation2 + $0xf8] sm:$0xff]
    %v73 = vld [vmem:[#allocation2 + $0x100] sm:$0xff]
    %v74 = vld [vmem:[#allocation2 + $0x108] sm:$0xff]
    %v75 = vld [vmem:[#allocation2 + $0x110] sm:$0xff]
    %v76 = vld [vmem:[#allocation2 + $0x118] sm:$0xff]
    %v77 = vld [vmem:[#allocation2 + $0x120] sm:$0xff]
    %v78 = vld [vmem:[#allocation2 + $0x128] sm:$0xff]
    %v79 = vld [vmem:[#allocation2 + $0x130] sm:$0xff]
    %v80 = vld [vmem:[#allocation2 + $0x138] sm:$0xff]
    %v81 = vld [vmem:[#allocation2 + $0x140] sm:$0xff]
    %v82 = vld [vmem:[#allocation2 + $0x148] sm:$0xff]
    %v83 = vld [vmem:[#allocation2 + $0x150] sm:$0xff]
    %v84 = vld [vmem:[#allocation2 + $0x158] sm:$0xff]
    %v85 = vld [vmem:[#allocation2 + $0x160] sm:$0xff]
    %v86 = vld [vmem:[#allocation2 + $0x168] sm:$0xff]
    %v87 = vld [vmem:[#allocation2 + $0x170] sm:$0xff]
    %v88 = vld [vmem:[#allocation2 + $0x178] sm:$0xff]
    %v89 = vld [vmem:[#allocation2 + $0x180] sm:$0xff]
    %v90 = vld [vmem:[#allocation2 + $0x188] sm:$0xff]
    %v91 = vld [vmem:[#allocation2 + $0x190] sm:$0xff]
    %v92 = vld [vmem:[#allocation2 + $0x198] sm:$0xff]
    %v93 = vld [vmem:[#allocation2 + $0x1a0] sm:$0xff]
    %v94 = vld [vmem:[#allocation2 + $0x1a8] sm:$0xff]
    %v95 = vld [vmem:[#allocation2 + $0x1b0] sm:$0xff]
    %v96 = vld [vmem:[#allocation2 + $0x1b8] sm:$0xff]
    %v97 = vld [vmem:[#allocation2 + $0x1c0] sm:$0xff]
    %v98 = vld [vmem:[#allocation2 + $0x1c8] sm:$0xff]
    %v99 = vld [vmem:[#allocation2 + $0x1d0] sm:$0xff]
    %v100 = vld [vmem:[#allocation2 + $0x1d8] sm:$0xff]
    %v101 = vld [vmem:[#allocation2 + $0x1e0] sm:$0xff]
    %v102 = vld [vmem:[#allocation2 + $0x1e8] sm:$0xff]
    %v103 = vld [vmem:[#allocation2 + $0x1f0] sm:$0xff]
    %v104 = vld [vmem:[#allocation2 + $0x1f8] sm:$0xff]
    %v105 = vld [vmem:[#allocation2 + $0x200] sm:$0xff]
    %v106 = vld [vmem:[#allocation2 + $0x208] sm:$0xff]
    %v107 = vld [vmem:[#allocation2 + $0x210] sm:$0xff]
    %v108 = vld [vmem:[#allocation2 + $0x218] sm:$0xff]
    %v109 = vld [vmem:[#allocation2 + $0x220] sm:$0xff]
    %v110 = vld [vmem:[#allocation2 + $0x228] sm:$0xff]
    %v111 = vld [vmem:[#allocation2 + $0x230] sm:$0xff]
    %v112 = vld [vmem:[#allocation2 + $0x238] sm:$0xff]
    %v113 = vld [vmem:[#allocation2 + $0x240] sm:$0xff]
    %v114 = vld [vmem:[#allocation2 + $0x248] sm:$0xff]
    %v115 = vld [vmem:[#allocation2 + $0x250] sm:$0xff]
    %v116 = vld [vmem:[#allocation2 + $0x258] sm:$0xff]
    %v117 = vld [vmem:[#allocation2 + $0x260] sm:$0xff]
    %v118 = vld [vmem:[#allocation2 + $0x268] sm:$0xff]
    %v119 = vld [vmem:[#allocation2 + $0x270] sm:$0xff]
    %v120 = vld [vmem:[#allocation2 + $0x278] sm:$0xff]
    %v121 = vld [vmem:[#allocation4] sm:$0x1f]
    %v123 = vlaneseq
    %v124 = vshrl.u32 %v123, 7
    %v125 = vsub.s32 0, %v124
    %v126 = vrot.slane %v121, %v125
    %v127 = vlaneseq
    %v128 = vshrl.u32 %v127, 7
    %v129 = vsub.s32 1, %v128
    %v130 = vrot.slane %v121, %v129
    %v131 = vlaneseq
    %v132 = vshrl.u32 %v131, 7
    %v133 = vsub.s32 2, %v132
    %v134 = vrot.slane %v121, %v133
    %v135 = vlaneseq
    %v136 = vshrl.u32 %v135, 7
    %v137 = vsub.s32 3, %v136
    %v138 = vrot.slane %v121, %v137
    %v139 = vlaneseq
    %v140 = vshrl.u32 %v139, 7
    %v141 = vsub.s32 4, %v140
    %v142 = vrot.slane %v121, %v141
    %148 = vmatprep.subr.mxu0 %v117
    %149 = vmatpush1.msra.mxu0 %v116
    %150 = vmatprep.subr.mxu0 %v112
    %151 = vmatpush1.msra.mxu0 %v111
    %152 = vmatprep.subr.mxu0 %v107
    %153 = vmatpush1.msra.mxu0 %v106
    %154 = vmatprep.subr.mxu0 %v102
    %155 = vmatpush1.msra.mxu0 %v101
    %156 = vmatprep.subr.mxu0 %v97
    %157 = vmatpush1.msra.mxu0 %v96
    %158 = vmatprep.subr.mxu0 %v92
    %159 = vmatpush1.msra.mxu0 %v91
    %160 = vmatprep.subr.mxu0 %v87
    %161 = vmatpush1.msra.mxu0 %v86
    %162 = vmatprep.subr.mxu0 %v82
    %163 = vmatpush1.msra.mxu0 %v81
    %164 = vmatprep.subr.mxu0 %v77
    %165 = vmatpush1.msra.mxu0 %v76
    %166 = vmatprep.subr.mxu0 %v72
    %167 = vmatpush1.msra.mxu0 %v71
    %168 = vmatprep.subr.mxu0 %v67
    %169 = vmatpush1.msra.mxu0 %v66
    %170 = vmatprep.subr.mxu0 %v62
    %171 = vmatpush1.msra.mxu0 %v61
    %172 = vmatprep.subr.mxu0 %v57
    %173 = vmatpush1.msra.mxu0 %v56
    %174 = vmatprep.subr.mxu0 %v52
    %175 = vmatpush1.msra.mxu0 %v51
    %176 = vmatprep.subr.mxu0 %v47
    %177 = vmatpush1.msra.mxu0 %v46
    %178 = vmatprep.subr.mxu0 %v42
    %179 = vmatpush1.msra.mxu0 %v41
    %180 = vmatprep.subr.mxu0 0.0
    %181 = vmatpush2.msra.mxu0 0.0
    %182 = vmatprep.subr.mxu0 0.0
    %183 = vmatpush2.msra.mxu0 0.0
    %184 = vmatprep.subr.mxu0 0.0
    %185 = vmatpush2.msra.mxu0 0.0
    %186 = vmatprep.subr.mxu0 0.0
    %187 = vmatpush2.msra.mxu0 0.0
    %188 = vmatprep.subr.mxu0 0.0
    %189 = vmatpush2.msra.mxu0 0.0
    %190 = vmatprep.subr.mxu0 0.0
    %191 = vmatpush2.msra.mxu0 0.0
    %192 = vmatprep.subr.mxu0 0.0
    %193 = vmatpush2.msra.mxu0 0.0
    %194 = vmatprep.subr.mxu0 0.0
    %195 = vmatpush2.msra.mxu0 0.0
    %196 = vmatprep.subr.mxu0 0.0
    %197 = vmatpush2.msra.mxu0 0.0
    %198 = vmatprep.subr.mxu0 0.0
    %199 = vmatpush2.msra.mxu0 0.0
    %200 = vmatprep.subr.mxu0 0.0
    %201 = vmatpush2.msra.mxu0 0.0
    %202 = vmatprep.subr.mxu0 0.0
    %203 = vmatpush2.msra.mxu0 0.0
    %204 = vmatprep.subr.mxu0 0.0
    %205 = vmatpush2.msra.mxu0 0.0
    %206 = vmatprep.subr.mxu0 0.0
    %207 = vmatpush2.msra.mxu0 0.0
    %208 = vmatprep.subr.mxu0 0.0
    %209 = vmatpush2.msra.mxu0 0.0
    %210 = vmatprep.subr.mxu0 0.0
    %211 = vmatpush2.msra.mxu0 0.0
    %212 = vmatprep.mubr.f32.mxu0 0.0
    %213 = vmatmul.mubr.f32.gmra.mxu0 %v40
    %v214 = vpop.f32.mrf.mxu0
    %v215 = vadd.f32 %v126, %v214
    %v216 = vpop.f32.mrf.mxu0
    %v217 = vadd.f32 %v130, %v216
    %218 = vdwg.mxu0
    %219 = vmatprep.subr.mxu0 %v119
    %220 = vmatpush1.msra.mxu0 %v118
    %221 = vmatprep.subr.mxu0 %v114
    %222 = vmatpush1.msra.mxu0 %v113
    %223 = vmatprep.subr.mxu0 %v109
    %224 = vmatpush1.msra.mxu0 %v108
    %225 = vmatprep.subr.mxu0 %v104
    %226 = vmatpush1.msra.mxu0 %v103
    %227 = vmatprep.subr.mxu0 %v99
    %228 = vmatpush1.msra.mxu0 %v98
    %229 = vmatprep.subr.mxu0 %v94
    %230 = vmatpush1.msra.mxu0 %v93
    %231 = vmatprep.subr.mxu0 %v89
    %232 = vmatpush1.msra.mxu0 %v88
    %233 = vmatprep.subr.mxu0 %v84
    %234 = vmatpush1.msra.mxu0 %v83
    %235 = vmatprep.subr.mxu0 %v79
    %236 = vmatpush1.msra.mxu0 %v78
    %237 = vmatprep.subr.mxu0 %v74
    %238 = vmatpush1.msra.mxu0 %v73
    %239 = vmatprep.subr.mxu0 %v69
    %240 = vmatpush1.msra.mxu0 %v68
    %241 = vmatprep.subr.mxu0 %v64
    %242 = vmatpush1.msra.mxu0 %v63
    %243 = vmatprep.subr.mxu0 %v59
    %244 = vmatpush1.msra.mxu0 %v58
    %245 = vmatprep.subr.mxu0 %v54
    %246 = vmatpush1.msra.mxu0 %v53
    %247 = vmatprep.subr.mxu0 %v49
    %248 = vmatpush1.msra.mxu0 %v48
    %249 = vmatprep.subr.mxu0 %v44
    %250 = vmatpush1.msra.mxu0 %v43
    %251 = vmatprep.subr.mxu0 0.0
    %252 = vmatpush2.msra.mxu0 0.0
    %253 = vmatprep.subr.mxu0 0.0
    %254 = vmatpush2.msra.mxu0 0.0
    %255 = vmatprep.subr.mxu0 0.0
    %256 = vmatpush2.msra.mxu0 0.0
    %257 = vmatprep.subr.mxu0 0.0
    %258 = vmatpush2.msra.mxu0 0.0
    %259 = vmatprep.subr.mxu0 0.0
    %260 = vmatpush2.msra.mxu0 0.0
    %261 = vmatprep.subr.mxu0 0.0
    %262 = vmatpush2.msra.mxu0 0.0
    %263 = vmatprep.subr.mxu0 0.0
    %264 = vmatpush2.msra.mxu0 0.0
    %265 = vmatprep.subr.mxu0 0.0
    %266 = vmatpush2.msra.mxu0 0.0
    %267 = vmatprep.subr.mxu0 0.0
    %268 = vmatpush2.msra.mxu0 0.0
    %269 = vmatprep.subr.mxu0 0.0
    %270 = vmatpush2.msra.mxu0 0.0
    %271 = vmatprep.subr.mxu0 0.0
    %272 = vmatpush2.msra.mxu0 0.0
    %273 = vmatprep.subr.mxu0 0.0
    %274 = vmatpush2.msra.mxu0 0.0
    %275 = vmatprep.subr.mxu0 0.0
    %276 = vmatpush2.msra.mxu0 0.0
    %277 = vmatprep.subr.mxu0 0.0
    %278 = vmatpush2.msra.mxu0 0.0
    %279 = vmatprep.subr.mxu0 0.0
    %280 = vmatpush2.msra.mxu0 0.0
    %281 = vmatprep.subr.mxu0 0.0
    %282 = vmatpush2.msra.mxu0 0.0
    %283 = vmatprep.mubr.f32.mxu0 0.0
    %284 = vmatmul.mubr.f32.gmra.mxu0 %v40
    %v285 = vpop.f32.mrf.mxu0
    %v286 = vadd.f32 %v134, %v285
    %v287 = vpop.f32.mrf.mxu0
    %v288 = vadd.f32 %v138, %v287
    %289 = vdwg.mxu0
    %290 = vmatprep.subr.mxu0 0.0
    %291 = vmatpush1.msra.mxu0 %v120
    %292 = vmatprep.subr.mxu0 0.0
    %293 = vmatpush1.msra.mxu0 %v115
    %294 = vmatprep.subr.mxu0 0.0
    %295 = vmatpush1.msra.mxu0 %v110
    %296 = vmatprep.subr.mxu0 0.0
    %297 = vmatpush1.msra.mxu0 %v105
    %298 = vmatprep.subr.mxu0 0.0
    %299 = vmatpush1.msra.mxu0 %v100
    %300 = vmatprep.subr.mxu0 0.0
    %301 = vmatpush1.msra.mxu0 %v95
    %302 = vmatprep.subr.mxu0 0.0
    %303 = vmatpush1.msra.mxu0 %v90
    %304 = vmatprep.subr.mxu0 0.0
    %305 = vmatpush1.msra.mxu0 %v85
    %306 = vmatprep.subr.mxu0 0.0
    %307 = vmatpush1.msra.mxu0 %v80
    %308 = vmatprep.subr.mxu0 0.0
    %309 = vmatpush1.msra.mxu0 %v75
    %310 = vmatprep.subr.mxu0 0.0
    %311 = vmatpush1.msra.mxu0 %v70
    %312 = vmatprep.subr.mxu0 0.0
    %313 = vmatpush1.msra.mxu0 %v65
    %314 = vmatprep.subr.mxu0 0.0
    %315 = vmatpush1.msra.mxu0 %v60
    %316 = vmatprep.subr.mxu0 0.0
    %317 = vmatpush1.msra.mxu0 %v55
    %318 = vmatprep.subr.mxu0 0.0
    %319 = vmatpush1.msra.mxu0 %v50
    %320 = vmatprep.subr.mxu0 0.0
    %321 = vmatpush1.msra.mxu0 %v45
    %322 = vmatprep.subr.mxu0 0.0
    %323 = vmatpush2.msra.mxu0 0.0
    %324 = vmatprep.subr.mxu0 0.0
    %325 = vmatpush2.msra.mxu0 0.0
    %326 = vmatprep.subr.mxu0 0.0
    %327 = vmatpush2.msra.mxu0 0.0
    %328 = vmatprep.subr.mxu0 0.0
    %329 = vmatpush2.msra.mxu0 0.0
    %330 = vmatprep.subr.mxu0 0.0
    %331 = vmatpush2.msra.mxu0 0.0
    %332 = vmatprep.subr.mxu0 0.0
    %333 = vmatpush2.msra.mxu0 0.0
    %334 = vmatprep.subr.mxu0 0.0
    %335 = vmatpush2.msra.mxu0 0.0
    %336 = vmatprep.subr.mxu0 0.0
    %337 = vmatpush2.msra.mxu0 0.0
    %338 = vmatprep.subr.mxu0 0.0
    %339 = vmatpush2.msra.mxu0 0.0
    %340 = vmatprep.subr.mxu0 0.0
    %341 = vmatpush2.msra.mxu0 0.0
    %342 = vmatprep.subr.mxu0 0.0
    %343 = vmatpush2.msra.mxu0 0.0
    %344 = vmatprep.subr.mxu0 0.0
    %345 = vmatpush2.msra.mxu0 0.0
    %346 = vmatprep.subr.mxu0 0.0
    %347 = vmatpush2.msra.mxu0 0.0
    %348 = vmatprep.subr.mxu0 0.0
    %349 = vmatpush2.msra.mxu0 0.0
    %350 = vmatprep.subr.mxu0 0.0
    %351 = vmatpush2.msra.mxu0 0.0
    %352 = vmatprep.subr.mxu0 0.0
    %353 = vmatpush2.msra.mxu0 0.0
    %354 = vmatprep.mubr.f32.mxu0 0.0
    %355 = vmatmul.mubr.f32.gmra.mxu0 %v40
    %v356 = vpop.f32.mrf.mxu0
    %v357 = vadd.f32 %v142, %v356
    %v358 = vpop.f32.mrf.mxu0
    %359 = vdwg.mxu0
    %v360 = vmax.f32 %v215, 0.0
    %v361 = vmax.f32 %v217, 0.0
    %v362 = vmax.f32 %v286, 0.0
    %v363 = vmax.f32 %v288, 0.0
    %v364 = vmax.f32 %v357, 0.0
    %365 = vst [vmem:[%s3] sm:$0xff] %v360
    %366 = vst [vmem:[%s3 + $0x8] sm:$0xff] %v361
    %367 = vst [vmem:[%s3 + $0x10] sm:$0xff] %v362
    %368 = vst [vmem:[%s3 + $0x18] sm:$0xff] %v363
    %369 = vst [vmem:[%s3 + $0x20] sm:$0xff] %v364
    // Predicated region
    $region22: #{generator_forward.4} parent=1 // pred_check
      _
    $region23: #{generator_forward.4} parent=1 // pred_check_branch
      %371 = sbr.rel (0) target = $region25
    $region24: #{generator_forward.4} parent=1 // pred_region
      _
    $region25: #{generator_forward.4} parent=1 // pred_fallthru
      _
    // Predicated region
    $region26: #{generator_forward.4} parent=1 // pred_check
      _
    $region27: #{generator_forward.4} parent=1 // pred_check_branch
      %373 = sbr.rel (0) target = $region29
    $region28: #{generator_forward.4} parent=1 // pred_region
      _
    $region29: #{generator_forward.4} parent=1 // pred_fallthru
      _
    %374 = vsyncpa [#allocation3], 1
    %375 = vsyncpa [#allocation5], 1

// kernel: generator_forward.5
$region0: #{generator_forward.5}
  #allocation0 [shape = 'u32[]', space=smem, size = 0x4, offset = 0x4, fixed_abs, tag = 'smem constant byte address 0x4 - core index']
  #allocation1 [shape = 'u32[144,128]{1,0:T(1,128)}', space=vmem, size = 0x12000, scoped, tag = 'internal scratch']
  %s0 = inlined_call_operand.vmem [shape: f32[72,1024], index: 0, kind: input, shape index: {}]
  %s1 = inlined_call_operand.vmem [shape: f32[1024,128], index: 1, kind: input, shape index: {}]
  %s2 = inlined_call_operand.vmem [shape: f32[1,128], index: 2, kind: input, shape index: {}]
  %s3 = inlined_call_operand.vmem [shape: f32[72,128], index: 3, kind: output, shape index: {}]
  %s4 = sld [smem:[#allocation0]]
  $region22: #{generator_forward.5} parent=0
    _
  %s6 = ssub.s32 1, %s4
  %s7 = scalar_select 0, %s6, %s4
  // Predicated region
  $region2: #{generator_forward.5} parent=0 // pred_check
    _
  $region3: #{generator_forward.5} parent=0 // pred_check_branch
    %9 = sbr.rel (0) target = $region5
  $region4: #{generator_forward.5} parent=0 // pred_region
    _
  $region5: #{generator_forward.5} parent=0 // pred_fallthru
    _
  // Predicated region
  $region6: #{generator_forward.5} parent=0 // pred_check
    _
  $region7: #{generator_forward.5} parent=0 // pred_check_branch
    %11 = sbr.rel (0) target = $region9
  $region8: #{generator_forward.5} parent=0 // pred_region
    _
  $region9: #{generator_forward.5} parent=0 // pred_fallthru
    _
  // Predicated region
  $region10: #{generator_forward.5} parent=0 // pred_check
    _
  $region11: #{generator_forward.5} parent=0 // pred_check_branch
    %13 = sbr.rel (0) target = $region13
  $region12: #{generator_forward.5} parent=0 // pred_region
    _
  $region13: #{generator_forward.5} parent=0 // pred_fallthru
    _
  %v14 = vld [vmem:[%s0] sm:$0xff]
  %v15 = vld [vmem:[%s0 + $0x8] sm:$0xff]
  %v16 = vld [vmem:[%s0 + $0x10] sm:$0xff]
  %v17 = vld [vmem:[%s0 + $0x18] sm:$0xff]
  %v18 = vld [vmem:[%s0 + $0x20] sm:$0xff]
  %v19 = vld [vmem:[%s0 + $0x28] sm:$0xff]
  %v20 = vld [vmem:[%s0 + $0x30] sm:$0xff]
  %v21 = vld [vmem:[%s0 + $0x38] sm:$0xff]
  %v22 = vld [vmem:[%s0 + $0x40] sm:$0xff]
  %v23 = vld [vmem:[%s0 + $0x48] sm:$0xff]
  %v24 = vld [vmem:[%s0 + $0x50] sm:$0xff]
  %v25 = vld [vmem:[%s0 + $0x58] sm:$0xff]
  %v26 = vld [vmem:[%s0 + $0x60] sm:$0xff]
  %v27 = vld [vmem:[%s0 + $0x68] sm:$0xff]
  %v28 = vld [vmem:[%s0 + $0x70] sm:$0xff]
  %v29 = vld [vmem:[%s0 + $0x78] sm:$0xff]
  %v30 = vld [vmem:[%s0 + $0x80] sm:$0xff]
  %v31 = vld [vmem:[%s0 + $0x88] sm:$0xff]
  %v32 = vld [vmem:[%s0 + $0x90] sm:$0xff]
  %v33 = vld [vmem:[%s0 + $0x98] sm:$0xff]
  %v34 = vld [vmem:[%s0 + $0xa0] sm:$0xff]
  %v35 = vld [vmem:[%s0 + $0xa8] sm:$0xff]
  %v36 = vld [vmem:[%s0 + $0xb0] sm:$0xff]
  %v37 = vld [vmem:[%s0 + $0xb8] sm:$0xff]
  %v38 = vld [vmem:[%s0 + $0xc0] sm:$0xff]
  %v39 = vld [vmem:[%s0 + $0xc8] sm:$0xff]
  %v40 = vld [vmem:[%s0 + $0xd0] sm:$0xff]
  %v41 = vld [vmem:[%s0 + $0xd8] sm:$0xff]
  %v42 = vld [vmem:[%s0 + $0xe0] sm:$0xff]
  %v43 = vld [vmem:[%s0 + $0xe8] sm:$0xff]
  %v44 = vld [vmem:[%s0 + $0xf0] sm:$0xff]
  %v45 = vld [vmem:[%s0 + $0xf8] sm:$0xff]
  %v46 = vld [vmem:[%s0 + $0x100] sm:$0xff]
  %v47 = vld [vmem:[%s0 + $0x108] sm:$0xff]
  %v48 = vld [vmem:[%s0 + $0x110] sm:$0xff]
  %v49 = vld [vmem:[%s0 + $0x118] sm:$0xff]
  %v50 = vld [vmem:[%s0 + $0x120] sm:$0xff]
  %v51 = vld [vmem:[%s0 + $0x128] sm:$0xff]
  %v52 = vld [vmem:[%s0 + $0x130] sm:$0xff]
  %v53 = vld [vmem:[%s0 + $0x138] sm:$0xff]
  %v54 = vld [vmem:[%s0 + $0x140] sm:$0xff]
  %v55 = vld [vmem:[%s0 + $0x148] sm:$0xff]
  %v56 = vld [vmem:[%s0 + $0x150] sm:$0xff]
  %v57 = vld [vmem:[%s0 + $0x158] sm:$0xff]
  %v58 = vld [vmem:[%s0 + $0x160] sm:$0xff]
  %v59 = vld [vmem:[%s0 + $0x168] sm:$0xff]
  %v60 = vld [vmem:[%s0 + $0x170] sm:$0xff]
  %v61 = vld [vmem:[%s0 + $0x178] sm:$0xff]
  %v62 = vld [vmem:[%s0 + $0x180] sm:$0xff]
  %v63 = vld [vmem:[%s0 + $0x188] sm:$0xff]
  %v64 = vld [vmem:[%s0 + $0x190] sm:$0xff]
  %v65 = vld [vmem:[%s0 + $0x198] sm:$0xff]
  %v66 = vld [vmem:[%s0 + $0x1a0] sm:$0xff]
  %v67 = vld [vmem:[%s0 + $0x1a8] sm:$0xff]
  %v68 = vld [vmem:[%s0 + $0x1b0] sm:$0xff]
  %v69 = vld [vmem:[%s0 + $0x1b8] sm:$0xff]
  %v70 = vld [vmem:[%s0 + $0x1c0] sm:$0xff]
  %v71 = vld [vmem:[%s0 + $0x1c8] sm:$0xff]
  %v72 = vld [vmem:[%s0 + $0x1d0] sm:$0xff]
  %v73 = vld [vmem:[%s0 + $0x1d8] sm:$0xff]
  %v74 = vld [vmem:[%s0 + $0x1e0] sm:$0xff]
  %v75 = vld [vmem:[%s0 + $0x1e8] sm:$0xff]
  %v76 = vld [vmem:[%s0 + $0x1f0] sm:$0xff]
  %v77 = vld [vmem:[%s0 + $0x1f8] sm:$0xff]
  %v78 = vld [vmem:[%s0 + $0x200] sm:$0xff]
  %v79 = vld [vmem:[%s0 + $0x208] sm:$0xff]
  %v80 = vld [vmem:[%s0 + $0x210] sm:$0xff]
  %v81 = vld [vmem:[%s0 + $0x218] sm:$0xff]
  %v82 = vld [vmem:[%s0 + $0x220] sm:$0xff]
  %v83 = vld [vmem:[%s0 + $0x228] sm:$0xff]
  %v84 = vld [vmem:[%s0 + $0x230] sm:$0xff]
  %v85 = vld [vmem:[%s0 + $0x238] sm:$0xff]
  %v86 = vld [vmem:[%s1] sm:$0xff]
  %v87 = vld [vmem:[%s1 + $0x8] sm:$0xff]
  %v88 = vld [vmem:[%s1 + $0x10] sm:$0xff]
  %v89 = vld [vmem:[%s1 + $0x18] sm:$0xff]
  %v90 = vld [vmem:[%s1 + $0x20] sm:$0xff]
  %v91 = vld [vmem:[%s1 + $0x28] sm:$0xff]
  %v92 = vld [vmem:[%s1 + $0x30] sm:$0xff]
  %v93 = vld [vmem:[%s1 + $0x38] sm:$0xff]
  %v94 = vld [vmem:[%s1 + $0x40] sm:$0xff]
  %v95 = vld [vmem:[%s1 + $0x48] sm:$0xff]
  %v96 = vld [vmem:[%s1 + $0x50] sm:$0xff]
  %v97 = vld [vmem:[%s1 + $0x58] sm:$0xff]
  %v98 = vld [vmem:[%s1 + $0x60] sm:$0xff]
  %v99 = vld [vmem:[%s1 + $0x68] sm:$0xff]
  %v100 = vld [vmem:[%s1 + $0x70] sm:$0xff]
  %v101 = vld [vmem:[%s1 + $0x78] sm:$0xff]
  %v102 = vld [vmem:[%s1 + $0x80] sm:$0xff]
  %v103 = vld [vmem:[%s1 + $0x88] sm:$0xff]
  %v104 = vld [vmem:[%s1 + $0x90] sm:$0xff]
  %v105 = vld [vmem:[%s1 + $0x98] sm:$0xff]
  %v106 = vld [vmem:[%s1 + $0xa0] sm:$0xff]
  %v107 = vld [vmem:[%s1 + $0xa8] sm:$0xff]
  %v108 = vld [vmem:[%s1 + $0xb0] sm:$0xff]
  %v109 = vld [vmem:[%s1 + $0xb8] sm:$0xff]
  %v110 = vld [vmem:[%s1 + $0xc0] sm:$0xff]
  %v111 = vld [vmem:[%s1 + $0xc8] sm:$0xff]
  %v112 = vld [vmem:[%s1 + $0xd0] sm:$0xff]
  %v113 = vld [vmem:[%s1 + $0xd8] sm:$0xff]
  %v114 = vld [vmem:[%s1 + $0xe0] sm:$0xff]
  %v115 = vld [vmem:[%s1 + $0xe8] sm:$0xff]
  %v116 = vld [vmem:[%s1 + $0xf0] sm:$0xff]
  %v117 = vld [vmem:[%s1 + $0xf8] sm:$0xff]
  %v118 = vld [vmem:[%s1 + $0x100] sm:$0xff]
  %v119 = vld [vmem:[%s1 + $0x108] sm:$0xff]
  %v120 = vld [vmem:[%s1 + $0x110] sm:$0xff]
  %v121 = vld [vmem:[%s1 + $0x118] sm:$0xff]
  %v122 = vld [vmem:[%s1 + $0x120] sm:$0xff]
  %v123 = vld [vmem:[%s1 + $0x128] sm:$0xff]
  %v124 = vld [vmem:[%s1 + $0x130] sm:$0xff]
  %v125 = vld [vmem:[%s1 + $0x138] sm:$0xff]
  %v126 = vld [vmem:[%s1 + $0x140] sm:$0xff]
  %v127 = vld [vmem:[%s1 + $0x148] sm:$0xff]
  %v128 = vld [vmem:[%s1 + $0x150] sm:$0xff]
  %v129 = vld [vmem:[%s1 + $0x158] sm:$0xff]
  %v130 = vld [vmem:[%s1 + $0x160] sm:$0xff]
  %v131 = vld [vmem:[%s1 + $0x168] sm:$0xff]
  %v132 = vld [vmem:[%s1 + $0x170] sm:$0xff]
  %v133 = vld [vmem:[%s1 + $0x178] sm:$0xff]
  %v134 = vld [vmem:[%s1 + $0x180] sm:$0xff]
  %v135 = vld [vmem:[%s1 + $0x188] sm:$0xff]
  %v136 = vld [vmem:[%s1 + $0x190] sm:$0xff]
  %v137 = vld [vmem:[%s1 + $0x198] sm:$0xff]
  %v138 = vld [vmem:[%s1 + $0x1a0] sm:$0xff]
  %v139 = vld [vmem:[%s1 + $0x1a8] sm:$0xff]
  %v140 = vld [vmem:[%s1 + $0x1b0] sm:$0xff]
  %v141 = vld [vmem:[%s1 + $0x1b8] sm:$0xff]
  %v142 = vld [vmem:[%s1 + $0x1c0] sm:$0xff]
  %v143 = vld [vmem:[%s1 + $0x1c8] sm:$0xff]
  %v144 = vld [vmem:[%s1 + $0x1d0] sm:$0xff]
  %v145 = vld [vmem:[%s1 + $0x1d8] sm:$0xff]
  %v146 = vld [vmem:[%s1 + $0x1e0] sm:$0xff]
  %v147 = vld [vmem:[%s1 + $0x1e8] sm:$0xff]
  %v148 = vld [vmem:[%s1 + $0x1f0] sm:$0xff]
  %v149 = vld [vmem:[%s1 + $0x1f8] sm:$0xff]
  %v150 = vld [vmem:[%s1 + $0x200] sm:$0xff]
  %v151 = vld [vmem:[%s1 + $0x208] sm:$0xff]
  %v152 = vld [vmem:[%s1 + $0x210] sm:$0xff]
  %v153 = vld [vmem:[%s1 + $0x218] sm:$0xff]
  %v154 = vld [vmem:[%s1 + $0x220] sm:$0xff]
  %v155 = vld [vmem:[%s1 + $0x228] sm:$0xff]
  %v156 = vld [vmem:[%s1 + $0x230] sm:$0xff]
  %v157 = vld [vmem:[%s1 + $0x238] sm:$0xff]
  %v158 = vld [vmem:[%s1 + $0x240] sm:$0xff]
  %v159 = vld [vmem:[%s1 + $0x248] sm:$0xff]
  %v160 = vld [vmem:[%s1 + $0x250] sm:$0xff]
  %v161 = vld [vmem:[%s1 + $0x258] sm:$0xff]
  %v162 = vld [vmem:[%s1 + $0x260] sm:$0xff]
  %v163 = vld [vmem:[%s1 + $0x268] sm:$0xff]
  %v164 = vld [vmem:[%s1 + $0x270] sm:$0xff]
  %v165 = vld [vmem:[%s1 + $0x278] sm:$0xff]
  %v166 = vld [vmem:[%s1 + $0x280] sm:$0xff]
  %v167 = vld [vmem:[%s1 + $0x288] sm:$0xff]
  %v168 = vld [vmem:[%s1 + $0x290] sm:$0xff]
  %v169 = vld [vmem:[%s1 + $0x298] sm:$0xff]
  %v170 = vld [vmem:[%s1 + $0x2a0] sm:$0xff]
  %v171 = vld [vmem:[%s1 + $0x2a8] sm:$0xff]
  %v172 = vld [vmem:[%s1 + $0x2b0] sm:$0xff]
  %v173 = vld [vmem:[%s1 + $0x2b8] sm:$0xff]
  %v174 = vld [vmem:[%s1 + $0x2c0] sm:$0xff]
  %v175 = vld [vmem:[%s1 + $0x2c8] sm:$0xff]
  %v176 = vld [vmem:[%s1 + $0x2d0] sm:$0xff]
  %v177 = vld [vmem:[%s1 + $0x2d8] sm:$0xff]
  %v178 = vld [vmem:[%s1 + $0x2e0] sm:$0xff]
  %v179 = vld [vmem:[%s1 + $0x2e8] sm:$0xff]
  %v180 = vld [vmem:[%s1 + $0x2f0] sm:$0xff]
  %v181 = vld [vmem:[%s1 + $0x2f8] sm:$0xff]
  %v182 = vld [vmem:[%s1 + $0x300] sm:$0xff]
  %v183 = vld [vmem:[%s1 + $0x308] sm:$0xff]
  %v184 = vld [vmem:[%s1 + $0x310] sm:$0xff]
  %v185 = vld [vmem:[%s1 + $0x318] sm:$0xff]
  %v186 = vld [vmem:[%s1 + $0x320] sm:$0xff]
  %v187 = vld [vmem:[%s1 + $0x328] sm:$0xff]
  %v188 = vld [vmem:[%s1 + $0x330] sm:$0xff]
  %v189 = vld [vmem:[%s1 + $0x338] sm:$0xff]
  %v190 = vld [vmem:[%s1 + $0x340] sm:$0xff]
  %v191 = vld [vmem:[%s1 + $0x348] sm:$0xff]
  %v192 = vld [vmem:[%s1 + $0x350] sm:$0xff]
  %v193 = vld [vmem:[%s1 + $0x358] sm:$0xff]
  %v194 = vld [vmem:[%s1 + $0x360] sm:$0xff]
  %v195 = vld [vmem:[%s1 + $0x368] sm:$0xff]
  %v196 = vld [vmem:[%s1 + $0x370] sm:$0xff]
  %v197 = vld [vmem:[%s1 + $0x378] sm:$0xff]
  %v198 = vld [vmem:[%s1 + $0x380] sm:$0xff]
  %v199 = vld [vmem:[%s1 + $0x388] sm:$0xff]
  %v200 = vld [vmem:[%s1 + $0x390] sm:$0xff]
  %v201 = vld [vmem:[%s1 + $0x398] sm:$0xff]
  %v202 = vld [vmem:[%s1 + $0x3a0] sm:$0xff]
  %v203 = vld [vmem:[%s1 + $0x3a8] sm:$0xff]
  %v204 = vld [vmem:[%s1 + $0x3b0] sm:$0xff]
  %v205 = vld [vmem:[%s1 + $0x3b8] sm:$0xff]
  %v206 = vld [vmem:[%s1 + $0x3c0] sm:$0xff]
  %v207 = vld [vmem:[%s1 + $0x3c8] sm:$0xff]
  %v208 = vld [vmem:[%s1 + $0x3d0] sm:$0xff]
  %v209 = vld [vmem:[%s1 + $0x3d8] sm:$0xff]
  %v210 = vld [vmem:[%s1 + $0x3e0] sm:$0xff]
  %v211 = vld [vmem:[%s1 + $0x3e8] sm:$0xff]
  %v212 = vld [vmem:[%s1 + $0x3f0] sm:$0xff]
  %v213 = vld [vmem:[%s1 + $0x3f8] sm:$0xff]
  %v214 = vld [vmem:[%s2] sm:$0x1]
  %v216 = vlaneseq
  %v217 = vshrl.u32 %v216, 7
  %v218 = vsub.s32 0, %v217
  %v219 = vrot.slane %v214, %v218
  %221 = vmatprep.subr.mxu0 0.0
  %222 = vmatpush1.msra.mxu0 %v101
  %223 = vmatprep.subr.mxu0 0.0
  %224 = vmatpush1.msra.mxu0 %v100
  %225 = vmatprep.subr.mxu0 0.0
  %226 = vmatpush1.msra.mxu0 %v99
  %227 = vmatprep.subr.mxu0 0.0
  %228 = vmatpush1.msra.mxu0 %v98
  %229 = vmatprep.subr.mxu0 0.0
  %230 = vmatpush1.msra.mxu0 %v97
  %231 = vmatprep.subr.mxu0 0.0
  %232 = vmatpush1.msra.mxu0 %v96
  %233 = vmatprep.subr.mxu0 0.0
  %234 = vmatpush1.msra.mxu0 %v95
  %235 = vmatprep.subr.mxu0 0.0
  %236 = vmatpush1.msra.mxu0 %v94
  %237 = vmatprep.subr.mxu0 0.0
  %238 = vmatpush1.msra.mxu0 %v93
  %239 = vmatprep.subr.mxu0 0.0
  %240 = vmatpush1.msra.mxu0 %v92
  %241 = vmatprep.subr.mxu0 0.0
  %242 = vmatpush1.msra.mxu0 %v91
  %243 = vmatprep.subr.mxu0 0.0
  %244 = vmatpush1.msra.mxu0 %v90
  %245 = vmatprep.subr.mxu0 0.0
  %246 = vmatpush1.msra.mxu0 %v89
  %247 = vmatprep.subr.mxu0 0.0
  %248 = vmatpush1.msra.mxu0 %v88
  %249 = vmatprep.subr.mxu0 0.0
  %250 = vmatpush1.msra.mxu0 %v87
  %251 = vmatprep.subr.mxu0 0.0
  %252 = vmatpush1.msra.mxu0 %v86
  %253 = vmatprep.subr.mxu0 0.0
  %254 = vmatpush2.msra.mxu0 %v117
  %255 = vmatprep.subr.mxu0 0.0
  %256 = vmatpush2.msra.mxu0 %v116
  %257 = vmatprep.subr.mxu0 0.0
  %258 = vmatpush2.msra.mxu0 %v115
  %259 = vmatprep.subr.mxu0 0.0
  %260 = vmatpush2.msra.mxu0 %v114
  %261 = vmatprep.subr.mxu0 0.0
  %262 = vmatpush2.msra.mxu0 %v113
  %263 = vmatprep.subr.mxu0 0.0
  %264 = vmatpush2.msra.mxu0 %v112
  %265 = vmatprep.subr.mxu0 0.0
  %266 = vmatpush2.msra.mxu0 %v111
  %267 = vmatprep.subr.mxu0 0.0
  %268 = vmatpush2.msra.mxu0 %v110
  %269 = vmatprep.subr.mxu0 0.0
  %270 = vmatpush2.msra.mxu0 %v109
  %271 = vmatprep.subr.mxu0 0.0
  %272 = vmatpush2.msra.mxu0 %v108
  %273 = vmatprep.subr.mxu0 0.0
  %274 = vmatpush2.msra.mxu0 %v107
  %275 = vmatprep.subr.mxu0 0.0
  %276 = vmatpush2.msra.mxu0 %v106
  %277 = vmatprep.subr.mxu0 0.0
  %278 = vmatpush2.msra.mxu0 %v105
  %279 = vmatprep.subr.mxu0 0.0
  %280 = vmatpush2.msra.mxu0 %v104
  %281 = vmatprep.subr.mxu0 0.0
  %282 = vmatpush2.msra.mxu0 %v103
  %283 = vmatprep.subr.mxu0 0.0
  %284 = vmatpush2.msra.mxu0 %v102
  %285 = vmatprep.mubr.f32.mxu0 %v15
  %286 = vmatmul.mubr.f32.gmra.mxu0 %v14
  %v287 = vpop.f32.mrf.mxu0
  %v288 = vadd.f32 %v219, %v287
  %v289 = vpop.f32.mrf.mxu0
  %290 = vmatprep.mubr.f32.mxu0 %v23
  %291 = vmatmul.mubr.f32.gmra.mxu0 %v22
  %v292 = vpop.f32.mrf.mxu0
  %v293 = vadd.f32 %v219, %v292
  %v294 = vpop.f32.mrf.mxu0
  %295 = vmatprep.mubr.f32.mxu0 %v31
  %296 = vmatmul.mubr.f32.gmra.mxu0 %v30
  %v297 = vpop.f32.mrf.mxu0
  %v298 = vadd.f32 %v219, %v297
  %v299 = vpop.f32.mrf.mxu0
  %300 = vmatprep.mubr.f32.mxu0 %v39
  %301 = vmatmul.mubr.f32.gmra.mxu0 %v38
  %v302 = vpop.f32.mrf.mxu0
  %v303 = vadd.f32 %v219, %v302
  %v304 = vpop.f32.mrf.mxu0
  %305 = vmatprep.mubr.f32.mxu0 %v47
  %306 = vmatmul.mubr.f32.gmra.mxu0 %v46
  %v307 = vpop.f32.mrf.mxu0
  %v308 = vadd.f32 %v219, %v307
  %v309 = vpop.f32.mrf.mxu0
  %310 = vmatprep.mubr.f32.mxu0 %v55
  %311 = vmatmul.mubr.f32.gmra.mxu0 %v54
  %v312 = vpop.f32.mrf.mxu0
  %v313 = vadd.f32 %v219, %v312
  %v314 = vpop.f32.mrf.mxu0
  %315 = vmatprep.mubr.f32.mxu0 %v63
  %316 = vmatmul.mubr.f32.gmra.mxu0 %v62
  %v317 = vpop.f32.mrf.mxu0
  %v318 = vadd.f32 %v219, %v317
  %v319 = vpop.f32.mrf.mxu0
  %320 = vmatprep.mubr.f32.mxu0 %v71
  %321 = vmatmul.mubr.f32.gmra.mxu0 %v70
  %v322 = vpop.f32.mrf.mxu0
  %v323 = vadd.f32 %v219, %v322
  %v324 = vpop.f32.mrf.mxu0
  %325 = vmatprep.mubr.f32.mxu0 %v79
  %326 = vmatmul.mubr.f32.gmra.mxu0 %v78
  %v327 = vpop.f32.mrf.mxu0
  %v328 = vadd.f32 %v219, %v327
  %v329 = vpop.f32.mrf.mxu0
  %330 = vdwg.mxu0
  %331 = vmatprep.subr.mxu0 0.0
  %332 = vmatpush1.msra.mxu0 %v133
  %333 = vmatprep.subr.mxu0 0.0
  %334 = vmatpush1.msra.mxu0 %v132
  %335 = vmatprep.subr.mxu0 0.0
  %336 = vmatpush1.msra.mxu0 %v131
  %337 = vmatprep.subr.mxu0 0.0
  %338 = vmatpush1.msra.mxu0 %v130
  %339 = vmatprep.subr.mxu0 0.0
  %340 = vmatpush1.msra.mxu0 %v129
  %341 = vmatprep.subr.mxu0 0.0
  %342 = vmatpush1.msra.mxu0 %v128
  %343 = vmatprep.subr.mxu0 0.0
  %344 = vmatpush1.msra.mxu0 %v127
  %345 = vmatprep.subr.mxu0 0.0
  %346 = vmatpush1.msra.mxu0 %v126
  %347 = vmatprep.subr.mxu0 0.0
  %348 = vmatpush1.msra.mxu0 %v125
  %349 = vmatprep.subr.mxu0 0.0
  %350 = vmatpush1.msra.mxu0 %v124
  %351 = vmatprep.subr.mxu0 0.0
  %352 = vmatpush1.msra.mxu0 %v123
  %353 = vmatprep.subr.mxu0 0.0
  %354 = vmatpush1.msra.mxu0 %v122
  %355 = vmatprep.subr.mxu0 0.0
  %356 = vmatpush1.msra.mxu0 %v121
  %357 = vmatprep.subr.mxu0 0.0
  %358 = vmatpush1.msra.mxu0 %v120
  %359 = vmatprep.subr.mxu0 0.0
  %360 = vmatpush1.msra.mxu0 %v119
  %361 = vmatprep.subr.mxu0 0.0
  %362 = vmatpush1.msra.mxu0 %v118
  %363 = vmatprep.subr.mxu0 0.0
  %364 = vmatpush2.msra.mxu0 %v149
  %365 = vmatprep.subr.mxu0 0.0
  %366 = vmatpush2.msra.mxu0 %v148
  %367 = vmatprep.subr.mxu0 0.0
  %368 = vmatpush2.msra.mxu0 %v147
  %369 = vmatprep.subr.mxu0 0.0
  %370 = vmatpush2.msra.mxu0 %v146
  %371 = vmatprep.subr.mxu0 0.0
  %372 = vmatpush2.msra.mxu0 %v145
  %373 = vmatprep.subr.mxu0 0.0
  %374 = vmatpush2.msra.mxu0 %v144
  %375 = vmatprep.subr.mxu0 0.0
  %376 = vmatpush2.msra.mxu0 %v143
  %377 = vmatprep.subr.mxu0 0.0
  %378 = vmatpush2.msra.mxu0 %v142
  %379 = vmatprep.subr.mxu0 0.0
  %380 = vmatpush2.msra.mxu0 %v141
  %381 = vmatprep.subr.mxu0 0.0
  %382 = vmatpush2.msra.mxu0 %v140
  %383 = vmatprep.subr.mxu0 0.0
  %384 = vmatpush2.msra.mxu0 %v139
  %385 = vmatprep.subr.mxu0 0.0
  %386 = vmatpush2.msra.mxu0 %v138
  %387 = vmatprep.subr.mxu0 0.0
  %388 = vmatpush2.msra.mxu0 %v137
  %389 = vmatprep.subr.mxu0 0.0
  %390 = vmatpush2.msra.mxu0 %v136
  %391 = vmatprep.subr.mxu0 0.0
  %392 = vmatpush2.msra.mxu0 %v135
  %393 = vmatprep.subr.mxu0 0.0
  %394 = vmatpush2.msra.mxu0 %v134
  %395 = vmatprep.mubr.f32.mxu0 %v17
  %396 = vmatmul.mubr.f32.gmra.mxu0 %v16
  %v397 = vpop.f32.mrf.mxu0
  %v398 = vadd.f32 %v288, %v397
  %v399 = vpop.f32.mrf.mxu0
  %400 = vmatprep.mubr.f32.mxu0 %v25
  %401 = vmatmul.mubr.f32.gmra.mxu0 %v24
  %v402 = vpop.f32.mrf.mxu0
  %v403 = vadd.f32 %v293, %v402
  %v404 = vpop.f32.mrf.mxu0
  %405 = vmatprep.mubr.f32.mxu0 %v33
  %406 = vmatmul.mubr.f32.gmra.mxu0 %v32
  %v407 = vpop.f32.mrf.mxu0
  %v408 = vadd.f32 %v298, %v407
  %v409 = vpop.f32.mrf.mxu0
  %410 = vmatprep.mubr.f32.mxu0 %v41
  %411 = vmatmul.mubr.f32.gmra.mxu0 %v40
  %v412 = vpop.f32.mrf.mxu0
  %v413 = vadd.f32 %v303, %v412
  %v414 = vpop.f32.mrf.mxu0
  %415 = vmatprep.mubr.f32.mxu0 %v49
  %416 = vmatmul.mubr.f32.gmra.mxu0 %v48
  %v417 = vpop.f32.mrf.mxu0
  %v418 = vadd.f32 %v308, %v417
  %v419 = vpop.f32.mrf.mxu0
  %420 = vmatprep.mubr.f32.mxu0 %v57
  %421 = vmatmul.mubr.f32.gmra.mxu0 %v56
  %v422 = vpop.f32.mrf.mxu0
  %v423 = vadd.f32 %v313, %v422
  %v424 = vpop.f32.mrf.mxu0
  %425 = vmatprep.mubr.f32.mxu0 %v65
  %426 = vmatmul.mubr.f32.gmra.mxu0 %v64
  %v427 = vpop.f32.mrf.mxu0
  %v428 = vadd.f32 %v318, %v427
  %v429 = vpop.f32.mrf.mxu0
  %430 = vmatprep.mubr.f32.mxu0 %v73
  %431 = vmatmul.mubr.f32.gmra.mxu0 %v72
  %v432 = vpop.f32.mrf.mxu0
  %v433 = vadd.f32 %v323, %v432
  %v434 = vpop.f32.mrf.mxu0
  %435 = vmatprep.mubr.f32.mxu0 %v81
  %436 = vmatmul.mubr.f32.gmra.mxu0 %v80
  %v437 = vpop.f32.mrf.mxu0
  %v438 = vadd.f32 %v328, %v437
  %v439 = vpop.f32.mrf.mxu0
  %440 = vdwg.mxu0
  %441 = vmatprep.subr.mxu0 0.0
  %442 = vmatpush1.msra.mxu0 %v165
  %443 = vmatprep.subr.mxu0 0.0
  %444 = vmatpush1.msra.mxu0 %v164
  %445 = vmatprep.subr.mxu0 0.0
  %446 = vmatpush1.msra.mxu0 %v163
  %447 = vmatprep.subr.mxu0 0.0
  %448 = vmatpush1.msra.mxu0 %v162
  %449 = vmatprep.subr.mxu0 0.0
  %450 = vmatpush1.msra.mxu0 %v161
  %451 = vmatprep.subr.mxu0 0.0
  %452 = vmatpush1.msra.mxu0 %v160
  %453 = vmatprep.subr.mxu0 0.0
  %454 = vmatpush1.msra.mxu0 %v159
  %455 = vmatprep.subr.mxu0 0.0
  %456 = vmatpush1.msra.mxu0 %v158
  %457 = vmatprep.subr.mxu0 0.0
  %458 = vmatpush1.msra.mxu0 %v157
  %459 = vmatprep.subr.mxu0 0.0
  %460 = vmatpush1.msra.mxu0 %v156
  %461 = vmatprep.subr.mxu0 0.0
  %462 = vmatpush1.msra.mxu0 %v155
  %463 = vmatprep.subr.mxu0 0.0
  %464 = vmatpush1.msra.mxu0 %v154
  %465 = vmatprep.subr.mxu0 0.0
  %466 = vmatpush1.msra.mxu0 %v153
  %467 = vmatprep.subr.mxu0 0.0
  %468 = vmatpush1.msra.mxu0 %v152
  %469 = vmatprep.subr.mxu0 0.0
  %470 = vmatpush1.msra.mxu0 %v151
  %471 = vmatprep.subr.mxu0 0.0
  %472 = vmatpush1.msra.mxu0 %v150
  %473 = vmatprep.subr.mxu0 0.0
  %474 = vmatpush2.msra.mxu0 %v181
  %475 = vmatprep.subr.mxu0 0.0
  %476 = vmatpush2.msra.mxu0 %v180
  %477 = vmatprep.subr.mxu0 0.0
  %478 = vmatpush2.msra.mxu0 %v179
  %479 = vmatprep.subr.mxu0 0.0
  %480 = vmatpush2.msra.mxu0 %v178
  %481 = vmatprep.subr.mxu0 0.0
  %482 = vmatpush2.msra.mxu0 %v177
  %483 = vmatprep.subr.mxu0 0.0
  %484 = vmatpush2.msra.mxu0 %v176
  %485 = vmatprep.subr.mxu0 0.0
  %486 = vmatpush2.msra.mxu0 %v175
  %487 = vmatprep.subr.mxu0 0.0
  %488 = vmatpush2.msra.mxu0 %v174
  %489 = vmatprep.subr.mxu0 0.0
  %490 = vmatpush2.msra.mxu0 %v173
  %491 = vmatprep.subr.mxu0 0.0
  %492 = vmatpush2.msra.mxu0 %v172
  %493 = vmatprep.subr.mxu0 0.0
  %494 = vmatpush2.msra.mxu0 %v171
  %495 = vmatprep.subr.mxu0 0.0
  %496 = vmatpush2.msra.mxu0 %v170
  %497 = vmatprep.subr.mxu0 0.0
  %498 = vmatpush2.msra.mxu0 %v169
  %499 = vmatprep.subr.mxu0 0.0
  %500 = vmatpush2.msra.mxu0 %v168
  %501 = vmatprep.subr.mxu0 0.0
  %502 = vmatpush2.msra.mxu0 %v167
  %503 = vmatprep.subr.mxu0 0.0
  %504 = vmatpush2.msra.mxu0 %v166
  %505 = vmatprep.mubr.f32.mxu0 %v19
  %506 = vmatmul.mubr.f32.gmra.mxu0 %v18
  %v507 = vpop.f32.mrf.mxu0
  %v508 = vadd.f32 %v398, %v507
  %v509 = vpop.f32.mrf.mxu0
  %510 = vmatprep.mubr.f32.mxu0 %v27
  %511 = vmatmul.mubr.f32.gmra.mxu0 %v26
  %v512 = vpop.f32.mrf.mxu0
  %v513 = vadd.f32 %v403, %v512
  %v514 = vpop.f32.mrf.mxu0
  %515 = vmatprep.mubr.f32.mxu0 %v35
  %516 = vmatmul.mubr.f32.gmra.mxu0 %v34
  %v517 = vpop.f32.mrf.mxu0
  %v518 = vadd.f32 %v408, %v517
  %v519 = vpop.f32.mrf.mxu0
  %520 = vmatprep.mubr.f32.mxu0 %v43
  %521 = vmatmul.mubr.f32.gmra.mxu0 %v42
  %v522 = vpop.f32.mrf.mxu0
  %v523 = vadd.f32 %v413, %v522
  %v524 = vpop.f32.mrf.mxu0
  %525 = vmatprep.mubr.f32.mxu0 %v51
  %526 = vmatmul.mubr.f32.gmra.mxu0 %v50
  %v527 = vpop.f32.mrf.mxu0
  %v528 = vadd.f32 %v418, %v527
  %v529 = vpop.f32.mrf.mxu0
  %530 = vmatprep.mubr.f32.mxu0 %v59
  %531 = vmatmul.mubr.f32.gmra.mxu0 %v58
  %v532 = vpop.f32.mrf.mxu0
  %v533 = vadd.f32 %v423, %v532
  %v534 = vpop.f32.mrf.mxu0
  %535 = vmatprep.mubr.f32.mxu0 %v67
  %536 = vmatmul.mubr.f32.gmra.mxu0 %v66
  %v537 = vpop.f32.mrf.mxu0
  %v538 = vadd.f32 %v428, %v537
  %v539 = vpop.f32.mrf.mxu0
  %540 = vmatprep.mubr.f32.mxu0 %v75
  %541 = vmatmul.mubr.f32.gmra.mxu0 %v74
  %v542 = vpop.f32.mrf.mxu0
  %v543 = vadd.f32 %v433, %v542
  %v544 = vpop.f32.mrf.mxu0
  %545 = vmatprep.mubr.f32.mxu0 %v83
  %546 = vmatmul.mubr.f32.gmra.mxu0 %v82
  %v547 = vpop.f32.mrf.mxu0
  %v548 = vadd.f32 %v438, %v547
  %v549 = vpop.f32.mrf.mxu0
  %550 = vdwg.mxu0
  %551 = vmatprep.subr.mxu0 0.0
  %552 = vmatpush1.msra.mxu0 %v197
  %553 = vmatprep.subr.mxu0 0.0
  %554 = vmatpush1.msra.mxu0 %v196
  %555 = vmatprep.subr.mxu0 0.0
  %556 = vmatpush1.msra.mxu0 %v195
  %557 = vmatprep.subr.mxu0 0.0
  %558 = vmatpush1.msra.mxu0 %v194
  %559 = vmatprep.subr.mxu0 0.0
  %560 = vmatpush1.msra.mxu0 %v193
  %561 = vmatprep.subr.mxu0 0.0
  %562 = vmatpush1.msra.mxu0 %v192
  %563 = vmatprep.subr.mxu0 0.0
  %564 = vmatpush1.msra.mxu0 %v191
  %565 = vmatprep.subr.mxu0 0.0
  %566 = vmatpush1.msra.mxu0 %v190
  %567 = vmatprep.subr.mxu0 0.0
  %568 = vmatpush1.msra.mxu0 %v189
  %569 = vmatprep.subr.mxu0 0.0
  %570 = vmatpush1.msra.mxu0 %v188
  %571 = vmatprep.subr.mxu0 0.0
  %572 = vmatpush1.msra.mxu0 %v187
  %573 = vmatprep.subr.mxu0 0.0
  %574 = vmatpush1.msra.mxu0 %v186
  %575 = vmatprep.subr.mxu0 0.0
  %576 = vmatpush1.msra.mxu0 %v185
  %577 = vmatprep.subr.mxu0 0.0
  %578 = vmatpush1.msra.mxu0 %v184
  %579 = vmatprep.subr.mxu0 0.0
  %580 = vmatpush1.msra.mxu0 %v183
  %581 = vmatprep.subr.mxu0 0.0
  %582 = vmatpush1.msra.mxu0 %v182
  %583 = vmatprep.subr.mxu0 0.0
  %584 = vmatpush2.msra.mxu0 %v213
  %585 = vmatprep.subr.mxu0 0.0
  %586 = vmatpush2.msra.mxu0 %v212
  %587 = vmatprep.subr.mxu0 0.0
  %588 = vmatpush2.msra.mxu0 %v211
  %589 = vmatprep.subr.mxu0 0.0
  %590 = vmatpush2.msra.mxu0 %v210
  %591 = vmatprep.subr.mxu0 0.0
  %592 = vmatpush2.msra.mxu0 %v209
  %593 = vmatprep.subr.mxu0 0.0
  %594 = vmatpush2.msra.mxu0 %v208
  %595 = vmatprep.subr.mxu0 0.0
  %596 = vmatpush2.msra.mxu0 %v207
  %597 = vmatprep.subr.mxu0 0.0
  %598 = vmatpush2.msra.mxu0 %v206
  %599 = vmatprep.subr.mxu0 0.0
  %600 = vmatpush2.msra.mxu0 %v205
  %601 = vmatprep.subr.mxu0 0.0
  %602 = vmatpush2.msra.mxu0 %v204
  %603 = vmatprep.subr.mxu0 0.0
  %604 = vmatpush2.msra.mxu0 %v203
  %605 = vmatprep.subr.mxu0 0.0
  %606 = vmatpush2.msra.mxu0 %v202
  %607 = vmatprep.subr.mxu0 0.0
  %608 = vmatpush2.msra.mxu0 %v201
  %609 = vmatprep.subr.mxu0 0.0
  %610 = vmatpush2.msra.mxu0 %v200
  %611 = vmatprep.subr.mxu0 0.0
  %612 = vmatpush2.msra.mxu0 %v199
  %613 = vmatprep.subr.mxu0 0.0
  %614 = vmatpush2.msra.mxu0 %v198
  %615 = vmatprep.mubr.f32.mxu0 %v21
  %616 = vmatmul.mubr.f32.gmra.mxu0 %v20
  %v617 = vpop.f32.mrf.mxu0
  %v618 = vadd.f32 %v508, %v617
  %v619 = vpop.f32.mrf.mxu0
  %620 = vmatprep.mubr.f32.mxu0 %v29
  %621 = vmatmul.mubr.f32.gmra.mxu0 %v28
  %v622 = vpop.f32.mrf.mxu0
  %v623 = vadd.f32 %v513, %v622
  %v624 = vpop.f32.mrf.mxu0
  %625 = vmatprep.mubr.f32.mxu0 %v37
  %626 = vmatmul.mubr.f32.gmra.mxu0 %v36
  %v627 = vpop.f32.mrf.mxu0
  %v628 = vadd.f32 %v518, %v627
  %v629 = vpop.f32.mrf.mxu0
  %630 = vmatprep.mubr.f32.mxu0 %v45
  %631 = vmatmul.mubr.f32.gmra.mxu0 %v44
  %v632 = vpop.f32.mrf.mxu0
  %v633 = vadd.f32 %v523, %v632
  %v634 = vpop.f32.mrf.mxu0
  %635 = vmatprep.mubr.f32.mxu0 %v53
  %636 = vmatmul.mubr.f32.gmra.mxu0 %v52
  %v637 = vpop.f32.mrf.mxu0
  %v638 = vadd.f32 %v528, %v637
  %v639 = vpop.f32.mrf.mxu0
  %640 = vmatprep.mubr.f32.mxu0 %v61
  %641 = vmatmul.mubr.f32.gmra.mxu0 %v60
  %v642 = vpop.f32.mrf.mxu0
  %v643 = vadd.f32 %v533, %v642
  %v644 = vpop.f32.mrf.mxu0
  %645 = vmatprep.mubr.f32.mxu0 %v69
  %646 = vmatmul.mubr.f32.gmra.mxu0 %v68
  %v647 = vpop.f32.mrf.mxu0
  %v648 = vadd.f32 %v538, %v647
  %v649 = vpop.f32.mrf.mxu0
  %650 = vmatprep.mubr.f32.mxu0 %v77
  %651 = vmatmul.mubr.f32.gmra.mxu0 %v76
  %v652 = vpop.f32.mrf.mxu0
  %v653 = vadd.f32 %v543, %v652
  %v654 = vpop.f32.mrf.mxu0
  %655 = vmatprep.mubr.f32.mxu0 %v85
  %656 = vmatmul.mubr.f32.gmra.mxu0 %v84
  %v657 = vpop.f32.mrf.mxu0
  %v658 = vadd.f32 %v548, %v657
  %v659 = vpop.f32.mrf.mxu0
  %660 = vdwg.mxu0
  %v661 = vmax.f32 %v618, 0.0
  %v662 = vmax.f32 %v623, 0.0
  %v663 = vmax.f32 %v628, 0.0
  %v664 = vmax.f32 %v633, 0.0
  %v665 = vmax.f32 %v638, 0.0
  %v666 = vmax.f32 %v643, 0.0
  %v667 = vmax.f32 %v648, 0.0
  %v668 = vmax.f32 %v653, 0.0
  %v669 = vmax.f32 %v658, 0.0
  %670 = vst [vmem:[%s3] sm:$0xff] %v661
  %671 = vst [vmem:[%s3 + $0x8] sm:$0xff] %v662
  %672 = vst [vmem:[%s3 + $0x10] sm:$0xff] %v663
  %673 = vst [vmem:[%s3 + $0x18] sm:$0xff] %v664
  %674 = vst [vmem:[%s3 + $0x20] sm:$0xff] %v665
  %675 = vst [vmem:[%s3 + $0x28] sm:$0xff] %v666
  %676 = vst [vmem:[%s3 + $0x30] sm:$0xff] %v667
  %677 = vst [vmem:[%s3 + $0x38] sm:$0xff] %v668
  %678 = vst [vmem:[%s3 + $0x40] sm:$0xff] %v669
  // Predicated region
  $region14: #{generator_forward.5} parent=0 // pred_check
    _
  $region15: #{generator_forward.5} parent=0 // pred_check_branch
    %680 = sbr.rel (0) target = $region17
  $region16: #{generator_forward.5} parent=0 // pred_region
    _
  $region17: #{generator_forward.5} parent=0 // pred_fallthru
    _
  // Predicated region
  $region18: #{generator_forward.5} parent=0 // pred_check
    _
  $region19: #{generator_forward.5} parent=0 // pred_check_branch
    %682 = sbr.rel (0) target = $region21
  $region20: #{generator_forward.5} parent=0 // pred_region
    _
  $region21: #{generator_forward.5} parent=0 // pred_fallthru
    _

// kernel: generator_forward.6
$region0: #{generator_forward.6}
  #allocation0 [shape = 'u32[]', space=smem, size = 0x4, offset = 0x4, fixed_abs, tag = 'smem constant byte address 0x4 - core index']
  #allocation1 [shape = 'u32[144,128]{1,0:T(1,128)}', space=vmem, size = 0x12000, scoped, tag = 'internal scratch']
  %s0 = inlined_call_operand.vmem [shape: f32[344,384], index: 0, kind: input, shape index: {}]
  %s1 = inlined_call_operand.vmem [shape: f32[384,128], index: 1, kind: input, shape index: {}]
  %s2 = inlined_call_operand.vmem [shape: f32[1,128], index: 2, kind: input, shape index: {}]
  %s3 = inlined_call_operand.vmem [shape: f32[344,128], index: 3, kind: output, shape index: {}]
  %s4 = sld [smem:[#allocation0]]
  $region22: #{generator_forward.6} parent=0
    _
  %s6 = ssub.s32 1, %s4
  %s7 = scalar_select 0, %s6, %s4
  // Predicated region
  $region2: #{generator_forward.6} parent=0 // pred_check
    _
  $region3: #{generator_forward.6} parent=0 // pred_check_branch
    %9 = sbr.rel (0) target = $region5
  $region4: #{generator_forward.6} parent=0 // pred_region
    _
  $region5: #{generator_forward.6} parent=0 // pred_fallthru
    _
  // Predicated region
  $region6: #{generator_forward.6} parent=0 // pred_check
    _
  $region7: #{generator_forward.6} parent=0 // pred_check_branch
    %11 = sbr.rel (0) target = $region9
  $region8: #{generator_forward.6} parent=0 // pred_region
    _
  $region9: #{generator_forward.6} parent=0 // pred_fallthru
    _
  // Predicated region
  $region10: #{generator_forward.6} parent=0 // pred_check
    _
  $region11: #{generator_forward.6} parent=0 // pred_check_branch
    %13 = sbr.rel (0) target = $region13
  $region12: #{generator_forward.6} parent=0 // pred_region
    _
  $region13: #{generator_forward.6} parent=0 // pred_fallthru
    _
  %v14 = vld [vmem:[%s0] sm:$0xff]
  %v15 = vld [vmem:[%s0 + $0x8] sm:$0xff]
  %v16 = vld [vmem:[%s0 + $0x10] sm:$0xff]
  %v17 = vld [vmem:[%s0 + $0x18] sm:$0xff]
  %v18 = vld [vmem:[%s0 + $0x20] sm:$0xff]
  %v19 = vld [vmem:[%s0 + $0x28] sm:$0xff]
  %v20 = vld [vmem:[%s0 + $0x30] sm:$0xff]
  %v21 = vld [vmem:[%s0 + $0x38] sm:$0xff]
  %v22 = vld [vmem:[%s0 + $0x40] sm:$0xff]
  %v23 = vld [vmem:[%s0 + $0x48] sm:$0xff]
  %v24 = vld [vmem:[%s0 + $0x50] sm:$0xff]
  %v25 = vld [vmem:[%s0 + $0x58] sm:$0xff]
  %v26 = vld [vmem:[%s0 + $0x60] sm:$0xff]
  %v27 = vld [vmem:[%s0 + $0x68] sm:$0xff]
  %v28 = vld [vmem:[%s0 + $0x70] sm:$0xff]
  %v29 = vld [vmem:[%s0 + $0x78] sm:$0xff]
  %v30 = vld [vmem:[%s0 + $0x80] sm:$0xff]
  %v31 = vld [vmem:[%s0 + $0x88] sm:$0xff]
  %v32 = vld [vmem:[%s0 + $0x90] sm:$0xff]
  %v33 = vld [vmem:[%s0 + $0x98] sm:$0xff]
  %v34 = vld [vmem:[%s0 + $0xa0] sm:$0xff]
  %v35 = vld [vmem:[%s0 + $0xa8] sm:$0xff]
  %v36 = vld [vmem:[%s0 + $0xb0] sm:$0xff]
  %v37 = vld [vmem:[%s0 + $0xb8] sm:$0xff]
  %v38 = vld [vmem:[%s0 + $0xc0] sm:$0xff]
  %v39 = vld [vmem:[%s0 + $0xc8] sm:$0xff]
  %v40 = vld [vmem:[%s0 + $0xd0] sm:$0xff]
  %v41 = vld [vmem:[%s0 + $0xd8] sm:$0xff]
  %v42 = vld [vmem:[%s0 + $0xe0] sm:$0xff]
  %v43 = vld [vmem:[%s0 + $0xe8] sm:$0xff]
  %v44 = vld [vmem:[%s0 + $0xf0] sm:$0xff]
  %v45 = vld [vmem:[%s0 + $0xf8] sm:$0xff]
  %v46 = vld [vmem:[%s0 + $0x100] sm:$0xff]
  %v47 = vld [vmem:[%s0 + $0x108] sm:$0xff]
  %v48 = vld [vmem:[%s0 + $0x110] sm:$0xff]
  %v49 = vld [vmem:[%s0 + $0x118] sm:$0xff]
  %v50 = vld [vmem:[%s0 + $0x120] sm:$0xff]
  %v51 = vld [vmem:[%s0 + $0x128] sm:$0xff]
  %v52 = vld [vmem:[%s0 + $0x130] sm:$0xff]
  %v53 = vld [vmem:[%s0 + $0x138] sm:$0xff]
  %v54 = vld [vmem:[%s0 + $0x140] sm:$0xff]
  %v55 = vld [vmem:[%s0 + $0x148] sm:$0xff]
  %v56 = vld [vmem:[%s0 + $0x150] sm:$0xff]
  %v57 = vld [vmem:[%s0 + $0x158] sm:$0xff]
  %v58 = vld [vmem:[%s0 + $0x160] sm:$0xff]
  %v59 = vld [vmem:[%s0 + $0x168] sm:$0xff]
  %v60 = vld [vmem:[%s0 + $0x170] sm:$0xff]
  %v61 = vld [vmem:[%s0 + $0x178] sm:$0xff]
  %v62 = vld [vmem:[%s0 + $0x180] sm:$0xff]
  %v63 = vld [vmem:[%s0 + $0x188] sm:$0xff]
  %v64 = vld [vmem:[%s0 + $0x190] sm:$0xff]
  %v65 = vld [vmem:[%s0 + $0x198] sm:$0xff]
  %v66 = vld [vmem:[%s0 + $0x1a0] sm:$0xff]
  %v67 = vld [vmem:[%s0 + $0x1a8] sm:$0xff]
  %v68 = vld [vmem:[%s0 + $0x1b0] sm:$0xff]
  %v69 = vld [vmem:[%s0 + $0x1b8] sm:$0xff]
  %v70 = vld [vmem:[%s0 + $0x1c0] sm:$0xff]
  %v71 = vld [vmem:[%s0 + $0x1c8] sm:$0xff]
  %v72 = vld [vmem:[%s0 + $0x1d0] sm:$0xff]
  %v73 = vld [vmem:[%s0 + $0x1d8] sm:$0xff]
  %v74 = vld [vmem:[%s0 + $0x1e0] sm:$0xff]
  %v75 = vld [vmem:[%s0 + $0x1e8] sm:$0xff]
  %v76 = vld [vmem:[%s0 + $0x1f0] sm:$0xff]
  %v77 = vld [vmem:[%s0 + $0x1f8] sm:$0xff]
  %v78 = vld [vmem:[%s0 + $0x200] sm:$0xff]
  %v79 = vld [vmem:[%s0 + $0x208] sm:$0xff]
  %v80 = vld [vmem:[%s0 + $0x210] sm:$0xff]
  %v81 = vld [vmem:[%s0 + $0x218] sm:$0xff]
  %v82 = vld [vmem:[%s0 + $0x220] sm:$0xff]
  %v83 = vld [vmem:[%s0 + $0x228] sm:$0xff]
  %v84 = vld [vmem:[%s0 + $0x230] sm:$0xff]
  %v85 = vld [vmem:[%s0 + $0x238] sm:$0xff]
  %v86 = vld [vmem:[%s0 + $0x240] sm:$0xff]
  %v87 = vld [vmem:[%s0 + $0x248] sm:$0xff]
  %v88 = vld [vmem:[%s0 + $0x250] sm:$0xff]
  %v89 = vld [vmem:[%s0 + $0x258] sm:$0xff]
  %v90 = vld [vmem:[%s0 + $0x260] sm:$0xff]
  %v91 = vld [vmem:[%s0 + $0x268] sm:$0xff]
  %v92 = vld [vmem:[%s0 + $0x270] sm:$0xff]
  %v93 = vld [vmem:[%s0 + $0x278] sm:$0xff]
  %v94 = vld [vmem:[%s0 + $0x280] sm:$0xff]
  %v95 = vld [vmem:[%s0 + $0x288] sm:$0xff]
  %v96 = vld [vmem:[%s0 + $0x290] sm:$0xff]
  %v97 = vld [vmem:[%s0 + $0x298] sm:$0xff]
  %v98 = vld [vmem:[%s0 + $0x2a0] sm:$0xff]
  %v99 = vld [vmem:[%s0 + $0x2a8] sm:$0xff]
  %v100 = vld [vmem:[%s0 + $0x2b0] sm:$0xff]
  %v101 = vld [vmem:[%s0 + $0x2b8] sm:$0xff]
  %v102 = vld [vmem:[%s0 + $0x2c0] sm:$0xff]
  %v103 = vld [vmem:[%s0 + $0x2c8] sm:$0xff]
  %v104 = vld [vmem:[%s0 + $0x2d0] sm:$0xff]
  %v105 = vld [vmem:[%s0 + $0x2d8] sm:$0xff]
  %v106 = vld [vmem:[%s0 + $0x2e0] sm:$0xff]
  %v107 = vld [vmem:[%s0 + $0x2e8] sm:$0xff]
  %v108 = vld [vmem:[%s0 + $0x2f0] sm:$0xff]
  %v109 = vld [vmem:[%s0 + $0x2f8] sm:$0xff]
  %v110 = vld [vmem:[%s0 + $0x300] sm:$0xff]
  %v111 = vld [vmem:[%s0 + $0x308] sm:$0xff]
  %v112 = vld [vmem:[%s0 + $0x310] sm:$0xff]
  %v113 = vld [vmem:[%s0 + $0x318] sm:$0xff]
  %v114 = vld [vmem:[%s0 + $0x320] sm:$0xff]
  %v115 = vld [vmem:[%s0 + $0x328] sm:$0xff]
  %v116 = vld [vmem:[%s0 + $0x330] sm:$0xff]
  %v117 = vld [vmem:[%s0 + $0x338] sm:$0xff]
  %v118 = vld [vmem:[%s0 + $0x340] sm:$0xff]
  %v119 = vld [vmem:[%s0 + $0x348] sm:$0xff]
  %v120 = vld [vmem:[%s0 + $0x350] sm:$0xff]
  %v121 = vld [vmem:[%s0 + $0x358] sm:$0xff]
  %v122 = vld [vmem:[%s0 + $0x360] sm:$0xff]
  %v123 = vld [vmem:[%s0 + $0x368] sm:$0xff]
  %v124 = vld [vmem:[%s0 + $0x370] sm:$0xff]
  %v125 = vld [vmem:[%s0 + $0x378] sm:$0xff]
  %v126 = vld [vmem:[%s0 + $0x380] sm:$0xff]
  %v127 = vld [vmem:[%s0 + $0x388] sm:$0xff]
  %v128 = vld [vmem:[%s0 + $0x390] sm:$0xff]
  %v129 = vld [vmem:[%s0 + $0x398] sm:$0xff]
  %v130 = vld [vmem:[%s0 + $0x3a0] sm:$0xff]
  %v131 = vld [vmem:[%s0 + $0x3a8] sm:$0xff]
  %v132 = vld [vmem:[%s0 + $0x3b0] sm:$0xff]
  %v133 = vld [vmem:[%s0 + $0x3b8] sm:$0xff]
  %v134 = vld [vmem:[%s0 + $0x3c0] sm:$0xff]
  %v135 = vld [vmem:[%s0 + $0x3c8] sm:$0xff]
  %v136 = vld [vmem:[%s0 + $0x3d0] sm:$0xff]
  %v137 = vld [vmem:[%s0 + $0x3d8] sm:$0xff]
  %v138 = vld [vmem:[%s0 + $0x3e0] sm:$0xff]
  %v139 = vld [vmem:[%s0 + $0x3e8] sm:$0xff]
  %v140 = vld [vmem:[%s0 + $0x3f0] sm:$0xff]
  %v141 = vld [vmem:[%s0 + $0x3f8] sm:$0xff]
  %v142 = vld [vmem:[%s0 + $0x400] sm:$0xff]
  %v143 = vld [vmem:[%s1] sm:$0xff]
  %v144 = vld [vmem:[%s1 + $0x8] sm:$0xff]
  %v145 = vld [vmem:[%s1 + $0x10] sm:$0xff]
  %v146 = vld [vmem:[%s1 + $0x18] sm:$0xff]
  %v147 = vld [vmem:[%s1 + $0x20] sm:$0xff]
  %v148 = vld [vmem:[%s1 + $0x28] sm:$0xff]
  %v149 = vld [vmem:[%s1 + $0x30] sm:$0xff]
  %v150 = vld [vmem:[%s1 + $0x38] sm:$0xff]
  %v151 = vld [vmem:[%s1 + $0x40] sm:$0xff]
  %v152 = vld [vmem:[%s1 + $0x48] sm:$0xff]
  %v153 = vld [vmem:[%s1 + $0x50] sm:$0xff]
  %v154 = vld [vmem:[%s1 + $0x58] sm:$0xff]
  %v155 = vld [vmem:[%s1 + $0x60] sm:$0xff]
  %v156 = vld [vmem:[%s1 + $0x68] sm:$0xff]
  %v157 = vld [vmem:[%s1 + $0x70] sm:$0xff]
  %v158 = vld [vmem:[%s1 + $0x78] sm:$0xff]
  %v159 = vld [vmem:[%s1 + $0x80] sm:$0xff]
  %v160 = vld [vmem:[%s1 + $0x88] sm:$0xff]
  %v161 = vld [vmem:[%s1 + $0x90] sm:$0xff]
  %v162 = vld [vmem:[%s1 + $0x98] sm:$0xff]
  %v163 = vld [vmem:[%s1 + $0xa0] sm:$0xff]
  %v164 = vld [vmem:[%s1 + $0xa8] sm:$0xff]
  %v165 = vld [vmem:[%s1 + $0xb0] sm:$0xff]
  %v166 = vld [vmem:[%s1 + $0xb8] sm:$0xff]
  %v167 = vld [vmem:[%s1 + $0xc0] sm:$0xff]
  %v168 = vld [vmem:[%s1 + $0xc8] sm:$0xff]
  %v169 = vld [vmem:[%s1 + $0xd0] sm:$0xff]
  %v170 = vld [vmem:[%s1 + $0xd8] sm:$0xff]
  %v171 = vld [vmem:[%s1 + $0xe0] sm:$0xff]
  %v172 = vld [vmem:[%s1 + $0xe8] sm:$0xff]
  %v173 = vld [vmem:[%s1 + $0xf0] sm:$0xff]
  %v174 = vld [vmem:[%s1 + $0xf8] sm:$0xff]
  %v175 = vld [vmem:[%s1 + $0x100] sm:$0xff]
  %v176 = vld [vmem:[%s1 + $0x108] sm:$0xff]
  %v177 = vld [vmem:[%s1 + $0x110] sm:$0xff]
  %v178 = vld [vmem:[%s1 + $0x118] sm:$0xff]
  %v179 = vld [vmem:[%s1 + $0x120] sm:$0xff]
  %v180 = vld [vmem:[%s1 + $0x128] sm:$0xff]
  %v181 = vld [vmem:[%s1 + $0x130] sm:$0xff]
  %v182 = vld [vmem:[%s1 + $0x138] sm:$0xff]
  %v183 = vld [vmem:[%s1 + $0x140] sm:$0xff]
  %v184 = vld [vmem:[%s1 + $0x148] sm:$0xff]
  %v185 = vld [vmem:[%s1 + $0x150] sm:$0xff]
  %v186 = vld [vmem:[%s1 + $0x158] sm:$0xff]
  %v187 = vld [vmem:[%s1 + $0x160] sm:$0xff]
  %v188 = vld [vmem:[%s1 + $0x168] sm:$0xff]
  %v189 = vld [vmem:[%s1 + $0x170] sm:$0xff]
  %v190 = vld [vmem:[%s1 + $0x178] sm:$0xff]
  %v191 = vld [vmem:[%s2] sm:$0x1]
  %v193 = vlaneseq
  %v194 = vshrl.u32 %v193, 7
  %v195 = vsub.s32 0, %v194
  %v196 = vrot.slane %v191, %v195
  %198 = vmatprep.subr.mxu0 0.0
  %199 = vmatpush1.msra.mxu0 %v158
  %200 = vmatprep.subr.mxu0 0.0
  %201 = vmatpush1.msra.mxu0 %v157
  %202 = vmatprep.subr.mxu0 0.0
  %203 = vmatpush1.msra.mxu0 %v156
  %204 = vmatprep.subr.mxu0 0.0
  %205 = vmatpush1.msra.mxu0 %v155
  %206 = vmatprep.subr.mxu0 0.0
  %207 = vmatpush1.msra.mxu0 %v154
  %208 = vmatprep.subr.mxu0 0.0
  %209 = vmatpush1.msra.mxu0 %v153
  %210 = vmatprep.subr.mxu0 0.0
  %211 = vmatpush1.msra.mxu0 %v152
  %212 = vmatprep.subr.mxu0 0.0
  %213 = vmatpush1.msra.mxu0 %v151
  %214 = vmatprep.subr.mxu0 0.0
  %215 = vmatpush1.msra.mxu0 %v150
  %216 = vmatprep.subr.mxu0 0.0
  %217 = vmatpush1.msra.mxu0 %v149
  %218 = vmatprep.subr.mxu0 0.0
  %219 = vmatpush1.msra.mxu0 %v148
  %220 = vmatprep.subr.mxu0 0.0
  %221 = vmatpush1.msra.mxu0 %v147
  %222 = vmatprep.subr.mxu0 0.0
  %223 = vmatpush1.msra.mxu0 %v146
  %224 = vmatprep.subr.mxu0 0.0
  %225 = vmatpush1.msra.mxu0 %v145
  %226 = vmatprep.subr.mxu0 0.0
  %227 = vmatpush1.msra.mxu0 %v144
  %228 = vmatprep.subr.mxu0 0.0
  %229 = vmatpush1.msra.mxu0 %v143
  %230 = vmatprep.subr.mxu0 0.0
  %231 = vmatpush2.msra.mxu0 %v174
  %232 = vmatprep.subr.mxu0 0.0
  %233 = vmatpush2.msra.mxu0 %v173
  %234 = vmatprep.subr.mxu0 0.0
  %235 = vmatpush2.msra.mxu0 %v172
  %236 = vmatprep.subr.mxu0 0.0
  %237 = vmatpush2.msra.mxu0 %v171
  %238 = vmatprep.subr.mxu0 0.0
  %239 = vmatpush2.msra.mxu0 %v170
  %240 = vmatprep.subr.mxu0 0.0
  %241 = vmatpush2.msra.mxu0 %v169
  %242 = vmatprep.subr.mxu0 0.0
  %243 = vmatpush2.msra.mxu0 %v168
  %244 = vmatprep.subr.mxu0 0.0
  %245 = vmatpush2.msra.mxu0 %v167
  %246 = vmatprep.subr.mxu0 0.0
  %247 = vmatpush2.msra.mxu0 %v166
  %248 = vmatprep.subr.mxu0 0.0
  %249 = vmatpush2.msra.mxu0 %v165
  %250 = vmatprep.subr.mxu0 0.0
  %251 = vmatpush2.msra.mxu0 %v164
  %252 = vmatprep.subr.mxu0 0.0
  %253 = vmatpush2.msra.mxu0 %v163
  %254 = vmatprep.subr.mxu0 0.0
  %255 = vmatpush2.msra.mxu0 %v162
  %256 = vmatprep.subr.mxu0 0.0
  %257 = vmatpush2.msra.mxu0 %v161
  %258 = vmatprep.subr.mxu0 0.0
  %259 = vmatpush2.msra.mxu0 %v160
  %260 = vmatprep.subr.mxu0 0.0
  %261 = vmatpush2.msra.mxu0 %v159
  %262 = vmatprep.mubr.f32.mxu0 %v15
  %263 = vmatmul.mubr.f32.gmra.mxu0 %v14
  %v264 = vpop.f32.mrf.mxu0
  %v265 = vadd.f32 %v196, %v264
  %v266 = vpop.f32.mrf.mxu0
  %267 = vmatprep.mubr.f32.mxu0 %v18
  %268 = vmatmul.mubr.f32.gmra.mxu0 %v17
  %v269 = vpop.f32.mrf.mxu0
  %v270 = vadd.f32 %v196, %v269
  %v271 = vpop.f32.mrf.mxu0
  %272 = vmatprep.mubr.f32.mxu0 %v21
  %273 = vmatmul.mubr.f32.gmra.mxu0 %v20
  %v274 = vpop.f32.mrf.mxu0
  %v275 = vadd.f32 %v196, %v274
  %v276 = vpop.f32.mrf.mxu0
  %277 = vmatprep.mubr.f32.mxu0 %v24
  %278 = vmatmul.mubr.f32.gmra.mxu0 %v23
  %v279 = vpop.f32.mrf.mxu0
  %v280 = vadd.f32 %v196, %v279
  %v281 = vpop.f32.mrf.mxu0
  %282 = vmatprep.mubr.f32.mxu0 %v27
  %283 = vmatmul.mubr.f32.gmra.mxu0 %v26
  %v284 = vpop.f32.mrf.mxu0
  %v285 = vadd.f32 %v196, %v284
  %v286 = vpop.f32.mrf.mxu0
  %287 = vmatprep.mubr.f32.mxu0 %v30
  %288 = vmatmul.mubr.f32.gmra.mxu0 %v29
  %v289 = vpop.f32.mrf.mxu0
  %v290 = vadd.f32 %v196, %v289
  %v291 = vpop.f32.mrf.mxu0
  %292 = vmatprep.mubr.f32.mxu0 %v33
  %293 = vmatmul.mubr.f32.gmra.mxu0 %v32
  %v294 = vpop.f32.mrf.mxu0
  %v295 = vadd.f32 %v196, %v294
  %v296 = vpop.f32.mrf.mxu0
  %297 = vmatprep.mubr.f32.mxu0 %v36
  %298 = vmatmul.mubr.f32.gmra.mxu0 %v35
  %v299 = vpop.f32.mrf.mxu0
  %v300 = vadd.f32 %v196, %v299
  %v301 = vpop.f32.mrf.mxu0
  %302 = vmatprep.mubr.f32.mxu0 %v39
  %303 = vmatmul.mubr.f32.gmra.mxu0 %v38
  %v304 = vpop.f32.mrf.mxu0
  %v305 = vadd.f32 %v196, %v304
  %v306 = vpop.f32.mrf.mxu0
  %307 = vmatprep.mubr.f32.mxu0 %v42
  %308 = vmatmul.mubr.f32.gmra.mxu0 %v41
  %v309 = vpop.f32.mrf.mxu0
  %v310 = vadd.f32 %v196, %v309
  %v311 = vpop.f32.mrf.mxu0
  %312 = vmatprep.mubr.f32.mxu0 %v45
  %313 = vmatmul.mubr.f32.gmra.mxu0 %v44
  %v314 = vpop.f32.mrf.mxu0
  %v315 = vadd.f32 %v196, %v314
  %v316 = vpop.f32.mrf.mxu0
  %317 = vmatprep.mubr.f32.mxu0 %v48
  %318 = vmatmul.mubr.f32.gmra.mxu0 %v47
  %v319 = vpop.f32.mrf.mxu0
  %v320 = vadd.f32 %v196, %v319
  %v321 = vpop.f32.mrf.mxu0
  %322 = vmatprep.mubr.f32.mxu0 %v51
  %323 = vmatmul.mubr.f32.gmra.mxu0 %v50
  %v324 = vpop.f32.mrf.mxu0
  %v325 = vadd.f32 %v196, %v324
  %v326 = vpop.f32.mrf.mxu0
  %327 = vmatprep.mubr.f32.mxu0 %v54
  %328 = vmatmul.mubr.f32.gmra.mxu0 %v53
  %v329 = vpop.f32.mrf.mxu0
  %v330 = vadd.f32 %v196, %v329
  %v331 = vpop.f32.mrf.mxu0
  %332 = vmatprep.mubr.f32.mxu0 %v57
  %333 = vmatmul.mubr.f32.gmra.mxu0 %v56
  %v334 = vpop.f32.mrf.mxu0
  %v335 = vadd.f32 %v196, %v334
  %v336 = vpop.f32.mrf.mxu0
  %337 = vmatprep.mubr.f32.mxu0 %v60
  %338 = vmatmul.mubr.f32.gmra.mxu0 %v59
  %v339 = vpop.f32.mrf.mxu0
  %v340 = vadd.f32 %v196, %v339
  %v341 = vpop.f32.mrf.mxu0
  %342 = vmatprep.mubr.f32.mxu0 %v63
  %343 = vmatmul.mubr.f32.gmra.mxu0 %v62
  %v344 = vpop.f32.mrf.mxu0
  %v345 = vadd.f32 %v196, %v344
  %v346 = vpop.f32.mrf.mxu0
  %347 = vmatprep.mubr.f32.mxu0 %v66
  %348 = vmatmul.mubr.f32.gmra.mxu0 %v65
  %v349 = vpop.f32.mrf.mxu0
  %v350 = vadd.f32 %v196, %v349
  %v351 = vpop.f32.mrf.mxu0
  %352 = vmatprep.mubr.f32.mxu0 %v69
  %353 = vmatmul.mubr.f32.gmra.mxu0 %v68
  %v354 = vpop.f32.mrf.mxu0
  %v355 = vadd.f32 %v196, %v354
  %v356 = vpop.f32.mrf.mxu0
  %357 = vmatprep.mubr.f32.mxu0 %v72
  %358 = vmatmul.mubr.f32.gmra.mxu0 %v71
  %v359 = vpop.f32.mrf.mxu0
  %v360 = vadd.f32 %v196, %v359
  %v361 = vpop.f32.mrf.mxu0
  %362 = vmatprep.mubr.f32.mxu0 %v75
  %363 = vmatmul.mubr.f32.gmra.mxu0 %v74
  %v364 = vpop.f32.mrf.mxu0
  %v365 = vadd.f32 %v196, %v364
  %v366 = vpop.f32.mrf.mxu0
  %367 = vmatprep.mubr.f32.mxu0 %v78
  %368 = vmatmul.mubr.f32.gmra.mxu0 %v77
  %v369 = vpop.f32.mrf.mxu0
  %v370 = vadd.f32 %v196, %v369
  %v371 = vpop.f32.mrf.mxu0
  %372 = vmatprep.mubr.f32.mxu0 %v81
  %373 = vmatmul.mubr.f32.gmra.mxu0 %v80
  %v374 = vpop.f32.mrf.mxu0
  %v375 = vadd.f32 %v196, %v374
  %v376 = vpop.f32.mrf.mxu0
  %377 = vmatprep.mubr.f32.mxu0 %v84
  %378 = vmatmul.mubr.f32.gmra.mxu0 %v83
  %v379 = vpop.f32.mrf.mxu0
  %v380 = vadd.f32 %v196, %v379
  %v381 = vpop.f32.mrf.mxu0
  %382 = vmatprep.mubr.f32.mxu0 %v87
  %383 = vmatmul.mubr.f32.gmra.mxu0 %v86
  %v384 = vpop.f32.mrf.mxu0
  %v385 = vadd.f32 %v196, %v384
  %v386 = vpop.f32.mrf.mxu0
  %387 = vmatprep.mubr.f32.mxu0 %v90
  %388 = vmatmul.mubr.f32.gmra.mxu0 %v89
  %v389 = vpop.f32.mrf.mxu0
  %v390 = vadd.f32 %v196, %v389
  %v391 = vpop.f32.mrf.mxu0
  %392 = vmatprep.mubr.f32.mxu0 %v93
  %393 = vmatmul.mubr.f32.gmra.mxu0 %v92
  %v394 = vpop.f32.mrf.mxu0
  %v395 = vadd.f32 %v196, %v394
  %v396 = vpop.f32.mrf.mxu0
  %397 = vmatprep.mubr.f32.mxu0 %v96
  %398 = vmatmul.mubr.f32.gmra.mxu0 %v95
  %v399 = vpop.f32.mrf.mxu0
  %v400 = vadd.f32 %v196, %v399
  %v401 = vpop.f32.mrf.mxu0
  %402 = vmatprep.mubr.f32.mxu0 %v99
  %403 = vmatmul.mubr.f32.gmra.mxu0 %v98
  %v404 = vpop.f32.mrf.mxu0
  %v405 = vadd.f32 %v196, %v404
  %v406 = vpop.f32.mrf.mxu0
  %407 = vmatprep.mubr.f32.mxu0 %v102
  %408 = vmatmul.mubr.f32.gmra.mxu0 %v101
  %v409 = vpop.f32.mrf.mxu0
  %v410 = vadd.f32 %v196, %v409
  %v411 = vpop.f32.mrf.mxu0
  %412 = vmatprep.mubr.f32.mxu0 %v105
  %413 = vmatmul.mubr.f32.gmra.mxu0 %v104
  %v414 = vpop.f32.mrf.mxu0
  %v415 = vadd.f32 %v196, %v414
  %v416 = vpop.f32.mrf.mxu0
  %417 = vmatprep.mubr.f32.mxu0 %v108
  %418 = vmatmul.mubr.f32.gmra.mxu0 %v107
  %v419 = vpop.f32.mrf.mxu0
  %v420 = vadd.f32 %v196, %v419
  %v421 = vpop.f32.mrf.mxu0
  %422 = vmatprep.mubr.f32.mxu0 %v111
  %423 = vmatmul.mubr.f32.gmra.mxu0 %v110
  %v424 = vpop.f32.mrf.mxu0
  %v425 = vadd.f32 %v196, %v424
  %v426 = vpop.f32.mrf.mxu0
  %427 = vmatprep.mubr.f32.mxu0 %v114
  %428 = vmatmul.mubr.f32.gmra.mxu0 %v113
  %v429 = vpop.f32.mrf.mxu0
  %v430 = vadd.f32 %v196, %v429
  %v431 = vpop.f32.mrf.mxu0
  %432 = vmatprep.mubr.f32.mxu0 %v117
  %433 = vmatmul.mubr.f32.gmra.mxu0 %v116
  %v434 = vpop.f32.mrf.mxu0
  %v435 = vadd.f32 %v196, %v434
  %v436 = vpop.f32.mrf.mxu0
  %437 = vmatprep.mubr.f32.mxu0 %v120
  %438 = vmatmul.mubr.f32.gmra.mxu0 %v119
  %v439 = vpop.f32.mrf.mxu0
  %v440 = vadd.f32 %v196, %v439
  %v441 = vpop.f32.mrf.mxu0
  %442 = vmatprep.mubr.f32.mxu0 %v123
  %443 = vmatmul.mubr.f32.gmra.mxu0 %v122
  %v444 = vpop.f32.mrf.mxu0
  %v445 = vadd.f32 %v196, %v444
  %v446 = vpop.f32.mrf.mxu0
  %447 = vmatprep.mubr.f32.mxu0 %v126
  %448 = vmatmul.mubr.f32.gmra.mxu0 %v125
  %v449 = vpop.f32.mrf.mxu0
  %v450 = vadd.f32 %v196, %v449
  %v451 = vpop.f32.mrf.mxu0
  %452 = vmatprep.mubr.f32.mxu0 %v129
  %453 = vmatmul.mubr.f32.gmra.mxu0 %v128
  %v454 = vpop.f32.mrf.mxu0
  %v455 = vadd.f32 %v196, %v454
  %v456 = vpop.f32.mrf.mxu0
  %457 = vmatprep.mubr.f32.mxu0 %v132
  %458 = vmatmul.mubr.f32.gmra.mxu0 %v131
  %v459 = vpop.f32.mrf.mxu0
  %v460 = vadd.f32 %v196, %v459
  %v461 = vpop.f32.mrf.mxu0
  %462 = vmatprep.mubr.f32.mxu0 %v135
  %463 = vmatmul.mubr.f32.gmra.mxu0 %v134
  %v464 = vpop.f32.mrf.mxu0
  %v465 = vadd.f32 %v196, %v464
  %v466 = vpop.f32.mrf.mxu0
  %467 = vmatprep.mubr.f32.mxu0 %v138
  %468 = vmatmul.mubr.f32.gmra.mxu0 %v137
  %v469 = vpop.f32.mrf.mxu0
  %v470 = vadd.f32 %v196, %v469
  %v471 = vpop.f32.mrf.mxu0
  %472 = vmatprep.mubr.f32.mxu0 %v141
  %473 = vmatmul.mubr.f32.gmra.mxu0 %v140
  %v474 = vpop.f32.mrf.mxu0
  %v475 = vadd.f32 %v196, %v474
  %v476 = vpop.f32.mrf.mxu0
  %477 = vdwg.mxu0
  %478 = vmatprep.subr.mxu0 0.0
  %479 = vmatpush1.msra.mxu0 %v190
  %480 = vmatprep.subr.mxu0 0.0
  %481 = vmatpush1.msra.mxu0 %v189
  %482 = vmatprep.subr.mxu0 0.0
  %483 = vmatpush1.msra.mxu0 %v188
  %484 = vmatprep.subr.mxu0 0.0
  %485 = vmatpush1.msra.mxu0 %v187
  %486 = vmatprep.subr.mxu0 0.0
  %487 = vmatpush1.msra.mxu0 %v186
  %488 = vmatprep.subr.mxu0 0.0
  %489 = vmatpush1.msra.mxu0 %v185
  %490 = vmatprep.subr.mxu0 0.0
  %491 = vmatpush1.msra.mxu0 %v184
  %492 = vmatprep.subr.mxu0 0.0
  %493 = vmatpush1.msra.mxu0 %v183
  %494 = vmatprep.subr.mxu0 0.0
  %495 = vmatpush1.msra.mxu0 %v182
  %496 = vmatprep.subr.mxu0 0.0
  %497 = vmatpush1.msra.mxu0 %v181
  %498 = vmatprep.subr.mxu0 0.0
  %499 = vmatpush1.msra.mxu0 %v180
  %500 = vmatprep.subr.mxu0 0.0
  %501 = vmatpush1.msra.mxu0 %v179
  %502 = vmatprep.subr.mxu0 0.0
  %503 = vmatpush1.msra.mxu0 %v178
  %504 = vmatprep.subr.mxu0 0.0
  %505 = vmatpush1.msra.mxu0 %v177
  %506 = vmatprep.subr.mxu0 0.0
  %507 = vmatpush1.msra.mxu0 %v176
  %508 = vmatprep.subr.mxu0 0.0
  %509 = vmatpush1.msra.mxu0 %v175
  %510 = vmatprep.subr.mxu0 0.0
  %511 = vmatpush2.msra.mxu0 0.0
  %512 = vmatprep.subr.mxu0 0.0
  %513 = vmatpush2.msra.mxu0 0.0
  %514 = vmatprep.subr.mxu0 0.0
  %515 = vmatpush2.msra.mxu0 0.0
  %516 = vmatprep.subr.mxu0 0.0
  %517 = vmatpush2.msra.mxu0 0.0
  %518 = vmatprep.subr.mxu0 0.0
  %519 = vmatpush2.msra.mxu0 0.0
  %520 = vmatprep.subr.mxu0 0.0
  %521 = vmatpush2.msra.mxu0 0.0
  %522 = vmatprep.subr.mxu0 0.0
  %523 = vmatpush2.msra.mxu0 0.0
  %524 = vmatprep.subr.mxu0 0.0
  %525 = vmatpush2.msra.mxu0 0.0
  %526 = vmatprep.subr.mxu0 0.0
  %527 = vmatpush2.msra.mxu0 0.0
  %528 = vmatprep.subr.mxu0 0.0
  %529 = vmatpush2.msra.mxu0 0.0
  %530 = vmatprep.subr.mxu0 0.0
  %531 = vmatpush2.msra.mxu0 0.0
  %532 = vmatprep.subr.mxu0 0.0
  %533 = vmatpush2.msra.mxu0 0.0
  %534 = vmatprep.subr.mxu0 0.0
  %535 = vmatpush2.msra.mxu0 0.0
  %536 = vmatprep.subr.mxu0 0.0
  %537 = vmatpush2.msra.mxu0 0.0
  %538 = vmatprep.subr.mxu0 0.0
  %539 = vmatpush2.msra.mxu0 0.0
  %540 = vmatprep.subr.mxu0 0.0
  %541 = vmatpush2.msra.mxu0 0.0
  %542 = vmatprep.mubr.f32.mxu0 0.0
  %543 = vmatmul.mubr.f32.gmra.mxu0 %v16
  %v544 = vpop.f32.mrf.mxu0
  %v545 = vadd.f32 %v265, %v544
  %v546 = vpop.f32.mrf.mxu0
  %547 = vmatprep.mubr.f32.mxu0 0.0
  %548 = vmatmul.mubr.f32.gmra.mxu0 %v19
  %v549 = vpop.f32.mrf.mxu0
  %v550 = vadd.f32 %v270, %v549
  %v551 = vpop.f32.mrf.mxu0
  %552 = vmatprep.mubr.f32.mxu0 0.0
  %553 = vmatmul.mubr.f32.gmra.mxu0 %v22
  %v554 = vpop.f32.mrf.mxu0
  %v555 = vadd.f32 %v275, %v554
  %v556 = vpop.f32.mrf.mxu0
  %557 = vmatprep.mubr.f32.mxu0 0.0
  %558 = vmatmul.mubr.f32.gmra.mxu0 %v25
  %v559 = vpop.f32.mrf.mxu0
  %v560 = vadd.f32 %v280, %v559
  %v561 = vpop.f32.mrf.mxu0
  %562 = vmatprep.mubr.f32.mxu0 0.0
  %563 = vmatmul.mubr.f32.gmra.mxu0 %v28
  %v564 = vpop.f32.mrf.mxu0
  %v565 = vadd.f32 %v285, %v564
  %v566 = vpop.f32.mrf.mxu0
  %567 = vmatprep.mubr.f32.mxu0 0.0
  %568 = vmatmul.mubr.f32.gmra.mxu0 %v31
  %v569 = vpop.f32.mrf.mxu0
  %v570 = vadd.f32 %v290, %v569
  %v571 = vpop.f32.mrf.mxu0
  %572 = vmatprep.mubr.f32.mxu0 0.0
  %573 = vmatmul.mubr.f32.gmra.mxu0 %v34
  %v574 = vpop.f32.mrf.mxu0
  %v575 = vadd.f32 %v295, %v574
  %v576 = vpop.f32.mrf.mxu0
  %577 = vmatprep.mubr.f32.mxu0 0.0
  %578 = vmatmul.mubr.f32.gmra.mxu0 %v37
  %v579 = vpop.f32.mrf.mxu0
  %v580 = vadd.f32 %v300, %v579
  %v581 = vpop.f32.mrf.mxu0
  %582 = vmatprep.mubr.f32.mxu0 0.0
  %583 = vmatmul.mubr.f32.gmra.mxu0 %v40
  %v584 = vpop.f32.mrf.mxu0
  %v585 = vadd.f32 %v305, %v584
  %v586 = vpop.f32.mrf.mxu0
  %587 = vmatprep.mubr.f32.mxu0 0.0
  %588 = vmatmul.mubr.f32.gmra.mxu0 %v43
  %v589 = vpop.f32.mrf.mxu0
  %v590 = vadd.f32 %v310, %v589
  %v591 = vpop.f32.mrf.mxu0
  %592 = vmatprep.mubr.f32.mxu0 0.0
  %593 = vmatmul.mubr.f32.gmra.mxu0 %v46
  %v594 = vpop.f32.mrf.mxu0
  %v595 = vadd.f32 %v315, %v594
  %v596 = vpop.f32.mrf.mxu0
  %597 = vmatprep.mubr.f32.mxu0 0.0
  %598 = vmatmul.mubr.f32.gmra.mxu0 %v49
  %v599 = vpop.f32.mrf.mxu0
  %v600 = vadd.f32 %v320, %v599
  %v601 = vpop.f32.mrf.mxu0
  %602 = vmatprep.mubr.f32.mxu0 0.0
  %603 = vmatmul.mubr.f32.gmra.mxu0 %v52
  %v604 = vpop.f32.mrf.mxu0
  %v605 = vadd.f32 %v325, %v604
  %v606 = vpop.f32.mrf.mxu0
  %607 = vmatprep.mubr.f32.mxu0 0.0
  %608 = vmatmul.mubr.f32.gmra.mxu0 %v55
  %v609 = vpop.f32.mrf.mxu0
  %v610 = vadd.f32 %v330, %v609
  %v611 = vpop.f32.mrf.mxu0
  %612 = vmatprep.mubr.f32.mxu0 0.0
  %613 = vmatmul.mubr.f32.gmra.mxu0 %v58
  %v614 = vpop.f32.mrf.mxu0
  %v615 = vadd.f32 %v335, %v614
  %v616 = vpop.f32.mrf.mxu0
  %617 = vmatprep.mubr.f32.mxu0 0.0
  %618 = vmatmul.mubr.f32.gmra.mxu0 %v61
  %v619 = vpop.f32.mrf.mxu0
  %v620 = vadd.f32 %v340, %v619
  %v621 = vpop.f32.mrf.mxu0
  %622 = vmatprep.mubr.f32.mxu0 0.0
  %623 = vmatmul.mubr.f32.gmra.mxu0 %v64
  %v624 = vpop.f32.mrf.mxu0
  %v625 = vadd.f32 %v345, %v624
  %v626 = vpop.f32.mrf.mxu0
  %627 = vmatprep.mubr.f32.mxu0 0.0
  %628 = vmatmul.mubr.f32.gmra.mxu0 %v67
  %v629 = vpop.f32.mrf.mxu0
  %v630 = vadd.f32 %v350, %v629
  %v631 = vpop.f32.mrf.mxu0
  %632 = vmatprep.mubr.f32.mxu0 0.0
  %633 = vmatmul.mubr.f32.gmra.mxu0 %v70
  %v634 = vpop.f32.mrf.mxu0
  %v635 = vadd.f32 %v355, %v634
  %v636 = vpop.f32.mrf.mxu0
  %637 = vmatprep.mubr.f32.mxu0 0.0
  %638 = vmatmul.mubr.f32.gmra.mxu0 %v73
  %v639 = vpop.f32.mrf.mxu0
  %v640 = vadd.f32 %v360, %v639
  %v641 = vpop.f32.mrf.mxu0
  %642 = vmatprep.mubr.f32.mxu0 0.0
  %643 = vmatmul.mubr.f32.gmra.mxu0 %v76
  %v644 = vpop.f32.mrf.mxu0
  %v645 = vadd.f32 %v365, %v644
  %v646 = vpop.f32.mrf.mxu0
  %647 = vmatprep.mubr.f32.mxu0 0.0
  %648 = vmatmul.mubr.f32.gmra.mxu0 %v79
  %v649 = vpop.f32.mrf.mxu0
  %v650 = vadd.f32 %v370, %v649
  %v651 = vpop.f32.mrf.mxu0
  %652 = vmatprep.mubr.f32.mxu0 0.0
  %653 = vmatmul.mubr.f32.gmra.mxu0 %v82
  %v654 = vpop.f32.mrf.mxu0
  %v655 = vadd.f32 %v375, %v654
  %v656 = vpop.f32.mrf.mxu0
  %657 = vmatprep.mubr.f32.mxu0 0.0
  %658 = vmatmul.mubr.f32.gmra.mxu0 %v85
  %v659 = vpop.f32.mrf.mxu0
  %v660 = vadd.f32 %v380, %v659
  %v661 = vpop.f32.mrf.mxu0
  %662 = vmatprep.mubr.f32.mxu0 0.0
  %663 = vmatmul.mubr.f32.gmra.mxu0 %v88
  %v664 = vpop.f32.mrf.mxu0
  %v665 = vadd.f32 %v385, %v664
  %v666 = vpop.f32.mrf.mxu0
  %667 = vmatprep.mubr.f32.mxu0 0.0
  %668 = vmatmul.mubr.f32.gmra.mxu0 %v91
  %v669 = vpop.f32.mrf.mxu0
  %v670 = vadd.f32 %v390, %v669
  %v671 = vpop.f32.mrf.mxu0
  %672 = vmatprep.mubr.f32.mxu0 0.0
  %673 = vmatmul.mubr.f32.gmra.mxu0 %v94
  %v674 = vpop.f32.mrf.mxu0
  %v675 = vadd.f32 %v395, %v674
  %v676 = vpop.f32.mrf.mxu0
  %677 = vmatprep.mubr.f32.mxu0 0.0
  %678 = vmatmul.mubr.f32.gmra.mxu0 %v97
  %v679 = vpop.f32.mrf.mxu0
  %v680 = vadd.f32 %v400, %v679
  %v681 = vpop.f32.mrf.mxu0
  %682 = vmatprep.mubr.f32.mxu0 0.0
  %683 = vmatmul.mubr.f32.gmra.mxu0 %v100
  %v684 = vpop.f32.mrf.mxu0
  %v685 = vadd.f32 %v405, %v684
  %v686 = vpop.f32.mrf.mxu0
  %687 = vmatprep.mubr.f32.mxu0 0.0
  %688 = vmatmul.mubr.f32.gmra.mxu0 %v103
  %v689 = vpop.f32.mrf.mxu0
  %v690 = vadd.f32 %v410, %v689
  %v691 = vpop.f32.mrf.mxu0
  %692 = vmatprep.mubr.f32.mxu0 0.0
  %693 = vmatmul.mubr.f32.gmra.mxu0 %v106
  %v694 = vpop.f32.mrf.mxu0
  %v695 = vadd.f32 %v415, %v694
  %v696 = vpop.f32.mrf.mxu0
  %697 = vmatprep.mubr.f32.mxu0 0.0
  %698 = vmatmul.mubr.f32.gmra.mxu0 %v109
  %v699 = vpop.f32.mrf.mxu0
  %v700 = vadd.f32 %v420, %v699
  %v701 = vpop.f32.mrf.mxu0
  %702 = vmatprep.mubr.f32.mxu0 0.0
  %703 = vmatmul.mubr.f32.gmra.mxu0 %v112
  %v704 = vpop.f32.mrf.mxu0
  %v705 = vadd.f32 %v425, %v704
  %v706 = vpop.f32.mrf.mxu0
  %707 = vmatprep.mubr.f32.mxu0 0.0
  %708 = vmatmul.mubr.f32.gmra.mxu0 %v115
  %v709 = vpop.f32.mrf.mxu0
  %v710 = vadd.f32 %v430, %v709
  %v711 = vpop.f32.mrf.mxu0
  %712 = vmatprep.mubr.f32.mxu0 0.0
  %713 = vmatmul.mubr.f32.gmra.mxu0 %v118
  %v714 = vpop.f32.mrf.mxu0
  %v715 = vadd.f32 %v435, %v714
  %v716 = vpop.f32.mrf.mxu0
  %717 = vmatprep.mubr.f32.mxu0 0.0
  %718 = vmatmul.mubr.f32.gmra.mxu0 %v121
  %v719 = vpop.f32.mrf.mxu0
  %v720 = vadd.f32 %v440, %v719
  %v721 = vpop.f32.mrf.mxu0
  %722 = vmatprep.mubr.f32.mxu0 0.0
  %723 = vmatmul.mubr.f32.gmra.mxu0 %v124
  %v724 = vpop.f32.mrf.mxu0
  %v725 = vadd.f32 %v445, %v724
  %v726 = vpop.f32.mrf.mxu0
  %727 = vmatprep.mubr.f32.mxu0 0.0
  %728 = vmatmul.mubr.f32.gmra.mxu0 %v127
  %v729 = vpop.f32.mrf.mxu0
  %v730 = vadd.f32 %v450, %v729
  %v731 = vpop.f32.mrf.mxu0
  %732 = vmatprep.mubr.f32.mxu0 0.0
  %733 = vmatmul.mubr.f32.gmra.mxu0 %v130
  %v734 = vpop.f32.mrf.mxu0
  %v735 = vadd.f32 %v455, %v734
  %v736 = vpop.f32.mrf.mxu0
  %737 = vmatprep.mubr.f32.mxu0 0.0
  %738 = vmatmul.mubr.f32.gmra.mxu0 %v133
  %v739 = vpop.f32.mrf.mxu0
  %v740 = vadd.f32 %v460, %v739
  %v741 = vpop.f32.mrf.mxu0
  %742 = vmatprep.mubr.f32.mxu0 0.0
  %743 = vmatmul.mubr.f32.gmra.mxu0 %v136
  %v744 = vpop.f32.mrf.mxu0
  %v745 = vadd.f32 %v465, %v744
  %v746 = vpop.f32.mrf.mxu0
  %747 = vmatprep.mubr.f32.mxu0 0.0
  %748 = vmatmul.mubr.f32.gmra.mxu0 %v139
  %v749 = vpop.f32.mrf.mxu0
  %v750 = vadd.f32 %v470, %v749
  %v751 = vpop.f32.mrf.mxu0
  %752 = vmatprep.mubr.f32.mxu0 0.0
  %753 = vmatmul.mubr.f32.gmra.mxu0 %v142
  %v754 = vpop.f32.mrf.mxu0
  %v755 = vadd.f32 %v475, %v754
  %v756 = vpop.f32.mrf.mxu0
  %757 = vdwg.mxu0
  %v758 = vmax.f32 %v545, 0.0
  %v759 = vmax.f32 %v550, 0.0
  %v760 = vmax.f32 %v555, 0.0
  %v761 = vmax.f32 %v560, 0.0
  %v762 = vmax.f32 %v565, 0.0
  %v763 = vmax.f32 %v570, 0.0
  %v764 = vmax.f32 %v575, 0.0
  %v765 = vmax.f32 %v580, 0.0
  %v766 = vmax.f32 %v585, 0.0
  %v767 = vmax.f32 %v590, 0.0
  %v768 = vmax.f32 %v595, 0.0
  %v769 = vmax.f32 %v600, 0.0
  %v770 = vmax.f32 %v605, 0.0
  %v771 = vmax.f32 %v610, 0.0
  %v772 = vmax.f32 %v615, 0.0
  %v773 = vmax.f32 %v620, 0.0
  %v774 = vmax.f32 %v625, 0.0
  %v775 = vmax.f32 %v630, 0.0
  %v776 = vmax.f32 %v635, 0.0
  %v777 = vmax.f32 %v640, 0.0
  %v778 = vmax.f32 %v645, 0.0
  %v779 = vmax.f32 %v650, 0.0
  %v780 = vmax.f32 %v655, 0.0
  %v781 = vmax.f32 %v660, 0.0
  %v782 = vmax.f32 %v665, 0.0
  %v783 = vmax.f32 %v670, 0.0
  %v784 = vmax.f32 %v675, 0.0
  %v785 = vmax.f32 %v680, 0.0
  %v786 = vmax.f32 %v685, 0.0
  %v787 = vmax.f32 %v690, 0.0
  %v788 = vmax.f32 %v695, 0.0
  %v789 = vmax.f32 %v700, 0.0
  %v790 = vmax.f32 %v705, 0.0
  %v791 = vmax.f32 %v710, 0.0
  %v792 = vmax.f32 %v715, 0.0
  %v793 = vmax.f32 %v720, 0.0
  %v794 = vmax.f32 %v725, 0.0
  %v795 = vmax.f32 %v730, 0.0
  %v796 = vmax.f32 %v735, 0.0
  %v797 = vmax.f32 %v740, 0.0
  %v798 = vmax.f32 %v745, 0.0
  %v799 = vmax.f32 %v750, 0.0
  %v800 = vmax.f32 %v755, 0.0
  %801 = vst [vmem:[%s3] sm:$0xff] %v758
  %802 = vst [vmem:[%s3 + $0x8] sm:$0xff] %v759
  %803 = vst [vmem:[%s3 + $0x10] sm:$0xff] %v760
  %804 = vst [vmem:[%s3 + $0x18] sm:$0xff] %v761
  %805 = vst [vmem:[%s3 + $0x20] sm:$0xff] %v762
  %806 = vst [vmem:[%s3 + $0x28] sm:$0xff] %v763
  %807 = vst [vmem:[%s3 + $0x30] sm:$0xff] %v764
  %808 = vst [vmem:[%s3 + $0x38] sm:$0xff] %v765
  %809 = vst [vmem:[%s3 + $0x40] sm:$0xff] %v766
  %810 = vst [vmem:[%s3 + $0x48] sm:$0xff] %v767
  %811 = vst [vmem:[%s3 + $0x50] sm:$0xff] %v768
  %812 = vst [vmem:[%s3 + $0x58] sm:$0xff] %v769
  %813 = vst [vmem:[%s3 + $0x60] sm:$0xff] %v770
  %814 = vst [vmem:[%s3 + $0x68] sm:$0xff] %v771
  %815 = vst [vmem:[%s3 + $0x70] sm:$0xff] %v772
  %816 = vst [vmem:[%s3 + $0x78] sm:$0xff] %v773
  %817 = vst [vmem:[%s3 + $0x80] sm:$0xff] %v774
  %818 = vst [vmem:[%s3 + $0x88] sm:$0xff] %v775
  %819 = vst [vmem:[%s3 + $0x90] sm:$0xff] %v776
  %820 = vst [vmem:[%s3 + $0x98] sm:$0xff] %v777
  %821 = vst [vmem:[%s3 + $0xa0] sm:$0xff] %v778
  %822 = vst [vmem:[%s3 + $0xa8] sm:$0xff] %v779
  %823 = vst [vmem:[%s3 + $0xb0] sm:$0xff] %v780
  %824 = vst [vmem:[%s3 + $0xb8] sm:$0xff] %v781
  %825 = vst [vmem:[%s3 + $0xc0] sm:$0xff] %v782
  %826 = vst [vmem:[%s3 + $0xc8] sm:$0xff] %v783
  %827 = vst [vmem:[%s3 + $0xd0] sm:$0xff] %v784
  %828 = vst [vmem:[%s3 + $0xd8] sm:$0xff] %v785
  %829 = vst [vmem:[%s3 + $0xe0] sm:$0xff] %v786
  %830 = vst [vmem:[%s3 + $0xe8] sm:$0xff] %v787
  %831 = vst [vmem:[%s3 + $0xf0] sm:$0xff] %v788
  %832 = vst [vmem:[%s3 + $0xf8] sm:$0xff] %v789
  %833 = vst [vmem:[%s3 + $0x100] sm:$0xff] %v790
  %834 = vst [vmem:[%s3 + $0x108] sm:$0xff] %v791
  %835 = vst [vmem:[%s3 + $0x110] sm:$0xff] %v792
  %836 = vst [vmem:[%s3 + $0x118] sm:$0xff] %v793
  %837 = vst [vmem:[%s3 + $0x120] sm:$0xff] %v794
  %838 = vst [vmem:[%s3 + $0x128] sm:$0xff] %v795
  %839 = vst [vmem:[%s3 + $0x130] sm:$0xff] %v796
  %840 = vst [vmem:[%s3 + $0x138] sm:$0xff] %v797
  %841 = vst [vmem:[%s3 + $0x140] sm:$0xff] %v798
  %842 = vst [vmem:[%s3 + $0x148] sm:$0xff] %v799
  %843 = vst [vmem:[%s3 + $0x150] sm:$0xff] %v800
  // Predicated region
  $region14: #{generator_forward.6} parent=0 // pred_check
    _
  $region15: #{generator_forward.6} parent=0 // pred_check_branch
    %845 = sbr.rel (0) target = $region17
  $region16: #{generator_forward.6} parent=0 // pred_region
    _
  $region17: #{generator_forward.6} parent=0 // pred_fallthru
    _
  // Predicated region
  $region18: #{generator_forward.6} parent=0 // pred_check
    _
  $region19: #{generator_forward.6} parent=0 // pred_check_branch
    %847 = sbr.rel (0) target = $region21
  $region20: #{generator_forward.6} parent=0 // pred_region
    _
  $region21: #{generator_forward.6} parent=0 // pred_fallthru
    _

// kernel: generator_forward.7
$region0: #{generator_forward.7}
  #allocation0 [shape = 'u32[]', space=smem, size = 0x4, offset = 0x4, fixed_abs, tag = 'smem constant byte address 0x4 - core index']
  #allocation1 [shape = 'u32[144,128]{1,0:T(1,128)}', space=vmem, size = 0x12000, scoped, tag = 'internal scratch']
  %s0 = inlined_call_operand.vmem [shape: f32[8,256], index: 0, kind: input, shape index: {}]
  %s1 = inlined_call_operand.vmem [shape: f32[256,1664], index: 1, kind: input, shape index: {}]
  %s2 = inlined_call_operand.vmem [shape: f32[8,1], index: 2, kind: input, shape index: {}]
  %s3 = inlined_call_operand.vmem [shape: f32[8,1664], index: 3, kind: output, shape index: {}]
  %s4 = sld [smem:[#allocation0]]
  $region22: #{generator_forward.7} parent=0
    _
  %s6 = ssub.s32 1, %s4
  %s7 = scalar_select 0, %s6, %s4
  // Predicated region
  $region2: #{generator_forward.7} parent=0 // pred_check
    _
  $region3: #{generator_forward.7} parent=0 // pred_check_branch
    %9 = sbr.rel (0) target = $region5
  $region4: #{generator_forward.7} parent=0 // pred_region
    _
  $region5: #{generator_forward.7} parent=0 // pred_fallthru
    _
  // Predicated region
  $region6: #{generator_forward.7} parent=0 // pred_check
    _
  $region7: #{generator_forward.7} parent=0 // pred_check_branch
    %11 = sbr.rel (0) target = $region9
  $region8: #{generator_forward.7} parent=0 // pred_region
    _
  $region9: #{generator_forward.7} parent=0 // pred_fallthru
    _
  // Predicated region
  $region10: #{generator_forward.7} parent=0 // pred_check
    _
  $region11: #{generator_forward.7} parent=0 // pred_check_branch
    %13 = sbr.rel (0) target = $region13
  $region12: #{generator_forward.7} parent=0 // pred_region
    _
  $region13: #{generator_forward.7} parent=0 // pred_fallthru
    _
  %v14 = vld [vmem:[%s0] sm:$0xff]
  %v15 = vld [vmem:[%s0 + $0x8] sm:$0xff]
  %v16 = vld [vmem:[%s1] sm:$0xff]
  %v17 = vld [vmem:[%s1 + $0x8] sm:$0xff]
  %v18 = vld [vmem:[%s1 + $0x10] sm:$0xff]
  %v19 = vld [vmem:[%s1 + $0x18] sm:$0xff]
  %v20 = vld [vmem:[%s1 + $0x20] sm:$0xff]
  %v21 = vld [vmem:[%s1 + $0x28] sm:$0xff]
  %v22 = vld [vmem:[%s1 + $0x30] sm:$0xff]
  %v23 = vld [vmem:[%s1 + $0x38] sm:$0xff]
  %v24 = vld [vmem:[%s1 + $0x40] sm:$0xff]
  %v25 = vld [vmem:[%s1 + $0x48] sm:$0xff]
  %v26 = vld [vmem:[%s1 + $0x50] sm:$0xff]
  %v27 = vld [vmem:[%s1 + $0x58] sm:$0xff]
  %v28 = vld [vmem:[%s1 + $0x60] sm:$0xff]
  %v29 = vld [vmem:[%s1 + $0x68] sm:$0xff]
  %v30 = vld [vmem:[%s1 + $0x70] sm:$0xff]
  %v31 = vld [vmem:[%s1 + $0x78] sm:$0xff]
  %v32 = vld [vmem:[%s1 + $0x80] sm:$0xff]
  %v33 = vld [vmem:[%s1 + $0x88] sm:$0xff]
  %v34 = vld [vmem:[%s1 + $0x90] sm:$0xff]
  %v35 = vld [vmem:[%s1 + $0x98] sm:$0xff]
  %v36 = vld [vmem:[%s1 + $0xa0] sm:$0xff]
  %v37 = vld [vmem:[%s1 + $0xa8] sm:$0xff]
  %v38 = vld [vmem:[%s1 + $0xb0] sm:$0xff]
  %v39 = vld [vmem:[%s1 + $0xb8] sm:$0xff]
  %v40 = vld [vmem:[%s1 + $0xc0] sm:$0xff]
  %v41 = vld [vmem:[%s1 + $0xc8] sm:$0xff]
  %v42 = vld [vmem:[%s1 + $0xd0] sm:$0xff]
  %v43 = vld [vmem:[%s1 + $0xd8] sm:$0xff]
  %v44 = vld [vmem:[%s1 + $0xe0] sm:$0xff]
  %v45 = vld [vmem:[%s1 + $0xe8] sm:$0xff]
  %v46 = vld [vmem:[%s1 + $0xf0] sm:$0xff]
  %v47 = vld [vmem:[%s1 + $0xf8] sm:$0xff]
  %v48 = vld [vmem:[%s1 + $0x100] sm:$0xff]
  %v49 = vld [vmem:[%s1 + $0x108] sm:$0xff]
  %v50 = vld [vmem:[%s1 + $0x110] sm:$0xff]
  %v51 = vld [vmem:[%s1 + $0x118] sm:$0xff]
  %v52 = vld [vmem:[%s1 + $0x120] sm:$0xff]
  %v53 = vld [vmem:[%s1 + $0x128] sm:$0xff]
  %v54 = vld [vmem:[%s1 + $0x130] sm:$0xff]
  %v55 = vld [vmem:[%s1 + $0x138] sm:$0xff]
  %v56 = vld [vmem:[%s1 + $0x140] sm:$0xff]
  %v57 = vld [vmem:[%s1 + $0x148] sm:$0xff]
  %v58 = vld [vmem:[%s1 + $0x150] sm:$0xff]
  %v59 = vld [vmem:[%s1 + $0x158] sm:$0xff]
  %v60 = vld [vmem:[%s1 + $0x160] sm:$0xff]
  %v61 = vld [vmem:[%s1 + $0x168] sm:$0xff]
  %v62 = vld [vmem:[%s1 + $0x170] sm:$0xff]
  %v63 = vld [vmem:[%s1 + $0x178] sm:$0xff]
  %v64 = vld [vmem:[%s1 + $0x180] sm:$0xff]
  %v65 = vld [vmem:[%s1 + $0x188] sm:$0xff]
  %v66 = vld [vmem:[%s1 + $0x190] sm:$0xff]
  %v67 = vld [vmem:[%s1 + $0x198] sm:$0xff]
  %v68 = vld [vmem:[%s1 + $0x1a0] sm:$0xff]
  %v69 = vld [vmem:[%s1 + $0x1a8] sm:$0xff]
  %v70 = vld [vmem:[%s1 + $0x1b0] sm:$0xff]
  %v71 = vld [vmem:[%s1 + $0x1b8] sm:$0xff]
  %v72 = vld [vmem:[%s1 + $0x1c0] sm:$0xff]
  %v73 = vld [vmem:[%s1 + $0x1c8] sm:$0xff]
  %v74 = vld [vmem:[%s1 + $0x1d0] sm:$0xff]
  %v75 = vld [vmem:[%s1 + $0x1d8] sm:$0xff]
  %v76 = vld [vmem:[%s1 + $0x1e0] sm:$0xff]
  %v77 = vld [vmem:[%s1 + $0x1e8] sm:$0xff]
  %v78 = vld [vmem:[%s1 + $0x1f0] sm:$0xff]
  %v79 = vld [vmem:[%s1 + $0x1f8] sm:$0xff]
  %v80 = vld [vmem:[%s1 + $0x200] sm:$0xff]
  %v81 = vld [vmem:[%s1 + $0x208] sm:$0xff]
  %v82 = vld [vmem:[%s1 + $0x210] sm:$0xff]
  %v83 = vld [vmem:[%s1 + $0x218] sm:$0xff]
  %v84 = vld [vmem:[%s1 + $0x220] sm:$0xff]
  %v85 = vld [vmem:[%s1 + $0x228] sm:$0xff]
  %v86 = vld [vmem:[%s1 + $0x230] sm:$0xff]
  %v87 = vld [vmem:[%s1 + $0x238] sm:$0xff]
  %v88 = vld [vmem:[%s1 + $0x240] sm:$0xff]
  %v89 = vld [vmem:[%s1 + $0x248] sm:$0xff]
  %v90 = vld [vmem:[%s1 + $0x250] sm:$0xff]
  %v91 = vld [vmem:[%s1 + $0x258] sm:$0xff]
  %v92 = vld [vmem:[%s1 + $0x260] sm:$0xff]
  %v93 = vld [vmem:[%s1 + $0x268] sm:$0xff]
  %v94 = vld [vmem:[%s1 + $0x270] sm:$0xff]
  %v95 = vld [vmem:[%s1 + $0x278] sm:$0xff]
  %v96 = vld [vmem:[%s1 + $0x280] sm:$0xff]
  %v97 = vld [vmem:[%s1 + $0x288] sm:$0xff]
  %v98 = vld [vmem:[%s1 + $0x290] sm:$0xff]
  %v99 = vld [vmem:[%s1 + $0x298] sm:$0xff]
  %v100 = vld [vmem:[%s1 + $0x2a0] sm:$0xff]
  %v101 = vld [vmem:[%s1 + $0x2a8] sm:$0xff]
  %v102 = vld [vmem:[%s1 + $0x2b0] sm:$0xff]
  %v103 = vld [vmem:[%s1 + $0x2b8] sm:$0xff]
  %v104 = vld [vmem:[%s1 + $0x2c0] sm:$0xff]
  %v105 = vld [vmem:[%s1 + $0x2c8] sm:$0xff]
  %v106 = vld [vmem:[%s1 + $0x2d0] sm:$0xff]
  %v107 = vld [vmem:[%s1 + $0x2d8] sm:$0xff]
  %v108 = vld [vmem:[%s1 + $0x2e0] sm:$0xff]
  %v109 = vld [vmem:[%s1 + $0x2e8] sm:$0xff]
  %v110 = vld [vmem:[%s1 + $0x2f0] sm:$0xff]
  %v111 = vld [vmem:[%s1 + $0x2f8] sm:$0xff]
  %v112 = vld [vmem:[%s1 + $0x300] sm:$0xff]
  %v113 = vld [vmem:[%s1 + $0x308] sm:$0xff]
  %v114 = vld [vmem:[%s1 + $0x310] sm:$0xff]
  %v115 = vld [vmem:[%s1 + $0x318] sm:$0xff]
  %v116 = vld [vmem:[%s1 + $0x320] sm:$0xff]
  %v117 = vld [vmem:[%s1 + $0x328] sm:$0xff]
  %v118 = vld [vmem:[%s1 + $0x330] sm:$0xff]
  %v119 = vld [vmem:[%s1 + $0x338] sm:$0xff]
  %v120 = vld [vmem:[%s1 + $0x340] sm:$0xff]
  %v121 = vld [vmem:[%s1 + $0x348] sm:$0xff]
  %v122 = vld [vmem:[%s1 + $0x350] sm:$0xff]
  %v123 = vld [vmem:[%s1 + $0x358] sm:$0xff]
  %v124 = vld [vmem:[%s1 + $0x360] sm:$0xff]
  %v125 = vld [vmem:[%s1 + $0x368] sm:$0xff]
  %v126 = vld [vmem:[%s1 + $0x370] sm:$0xff]
  %v127 = vld [vmem:[%s1 + $0x378] sm:$0xff]
  %v128 = vld [vmem:[%s1 + $0x380] sm:$0xff]
  %v129 = vld [vmem:[%s1 + $0x388] sm:$0xff]
  %v130 = vld [vmem:[%s1 + $0x390] sm:$0xff]
  %v131 = vld [vmem:[%s1 + $0x398] sm:$0xff]
  %v132 = vld [vmem:[%s1 + $0x3a0] sm:$0xff]
  %v133 = vld [vmem:[%s1 + $0x3a8] sm:$0xff]
  %v134 = vld [vmem:[%s1 + $0x3b0] sm:$0xff]
  %v135 = vld [vmem:[%s1 + $0x3b8] sm:$0xff]
  %v136 = vld [vmem:[%s1 + $0x3c0] sm:$0xff]
  %v137 = vld [vmem:[%s1 + $0x3c8] sm:$0xff]
  %v138 = vld [vmem:[%s1 + $0x3d0] sm:$0xff]
  %v139 = vld [vmem:[%s1 + $0x3d8] sm:$0xff]
  %v140 = vld [vmem:[%s1 + $0x3e0] sm:$0xff]
  %v141 = vld [vmem:[%s1 + $0x3e8] sm:$0xff]
  %v142 = vld [vmem:[%s1 + $0x3f0] sm:$0xff]
  %v143 = vld [vmem:[%s1 + $0x3f8] sm:$0xff]
  %v144 = vld [vmem:[%s1 + $0x400] sm:$0xff]
  %v145 = vld [vmem:[%s1 + $0x408] sm:$0xff]
  %v146 = vld [vmem:[%s1 + $0x410] sm:$0xff]
  %v147 = vld [vmem:[%s1 + $0x418] sm:$0xff]
  %v148 = vld [vmem:[%s1 + $0x420] sm:$0xff]
  %v149 = vld [vmem:[%s1 + $0x428] sm:$0xff]
  %v150 = vld [vmem:[%s1 + $0x430] sm:$0xff]
  %v151 = vld [vmem:[%s1 + $0x438] sm:$0xff]
  %v152 = vld [vmem:[%s1 + $0x440] sm:$0xff]
  %v153 = vld [vmem:[%s1 + $0x448] sm:$0xff]
  %v154 = vld [vmem:[%s1 + $0x450] sm:$0xff]
  %v155 = vld [vmem:[%s1 + $0x458] sm:$0xff]
  %v156 = vld [vmem:[%s1 + $0x460] sm:$0xff]
  %v157 = vld [vmem:[%s1 + $0x468] sm:$0xff]
  %v158 = vld [vmem:[%s1 + $0x470] sm:$0xff]
  %v159 = vld [vmem:[%s1 + $0x478] sm:$0xff]
  %v160 = vld [vmem:[%s1 + $0x480] sm:$0xff]
  %v161 = vld [vmem:[%s1 + $0x488] sm:$0xff]
  %v162 = vld [vmem:[%s1 + $0x490] sm:$0xff]
  %v163 = vld [vmem:[%s1 + $0x498] sm:$0xff]
  %v164 = vld [vmem:[%s1 + $0x4a0] sm:$0xff]
  %v165 = vld [vmem:[%s1 + $0x4a8] sm:$0xff]
  %v166 = vld [vmem:[%s1 + $0x4b0] sm:$0xff]
  %v167 = vld [vmem:[%s1 + $0x4b8] sm:$0xff]
  %v168 = vld [vmem:[%s1 + $0x4c0] sm:$0xff]
  %v169 = vld [vmem:[%s1 + $0x4c8] sm:$0xff]
  %v170 = vld [vmem:[%s1 + $0x4d0] sm:$0xff]
  %v171 = vld [vmem:[%s1 + $0x4d8] sm:$0xff]
  %v172 = vld [vmem:[%s1 + $0x4e0] sm:$0xff]
  %v173 = vld [vmem:[%s1 + $0x4e8] sm:$0xff]
  %v174 = vld [vmem:[%s1 + $0x4f0] sm:$0xff]
  %v175 = vld [vmem:[%s1 + $0x4f8] sm:$0xff]
  %v176 = vld [vmem:[%s1 + $0x500] sm:$0xff]
  %v177 = vld [vmem:[%s1 + $0x508] sm:$0xff]
  %v178 = vld [vmem:[%s1 + $0x510] sm:$0xff]
  %v179 = vld [vmem:[%s1 + $0x518] sm:$0xff]
  %v180 = vld [vmem:[%s1 + $0x520] sm:$0xff]
  %v181 = vld [vmem:[%s1 + $0x528] sm:$0xff]
  %v182 = vld [vmem:[%s1 + $0x530] sm:$0xff]
  %v183 = vld [vmem:[%s1 + $0x538] sm:$0xff]
  %v184 = vld [vmem:[%s1 + $0x540] sm:$0xff]
  %v185 = vld [vmem:[%s1 + $0x548] sm:$0xff]
  %v186 = vld [vmem:[%s1 + $0x550] sm:$0xff]
  %v187 = vld [vmem:[%s1 + $0x558] sm:$0xff]
  %v188 = vld [vmem:[%s1 + $0x560] sm:$0xff]
  %v189 = vld [vmem:[%s1 + $0x568] sm:$0xff]
  %v190 = vld [vmem:[%s1 + $0x570] sm:$0xff]
  %v191 = vld [vmem:[%s1 + $0x578] sm:$0xff]
  %v192 = vld [vmem:[%s1 + $0x580] sm:$0xff]
  %v193 = vld [vmem:[%s1 + $0x588] sm:$0xff]
  %v194 = vld [vmem:[%s1 + $0x590] sm:$0xff]
  %v195 = vld [vmem:[%s1 + $0x598] sm:$0xff]
  %v196 = vld [vmem:[%s1 + $0x5a0] sm:$0xff]
  %v197 = vld [vmem:[%s1 + $0x5a8] sm:$0xff]
  %v198 = vld [vmem:[%s1 + $0x5b0] sm:$0xff]
  %v199 = vld [vmem:[%s1 + $0x5b8] sm:$0xff]
  %v200 = vld [vmem:[%s1 + $0x5c0] sm:$0xff]
  %v201 = vld [vmem:[%s1 + $0x5c8] sm:$0xff]
  %v202 = vld [vmem:[%s1 + $0x5d0] sm:$0xff]
  %v203 = vld [vmem:[%s1 + $0x5d8] sm:$0xff]
  %v204 = vld [vmem:[%s1 + $0x5e0] sm:$0xff]
  %v205 = vld [vmem:[%s1 + $0x5e8] sm:$0xff]
  %v206 = vld [vmem:[%s1 + $0x5f0] sm:$0xff]
  %v207 = vld [vmem:[%s1 + $0x5f8] sm:$0xff]
  %v208 = vld [vmem:[%s1 + $0x600] sm:$0xff]
  %v209 = vld [vmem:[%s1 + $0x608] sm:$0xff]
  %v210 = vld [vmem:[%s1 + $0x610] sm:$0xff]
  %v211 = vld [vmem:[%s1 + $0x618] sm:$0xff]
  %v212 = vld [vmem:[%s1 + $0x620] sm:$0xff]
  %v213 = vld [vmem:[%s1 + $0x628] sm:$0xff]
  %v214 = vld [vmem:[%s1 + $0x630] sm:$0xff]
  %v215 = vld [vmem:[%s1 + $0x638] sm:$0xff]
  %v216 = vld [vmem:[%s1 + $0x640] sm:$0xff]
  %v217 = vld [vmem:[%s1 + $0x648] sm:$0xff]
  %v218 = vld [vmem:[%s1 + $0x650] sm:$0xff]
  %v219 = vld [vmem:[%s1 + $0x658] sm:$0xff]
  %v220 = vld [vmem:[%s1 + $0x660] sm:$0xff]
  %v221 = vld [vmem:[%s1 + $0x668] sm:$0xff]
  %v222 = vld [vmem:[%s1 + $0x670] sm:$0xff]
  %v223 = vld [vmem:[%s1 + $0x678] sm:$0xff]
  %v224 = vld [vmem:[%s1 + $0x680] sm:$0xff]
  %v225 = vld [vmem:[%s1 + $0x688] sm:$0xff]
  %v226 = vld [vmem:[%s1 + $0x690] sm:$0xff]
  %v227 = vld [vmem:[%s1 + $0x698] sm:$0xff]
  %v228 = vld [vmem:[%s1 + $0x6a0] sm:$0xff]
  %v229 = vld [vmem:[%s1 + $0x6a8] sm:$0xff]
  %v230 = vld [vmem:[%s1 + $0x6b0] sm:$0xff]
  %v231 = vld [vmem:[%s1 + $0x6b8] sm:$0xff]
  %v232 = vld [vmem:[%s1 + $0x6c0] sm:$0xff]
  %v233 = vld [vmem:[%s1 + $0x6c8] sm:$0xff]
  %v234 = vld [vmem:[%s1 + $0x6d0] sm:$0xff]
  %v235 = vld [vmem:[%s1 + $0x6d8] sm:$0xff]
  %v236 = vld [vmem:[%s1 + $0x6e0] sm:$0xff]
  %v237 = vld [vmem:[%s1 + $0x6e8] sm:$0xff]
  %v238 = vld [vmem:[%s1 + $0x6f0] sm:$0xff]
  %v239 = vld [vmem:[%s1 + $0x6f8] sm:$0xff]
  %v240 = vld [vmem:[%s1 + $0x700] sm:$0xff]
  %v241 = vld [vmem:[%s1 + $0x708] sm:$0xff]
  %v242 = vld [vmem:[%s1 + $0x710] sm:$0xff]
  %v243 = vld [vmem:[%s1 + $0x718] sm:$0xff]
  %v244 = vld [vmem:[%s1 + $0x720] sm:$0xff]
  %v245 = vld [vmem:[%s1 + $0x728] sm:$0xff]
  %v246 = vld [vmem:[%s1 + $0x730] sm:$0xff]
  %v247 = vld [vmem:[%s1 + $0x738] sm:$0xff]
  %v248 = vld [vmem:[%s1 + $0x740] sm:$0xff]
  %v249 = vld [vmem:[%s1 + $0x748] sm:$0xff]
  %v250 = vld [vmem:[%s1 + $0x750] sm:$0xff]
  %v251 = vld [vmem:[%s1 + $0x758] sm:$0xff]
  %v252 = vld [vmem:[%s1 + $0x760] sm:$0xff]
  %v253 = vld [vmem:[%s1 + $0x768] sm:$0xff]
  %v254 = vld [vmem:[%s1 + $0x770] sm:$0xff]
  %v255 = vld [vmem:[%s1 + $0x778] sm:$0xff]
  %v256 = vld [vmem:[%s1 + $0x780] sm:$0xff]
  %v257 = vld [vmem:[%s1 + $0x788] sm:$0xff]
  %v258 = vld [vmem:[%s1 + $0x790] sm:$0xff]
  %v259 = vld [vmem:[%s1 + $0x798] sm:$0xff]
  %v260 = vld [vmem:[%s1 + $0x7a0] sm:$0xff]
  %v261 = vld [vmem:[%s1 + $0x7a8] sm:$0xff]
  %v262 = vld [vmem:[%s1 + $0x7b0] sm:$0xff]
  %v263 = vld [vmem:[%s1 + $0x7b8] sm:$0xff]
  %v264 = vld [vmem:[%s1 + $0x7c0] sm:$0xff]
  %v265 = vld [vmem:[%s1 + $0x7c8] sm:$0xff]
  %v266 = vld [vmem:[%s1 + $0x7d0] sm:$0xff]
  %v267 = vld [vmem:[%s1 + $0x7d8] sm:$0xff]
  %v268 = vld [vmem:[%s1 + $0x7e0] sm:$0xff]
  %v269 = vld [vmem:[%s1 + $0x7e8] sm:$0xff]
  %v270 = vld [vmem:[%s1 + $0x7f0] sm:$0xff]
  %v271 = vld [vmem:[%s1 + $0x7f8] sm:$0xff]
  %v272 = vld [vmem:[%s1 + $0x800] sm:$0xff]
  %v273 = vld [vmem:[%s1 + $0x808] sm:$0xff]
  %v274 = vld [vmem:[%s1 + $0x810] sm:$0xff]
  %v275 = vld [vmem:[%s1 + $0x818] sm:$0xff]
  %v276 = vld [vmem:[%s1 + $0x820] sm:$0xff]
  %v277 = vld [vmem:[%s1 + $0x828] sm:$0xff]
  %v278 = vld [vmem:[%s1 + $0x830] sm:$0xff]
  %v279 = vld [vmem:[%s1 + $0x838] sm:$0xff]
  %v280 = vld [vmem:[%s1 + $0x840] sm:$0xff]
  %v281 = vld [vmem:[%s1 + $0x848] sm:$0xff]
  %v282 = vld [vmem:[%s1 + $0x850] sm:$0xff]
  %v283 = vld [vmem:[%s1 + $0x858] sm:$0xff]
  %v284 = vld [vmem:[%s1 + $0x860] sm:$0xff]
  %v285 = vld [vmem:[%s1 + $0x868] sm:$0xff]
  %v286 = vld [vmem:[%s1 + $0x870] sm:$0xff]
  %v287 = vld [vmem:[%s1 + $0x878] sm:$0xff]
  %v288 = vld [vmem:[%s1 + $0x880] sm:$0xff]
  %v289 = vld [vmem:[%s1 + $0x888] sm:$0xff]
  %v290 = vld [vmem:[%s1 + $0x890] sm:$0xff]
  %v291 = vld [vmem:[%s1 + $0x898] sm:$0xff]
  %v292 = vld [vmem:[%s1 + $0x8a0] sm:$0xff]
  %v293 = vld [vmem:[%s1 + $0x8a8] sm:$0xff]
  %v294 = vld [vmem:[%s1 + $0x8b0] sm:$0xff]
  %v295 = vld [vmem:[%s1 + $0x8b8] sm:$0xff]
  %v296 = vld [vmem:[%s1 + $0x8c0] sm:$0xff]
  %v297 = vld [vmem:[%s1 + $0x8c8] sm:$0xff]
  %v298 = vld [vmem:[%s1 + $0x8d0] sm:$0xff]
  %v299 = vld [vmem:[%s1 + $0x8d8] sm:$0xff]
  %v300 = vld [vmem:[%s1 + $0x8e0] sm:$0xff]
  %v301 = vld [vmem:[%s1 + $0x8e8] sm:$0xff]
  %v302 = vld [vmem:[%s1 + $0x8f0] sm:$0xff]
  %v303 = vld [vmem:[%s1 + $0x8f8] sm:$0xff]
  %v304 = vld [vmem:[%s1 + $0x900] sm:$0xff]
  %v305 = vld [vmem:[%s1 + $0x908] sm:$0xff]
  %v306 = vld [vmem:[%s1 + $0x910] sm:$0xff]
  %v307 = vld [vmem:[%s1 + $0x918] sm:$0xff]
  %v308 = vld [vmem:[%s1 + $0x920] sm:$0xff]
  %v309 = vld [vmem:[%s1 + $0x928] sm:$0xff]
  %v310 = vld [vmem:[%s1 + $0x930] sm:$0xff]
  %v311 = vld [vmem:[%s1 + $0x938] sm:$0xff]
  %v312 = vld [vmem:[%s1 + $0x940] sm:$0xff]
  %v313 = vld [vmem:[%s1 + $0x948] sm:$0xff]
  %v314 = vld [vmem:[%s1 + $0x950] sm:$0xff]
  %v315 = vld [vmem:[%s1 + $0x958] sm:$0xff]
  %v316 = vld [vmem:[%s1 + $0x960] sm:$0xff]
  %v317 = vld [vmem:[%s1 + $0x968] sm:$0xff]
  %v318 = vld [vmem:[%s1 + $0x970] sm:$0xff]
  %v319 = vld [vmem:[%s1 + $0x978] sm:$0xff]
  %v320 = vld [vmem:[%s1 + $0x980] sm:$0xff]
  %v321 = vld [vmem:[%s1 + $0x988] sm:$0xff]
  %v322 = vld [vmem:[%s1 + $0x990] sm:$0xff]
  %v323 = vld [vmem:[%s1 + $0x998] sm:$0xff]
  %v324 = vld [vmem:[%s1 + $0x9a0] sm:$0xff]
  %v325 = vld [vmem:[%s1 + $0x9a8] sm:$0xff]
  %v326 = vld [vmem:[%s1 + $0x9b0] sm:$0xff]
  %v327 = vld [vmem:[%s1 + $0x9b8] sm:$0xff]
  %v328 = vld [vmem:[%s1 + $0x9c0] sm:$0xff]
  %v329 = vld [vmem:[%s1 + $0x9c8] sm:$0xff]
  %v330 = vld [vmem:[%s1 + $0x9d0] sm:$0xff]
  %v331 = vld [vmem:[%s1 + $0x9d8] sm:$0xff]
  %v332 = vld [vmem:[%s1 + $0x9e0] sm:$0xff]
  %v333 = vld [vmem:[%s1 + $0x9e8] sm:$0xff]
  %v334 = vld [vmem:[%s1 + $0x9f0] sm:$0xff]
  %v335 = vld [vmem:[%s1 + $0x9f8] sm:$0xff]
  %v336 = vld [vmem:[%s1 + $0xa00] sm:$0xff]
  %v337 = vld [vmem:[%s1 + $0xa08] sm:$0xff]
  %v338 = vld [vmem:[%s1 + $0xa10] sm:$0xff]
  %v339 = vld [vmem:[%s1 + $0xa18] sm:$0xff]
  %v340 = vld [vmem:[%s1 + $0xa20] sm:$0xff]
  %v341 = vld [vmem:[%s1 + $0xa28] sm:$0xff]
  %v342 = vld [vmem:[%s1 + $0xa30] sm:$0xff]
  %v343 = vld [vmem:[%s1 + $0xa38] sm:$0xff]
  %v344 = vld [vmem:[%s1 + $0xa40] sm:$0xff]
  %v345 = vld [vmem:[%s1 + $0xa48] sm:$0xff]
  %v346 = vld [vmem:[%s1 + $0xa50] sm:$0xff]
  %v347 = vld [vmem:[%s1 + $0xa58] sm:$0xff]
  %v348 = vld [vmem:[%s1 + $0xa60] sm:$0xff]
  %v349 = vld [vmem:[%s1 + $0xa68] sm:$0xff]
  %v350 = vld [vmem:[%s1 + $0xa70] sm:$0xff]
  %v351 = vld [vmem:[%s1 + $0xa78] sm:$0xff]
  %v352 = vld [vmem:[%s1 + $0xa80] sm:$0xff]
  %v353 = vld [vmem:[%s1 + $0xa88] sm:$0xff]
  %v354 = vld [vmem:[%s1 + $0xa90] sm:$0xff]
  %v355 = vld [vmem:[%s1 + $0xa98] sm:$0xff]
  %v356 = vld [vmem:[%s1 + $0xaa0] sm:$0xff]
  %v357 = vld [vmem:[%s1 + $0xaa8] sm:$0xff]
  %v358 = vld [vmem:[%s1 + $0xab0] sm:$0xff]
  %v359 = vld [vmem:[%s1 + $0xab8] sm:$0xff]
  %v360 = vld [vmem:[%s1 + $0xac0] sm:$0xff]
  %v361 = vld [vmem:[%s1 + $0xac8] sm:$0xff]
  %v362 = vld [vmem:[%s1 + $0xad0] sm:$0xff]
  %v363 = vld [vmem:[%s1 + $0xad8] sm:$0xff]
  %v364 = vld [vmem:[%s1 + $0xae0] sm:$0xff]
  %v365 = vld [vmem:[%s1 + $0xae8] sm:$0xff]
  %v366 = vld [vmem:[%s1 + $0xaf0] sm:$0xff]
  %v367 = vld [vmem:[%s1 + $0xaf8] sm:$0xff]
  %v368 = vld [vmem:[%s1 + $0xb00] sm:$0xff]
  %v369 = vld [vmem:[%s1 + $0xb08] sm:$0xff]
  %v370 = vld [vmem:[%s1 + $0xb10] sm:$0xff]
  %v371 = vld [vmem:[%s1 + $0xb18] sm:$0xff]
  %v372 = vld [vmem:[%s1 + $0xb20] sm:$0xff]
  %v373 = vld [vmem:[%s1 + $0xb28] sm:$0xff]
  %v374 = vld [vmem:[%s1 + $0xb30] sm:$0xff]
  %v375 = vld [vmem:[%s1 + $0xb38] sm:$0xff]
  %v376 = vld [vmem:[%s1 + $0xb40] sm:$0xff]
  %v377 = vld [vmem:[%s1 + $0xb48] sm:$0xff]
  %v378 = vld [vmem:[%s1 + $0xb50] sm:$0xff]
  %v379 = vld [vmem:[%s1 + $0xb58] sm:$0xff]
  %v380 = vld [vmem:[%s1 + $0xb60] sm:$0xff]
  %v381 = vld [vmem:[%s1 + $0xb68] sm:$0xff]
  %v382 = vld [vmem:[%s1 + $0xb70] sm:$0xff]
  %v383 = vld [vmem:[%s1 + $0xb78] sm:$0xff]
  %v384 = vld [vmem:[%s1 + $0xb80] sm:$0xff]
  %v385 = vld [vmem:[%s1 + $0xb88] sm:$0xff]
  %v386 = vld [vmem:[%s1 + $0xb90] sm:$0xff]
  %v387 = vld [vmem:[%s1 + $0xb98] sm:$0xff]
  %v388 = vld [vmem:[%s1 + $0xba0] sm:$0xff]
  %v389 = vld [vmem:[%s1 + $0xba8] sm:$0xff]
  %v390 = vld [vmem:[%s1 + $0xbb0] sm:$0xff]
  %v391 = vld [vmem:[%s1 + $0xbb8] sm:$0xff]
  %v392 = vld [vmem:[%s1 + $0xbc0] sm:$0xff]
  %v393 = vld [vmem:[%s1 + $0xbc8] sm:$0xff]
  %v394 = vld [vmem:[%s1 + $0xbd0] sm:$0xff]
  %v395 = vld [vmem:[%s1 + $0xbd8] sm:$0xff]
  %v396 = vld [vmem:[%s1 + $0xbe0] sm:$0xff]
  %v397 = vld [vmem:[%s1 + $0xbe8] sm:$0xff]
  %v398 = vld [vmem:[%s1 + $0xbf0] sm:$0xff]
  %v399 = vld [vmem:[%s1 + $0xbf8] sm:$0xff]
  %v400 = vld [vmem:[%s1 + $0xc00] sm:$0xff]
  %v401 = vld [vmem:[%s1 + $0xc08] sm:$0xff]
  %v402 = vld [vmem:[%s1 + $0xc10] sm:$0xff]
  %v403 = vld [vmem:[%s1 + $0xc18] sm:$0xff]
  %v404 = vld [vmem:[%s1 + $0xc20] sm:$0xff]
  %v405 = vld [vmem:[%s1 + $0xc28] sm:$0xff]
  %v406 = vld [vmem:[%s1 + $0xc30] sm:$0xff]
  %v407 = vld [vmem:[%s1 + $0xc38] sm:$0xff]
  %v408 = vld [vmem:[%s1 + $0xc40] sm:$0xff]
  %v409 = vld [vmem:[%s1 + $0xc48] sm:$0xff]
  %v410 = vld [vmem:[%s1 + $0xc50] sm:$0xff]
  %v411 = vld [vmem:[%s1 + $0xc58] sm:$0xff]
  %v412 = vld [vmem:[%s1 + $0xc60] sm:$0xff]
  %v413 = vld [vmem:[%s1 + $0xc68] sm:$0xff]
  %v414 = vld [vmem:[%s1 + $0xc70] sm:$0xff]
  %v415 = vld [vmem:[%s1 + $0xc78] sm:$0xff]
  %v416 = vld [vmem:[%s1 + $0xc80] sm:$0xff]
  %v417 = vld [vmem:[%s1 + $0xc88] sm:$0xff]
  %v418 = vld [vmem:[%s1 + $0xc90] sm:$0xff]
  %v419 = vld [vmem:[%s1 + $0xc98] sm:$0xff]
  %v420 = vld [vmem:[%s1 + $0xca0] sm:$0xff]
  %v421 = vld [vmem:[%s1 + $0xca8] sm:$0xff]
  %v422 = vld [vmem:[%s1 + $0xcb0] sm:$0xff]
  %v423 = vld [vmem:[%s1 + $0xcb8] sm:$0xff]
  %v424 = vld [vmem:[%s1 + $0xcc0] sm:$0xff]
  %v425 = vld [vmem:[%s1 + $0xcc8] sm:$0xff]
  %v426 = vld [vmem:[%s1 + $0xcd0] sm:$0xff]
  %v427 = vld [vmem:[%s1 + $0xcd8] sm:$0xff]
  %v428 = vld [vmem:[%s1 + $0xce0] sm:$0xff]
  %v429 = vld [vmem:[%s1 + $0xce8] sm:$0xff]
  %v430 = vld [vmem:[%s1 + $0xcf0] sm:$0xff]
  %v431 = vld [vmem:[%s1 + $0xcf8] sm:$0xff]
  %v432 = vld [vmem:[%s2] sm:$0xff]
  %434 = vset.pattern.permute.xlu0 0
  %435 = vperm.xlu0 %434, %v432
  %v436 = vpop.permute.xlu0 %435
  %438 = vmatprep.subr.mxu0 %v212
  %439 = vmatpush1.msra.mxu0 %v211
  %440 = vmatprep.subr.mxu0 %v199
  %441 = vmatpush1.msra.mxu0 %v198
  %442 = vmatprep.subr.mxu0 %v186
  %443 = vmatpush1.msra.mxu0 %v185
  %444 = vmatprep.subr.mxu0 %v173
  %445 = vmatpush1.msra.mxu0 %v172
  %446 = vmatprep.subr.mxu0 %v160
  %447 = vmatpush1.msra.mxu0 %v159
  %448 = vmatprep.subr.mxu0 %v147
  %449 = vmatpush1.msra.mxu0 %v146
  %450 = vmatprep.subr.mxu0 %v134
  %451 = vmatpush1.msra.mxu0 %v133
  %452 = vmatprep.subr.mxu0 %v121
  %453 = vmatpush1.msra.mxu0 %v120
  %454 = vmatprep.subr.mxu0 %v108
  %455 = vmatpush1.msra.mxu0 %v107
  %456 = vmatprep.subr.mxu0 %v95
  %457 = vmatpush1.msra.mxu0 %v94
  %458 = vmatprep.subr.mxu0 %v82
  %459 = vmatpush1.msra.mxu0 %v81
  %460 = vmatprep.subr.mxu0 %v69
  %461 = vmatpush1.msra.mxu0 %v68
  %462 = vmatprep.subr.mxu0 %v56
  %463 = vmatpush1.msra.mxu0 %v55
  %464 = vmatprep.subr.mxu0 %v43
  %465 = vmatpush1.msra.mxu0 %v42
  %466 = vmatprep.subr.mxu0 %v30
  %467 = vmatpush1.msra.mxu0 %v29
  %468 = vmatprep.subr.mxu0 %v17
  %469 = vmatpush1.msra.mxu0 %v16
  %470 = vmatprep.subr.mxu0 %v420
  %471 = vmatpush2.msra.mxu0 %v419
  %472 = vmatprep.subr.mxu0 %v407
  %473 = vmatpush2.msra.mxu0 %v406
  %474 = vmatprep.subr.mxu0 %v394
  %475 = vmatpush2.msra.mxu0 %v393
  %476 = vmatprep.subr.mxu0 %v381
  %477 = vmatpush2.msra.mxu0 %v380
  %478 = vmatprep.subr.mxu0 %v368
  %479 = vmatpush2.msra.mxu0 %v367
  %480 = vmatprep.subr.mxu0 %v355
  %481 = vmatpush2.msra.mxu0 %v354
  %482 = vmatprep.subr.mxu0 %v342
  %483 = vmatpush2.msra.mxu0 %v341
  %484 = vmatprep.subr.mxu0 %v329
  %485 = vmatpush2.msra.mxu0 %v328
  %486 = vmatprep.subr.mxu0 %v316
  %487 = vmatpush2.msra.mxu0 %v315
  %488 = vmatprep.subr.mxu0 %v303
  %489 = vmatpush2.msra.mxu0 %v302
  %490 = vmatprep.subr.mxu0 %v290
  %491 = vmatpush2.msra.mxu0 %v289
  %492 = vmatprep.subr.mxu0 %v277
  %493 = vmatpush2.msra.mxu0 %v276
  %494 = vmatprep.subr.mxu0 %v264
  %495 = vmatpush2.msra.mxu0 %v263
  %496 = vmatprep.subr.mxu0 %v251
  %497 = vmatpush2.msra.mxu0 %v250
  %498 = vmatprep.subr.mxu0 %v238
  %499 = vmatpush2.msra.mxu0 %v237
  %500 = vmatprep.subr.mxu0 %v225
  %501 = vmatpush2.msra.mxu0 %v224
  %502 = vmatprep.mubr.f32.mxu0 %v15
  %503 = vmatmul.mubr.f32.gmra.mxu0 %v14
  %v504 = vpop.f32.mrf.mxu0
  %v505 = vadd.f32 %v436, %v504
  %v506 = vpop.f32.mrf.mxu0
  %v507 = vadd.f32 %v436, %v506
  %508 = vdwg.mxu0
  %509 = vmatprep.subr.mxu0 %v214
  %510 = vmatpush1.msra.mxu0 %v213
  %511 = vmatprep.subr.mxu0 %v201
  %512 = vmatpush1.msra.mxu0 %v200
  %513 = vmatprep.subr.mxu0 %v188
  %514 = vmatpush1.msra.mxu0 %v187
  %515 = vmatprep.subr.mxu0 %v175
  %516 = vmatpush1.msra.mxu0 %v174
  %517 = vmatprep.subr.mxu0 %v162
  %518 = vmatpush1.msra.mxu0 %v161
  %519 = vmatprep.subr.mxu0 %v149
  %520 = vmatpush1.msra.mxu0 %v148
  %521 = vmatprep.subr.mxu0 %v136
  %522 = vmatpush1.msra.mxu0 %v135
  %523 = vmatprep.subr.mxu0 %v123
  %524 = vmatpush1.msra.mxu0 %v122
  %525 = vmatprep.subr.mxu0 %v110
  %526 = vmatpush1.msra.mxu0 %v109
  %527 = vmatprep.subr.mxu0 %v97
  %528 = vmatpush1.msra.mxu0 %v96
  %529 = vmatprep.subr.mxu0 %v84
  %530 = vmatpush1.msra.mxu0 %v83
  %531 = vmatprep.subr.mxu0 %v71
  %532 = vmatpush1.msra.mxu0 %v70
  %533 = vmatprep.subr.mxu0 %v58
  %534 = vmatpush1.msra.mxu0 %v57
  %535 = vmatprep.subr.mxu0 %v45
  %536 = vmatpush1.msra.mxu0 %v44
  %537 = vmatprep.subr.mxu0 %v32
  %538 = vmatpush1.msra.mxu0 %v31
  %539 = vmatprep.subr.mxu0 %v19
  %540 = vmatpush1.msra.mxu0 %v18
  %541 = vmatprep.subr.mxu0 %v422
  %542 = vmatpush2.msra.mxu0 %v421
  %543 = vmatprep.subr.mxu0 %v409
  %544 = vmatpush2.msra.mxu0 %v408
  %545 = vmatprep.subr.mxu0 %v396
  %546 = vmatpush2.msra.mxu0 %v395
  %547 = vmatprep.subr.mxu0 %v383
  %548 = vmatpush2.msra.mxu0 %v382
  %549 = vmatprep.subr.mxu0 %v370
  %550 = vmatpush2.msra.mxu0 %v369
  %551 = vmatprep.subr.mxu0 %v357
  %552 = vmatpush2.msra.mxu0 %v356
  %553 = vmatprep.subr.mxu0 %v344
  %554 = vmatpush2.msra.mxu0 %v343
  %555 = vmatprep.subr.mxu0 %v331
  %556 = vmatpush2.msra.mxu0 %v330
  %557 = vmatprep.subr.mxu0 %v318
  %558 = vmatpush2.msra.mxu0 %v317
  %559 = vmatprep.subr.mxu0 %v305
  %560 = vmatpush2.msra.mxu0 %v304
  %561 = vmatprep.subr.mxu0 %v292
  %562 = vmatpush2.msra.mxu0 %v291
  %563 = vmatprep.subr.mxu0 %v279
  %564 = vmatpush2.msra.mxu0 %v278
  %565 = vmatprep.subr.mxu0 %v266
  %566 = vmatpush2.msra.mxu0 %v265
  %567 = vmatprep.subr.mxu0 %v253
  %568 = vmatpush2.msra.mxu0 %v252
  %569 = vmatprep.subr.mxu0 %v240
  %570 = vmatpush2.msra.mxu0 %v239
  %571 = vmatprep.subr.mxu0 %v227
  %572 = vmatpush2.msra.mxu0 %v226
  %573 = vmatprep.mubr.f32.mxu0 %v15
  %574 = vmatmul.mubr.f32.gmra.mxu0 %v14
  %v575 = vpop.f32.mrf.mxu0
  %v576 = vadd.f32 %v436, %v575
  %v577 = vpop.f32.mrf.mxu0
  %v578 = vadd.f32 %v436, %v577
  %579 = vdwg.mxu0
  %580 = vmatprep.subr.mxu0 %v216
  %581 = vmatpush1.msra.mxu0 %v215
  %582 = vmatprep.subr.mxu0 %v203
  %583 = vmatpush1.msra.mxu0 %v202
  %584 = vmatprep.subr.mxu0 %v190
  %585 = vmatpush1.msra.mxu0 %v189
  %586 = vmatprep.subr.mxu0 %v177
  %587 = vmatpush1.msra.mxu0 %v176
  %588 = vmatprep.subr.mxu0 %v164
  %589 = vmatpush1.msra.mxu0 %v163
  %590 = vmatprep.subr.mxu0 %v151
  %591 = vmatpush1.msra.mxu0 %v150
  %592 = vmatprep.subr.mxu0 %v138
  %593 = vmatpush1.msra.mxu0 %v137
  %594 = vmatprep.subr.mxu0 %v125
  %595 = vmatpush1.msra.mxu0 %v124
  %596 = vmatprep.subr.mxu0 %v112
  %597 = vmatpush1.msra.mxu0 %v111
  %598 = vmatprep.subr.mxu0 %v99
  %599 = vmatpush1.msra.mxu0 %v98
  %600 = vmatprep.subr.mxu0 %v86
  %601 = vmatpush1.msra.mxu0 %v85
  %602 = vmatprep.subr.mxu0 %v73
  %603 = vmatpush1.msra.mxu0 %v72
  %604 = vmatprep.subr.mxu0 %v60
  %605 = vmatpush1.msra.mxu0 %v59
  %606 = vmatprep.subr.mxu0 %v47
  %607 = vmatpush1.msra.mxu0 %v46
  %608 = vmatprep.subr.mxu0 %v34
  %609 = vmatpush1.msra.mxu0 %v33
  %610 = vmatprep.subr.mxu0 %v21
  %611 = vmatpush1.msra.mxu0 %v20
  %612 = vmatprep.subr.mxu0 %v424
  %613 = vmatpush2.msra.mxu0 %v423
  %614 = vmatprep.subr.mxu0 %v411
  %615 = vmatpush2.msra.mxu0 %v410
  %616 = vmatprep.subr.mxu0 %v398
  %617 = vmatpush2.msra.mxu0 %v397
  %618 = vmatprep.subr.mxu0 %v385
  %619 = vmatpush2.msra.mxu0 %v384
  %620 = vmatprep.subr.mxu0 %v372
  %621 = vmatpush2.msra.mxu0 %v371
  %622 = vmatprep.subr.mxu0 %v359
  %623 = vmatpush2.msra.mxu0 %v358
  %624 = vmatprep.subr.mxu0 %v346
  %625 = vmatpush2.msra.mxu0 %v345
  %626 = vmatprep.subr.mxu0 %v333
  %627 = vmatpush2.msra.mxu0 %v332
  %628 = vmatprep.subr.mxu0 %v320
  %629 = vmatpush2.msra.mxu0 %v319
  %630 = vmatprep.subr.mxu0 %v307
  %631 = vmatpush2.msra.mxu0 %v306
  %632 = vmatprep.subr.mxu0 %v294
  %633 = vmatpush2.msra.mxu0 %v293
  %634 = vmatprep.subr.mxu0 %v281
  %635 = vmatpush2.msra.mxu0 %v280
  %636 = vmatprep.subr.mxu0 %v268
  %637 = vmatpush2.msra.mxu0 %v267
  %638 = vmatprep.subr.mxu0 %v255
  %639 = vmatpush2.msra.mxu0 %v254
  %640 = vmatprep.subr.mxu0 %v242
  %641 = vmatpush2.msra.mxu0 %v241
  %642 = vmatprep.subr.mxu0 %v229
  %643 = vmatpush2.msra.mxu0 %v228
  %644 = vmatprep.mubr.f32.mxu0 %v15
  %645 = vmatmul.mubr.f32.gmra.mxu0 %v14
  %v646 = vpop.f32.mrf.mxu0
  %v647 = vadd.f32 %v436, %v646
  %v648 = vpop.f32.mrf.mxu0
  %v649 = vadd.f32 %v436, %v648
  %650 = vdwg.mxu0
  %651 = vmatprep.subr.mxu0 %v218
  %652 = vmatpush1.msra.mxu0 %v217
  %653 = vmatprep.subr.mxu0 %v205
  %654 = vmatpush1.msra.mxu0 %v204
  %655 = vmatprep.subr.mxu0 %v192
  %656 = vmatpush1.msra.mxu0 %v191
  %657 = vmatprep.subr.mxu0 %v179
  %658 = vmatpush1.msra.mxu0 %v178
  %659 = vmatprep.subr.mxu0 %v166
  %660 = vmatpush1.msra.mxu0 %v165
  %661 = vmatprep.subr.mxu0 %v153
  %662 = vmatpush1.msra.mxu0 %v152
  %663 = vmatprep.subr.mxu0 %v140
  %664 = vmatpush1.msra.mxu0 %v139
  %665 = vmatprep.subr.mxu0 %v127
  %666 = vmatpush1.msra.mxu0 %v126
  %667 = vmatprep.subr.mxu0 %v114
  %668 = vmatpush1.msra.mxu0 %v113
  %669 = vmatprep.subr.mxu0 %v101
  %670 = vmatpush1.msra.mxu0 %v100
  %671 = vmatprep.subr.mxu0 %v88
  %672 = vmatpush1.msra.mxu0 %v87
  %673 = vmatprep.subr.mxu0 %v75
  %674 = vmatpush1.msra.mxu0 %v74
  %675 = vmatprep.subr.mxu0 %v62
  %676 = vmatpush1.msra.mxu0 %v61
  %677 = vmatprep.subr.mxu0 %v49
  %678 = vmatpush1.msra.mxu0 %v48
  %679 = vmatprep.subr.mxu0 %v36
  %680 = vmatpush1.msra.mxu0 %v35
  %681 = vmatprep.subr.mxu0 %v23
  %682 = vmatpush1.msra.mxu0 %v22
  %683 = vmatprep.subr.mxu0 %v426
  %684 = vmatpush2.msra.mxu0 %v425
  %685 = vmatprep.subr.mxu0 %v413
  %686 = vmatpush2.msra.mxu0 %v412
  %687 = vmatprep.subr.mxu0 %v400
  %688 = vmatpush2.msra.mxu0 %v399
  %689 = vmatprep.subr.mxu0 %v387
  %690 = vmatpush2.msra.mxu0 %v386
  %691 = vmatprep.subr.mxu0 %v374
  %692 = vmatpush2.msra.mxu0 %v373
  %693 = vmatprep.subr.mxu0 %v361
  %694 = vmatpush2.msra.mxu0 %v360
  %695 = vmatprep.subr.mxu0 %v348
  %696 = vmatpush2.msra.mxu0 %v347
  %697 = vmatprep.subr.mxu0 %v335
  %698 = vmatpush2.msra.mxu0 %v334
  %699 = vmatprep.subr.mxu0 %v322
  %700 = vmatpush2.msra.mxu0 %v321
  %701 = vmatprep.subr.mxu0 %v309
  %702 = vmatpush2.msra.mxu0 %v308
  %703 = vmatprep.subr.mxu0 %v296
  %704 = vmatpush2.msra.mxu0 %v295
  %705 = vmatprep.subr.mxu0 %v283
  %706 = vmatpush2.msra.mxu0 %v282
  %707 = vmatprep.subr.mxu0 %v270
  %708 = vmatpush2.msra.mxu0 %v269
  %709 = vmatprep.subr.mxu0 %v257
  %710 = vmatpush2.msra.mxu0 %v256
  %711 = vmatprep.subr.mxu0 %v244
  %712 = vmatpush2.msra.mxu0 %v243
  %713 = vmatprep.subr.mxu0 %v231
  %714 = vmatpush2.msra.mxu0 %v230
  %715 = vmatprep.mubr.f32.mxu0 %v15
  %716 = vmatmul.mubr.f32.gmra.mxu0 %v14
  %v717 = vpop.f32.mrf.mxu0
  %v718 = vadd.f32 %v436, %v717
  %v719 = vpop.f32.mrf.mxu0
  %v720 = vadd.f32 %v436, %v719
  %721 = vdwg.mxu0
  %722 = vmatprep.subr.mxu0 %v220
  %723 = vmatpush1.msra.mxu0 %v219
  %724 = vmatprep.subr.mxu0 %v207
  %725 = vmatpush1.msra.mxu0 %v206
  %726 = vmatprep.subr.mxu0 %v194
  %727 = vmatpush1.msra.mxu0 %v193
  %728 = vmatprep.subr.mxu0 %v181
  %729 = vmatpush1.msra.mxu0 %v180
  %730 = vmatprep.subr.mxu0 %v168
  %731 = vmatpush1.msra.mxu0 %v167
  %732 = vmatprep.subr.mxu0 %v155
  %733 = vmatpush1.msra.mxu0 %v154
  %734 = vmatprep.subr.mxu0 %v142
  %735 = vmatpush1.msra.mxu0 %v141
  %736 = vmatprep.subr.mxu0 %v129
  %737 = vmatpush1.msra.mxu0 %v128
  %738 = vmatprep.subr.mxu0 %v116
  %739 = vmatpush1.msra.mxu0 %v115
  %740 = vmatprep.subr.mxu0 %v103
  %741 = vmatpush1.msra.mxu0 %v102
  %742 = vmatprep.subr.mxu0 %v90
  %743 = vmatpush1.msra.mxu0 %v89
  %744 = vmatprep.subr.mxu0 %v77
  %745 = vmatpush1.msra.mxu0 %v76
  %746 = vmatprep.subr.mxu0 %v64
  %747 = vmatpush1.msra.mxu0 %v63
  %748 = vmatprep.subr.mxu0 %v51
  %749 = vmatpush1.msra.mxu0 %v50
  %750 = vmatprep.subr.mxu0 %v38
  %751 = vmatpush1.msra.mxu0 %v37
  %752 = vmatprep.subr.mxu0 %v25
  %753 = vmatpush1.msra.mxu0 %v24
  %754 = vmatprep.subr.mxu0 %v428
  %755 = vmatpush2.msra.mxu0 %v427
  %756 = vmatprep.subr.mxu0 %v415
  %757 = vmatpush2.msra.mxu0 %v414
  %758 = vmatprep.subr.mxu0 %v402
  %759 = vmatpush2.msra.mxu0 %v401
  %760 = vmatprep.subr.mxu0 %v389
  %761 = vmatpush2.msra.mxu0 %v388
  %762 = vmatprep.subr.mxu0 %v376
  %763 = vmatpush2.msra.mxu0 %v375
  %764 = vmatprep.subr.mxu0 %v363
  %765 = vmatpush2.msra.mxu0 %v362
  %766 = vmatprep.subr.mxu0 %v350
  %767 = vmatpush2.msra.mxu0 %v349
  %768 = vmatprep.subr.mxu0 %v337
  %769 = vmatpush2.msra.mxu0 %v336
  %770 = vmatprep.subr.mxu0 %v324
  %771 = vmatpush2.msra.mxu0 %v323
  %772 = vmatprep.subr.mxu0 %v311
  %773 = vmatpush2.msra.mxu0 %v310
  %774 = vmatprep.subr.mxu0 %v298
  %775 = vmatpush2.msra.mxu0 %v297
  %776 = vmatprep.subr.mxu0 %v285
  %777 = vmatpush2.msra.mxu0 %v284
  %778 = vmatprep.subr.mxu0 %v272
  %779 = vmatpush2.msra.mxu0 %v271
  %780 = vmatprep.subr.mxu0 %v259
  %781 = vmatpush2.msra.mxu0 %v258
  %782 = vmatprep.subr.mxu0 %v246
  %783 = vmatpush2.msra.mxu0 %v245
  %784 = vmatprep.subr.mxu0 %v233
  %785 = vmatpush2.msra.mxu0 %v232
  %786 = vmatprep.mubr.f32.mxu0 %v15
  %787 = vmatmul.mubr.f32.gmra.mxu0 %v14
  %v788 = vpop.f32.mrf.mxu0
  %v789 = vadd.f32 %v436, %v788
  %v790 = vpop.f32.mrf.mxu0
  %v791 = vadd.f32 %v436, %v790
  %792 = vdwg.mxu0
  %793 = vmatprep.subr.mxu0 %v222
  %794 = vmatpush1.msra.mxu0 %v221
  %795 = vmatprep.subr.mxu0 %v209
  %796 = vmatpush1.msra.mxu0 %v208
  %797 = vmatprep.subr.mxu0 %v196
  %798 = vmatpush1.msra.mxu0 %v195
  %799 = vmatprep.subr.mxu0 %v183
  %800 = vmatpush1.msra.mxu0 %v182
  %801 = vmatprep.subr.mxu0 %v170
  %802 = vmatpush1.msra.mxu0 %v169
  %803 = vmatprep.subr.mxu0 %v157
  %804 = vmatpush1.msra.mxu0 %v156
  %805 = vmatprep.subr.mxu0 %v144
  %806 = vmatpush1.msra.mxu0 %v143
  %807 = vmatprep.subr.mxu0 %v131
  %808 = vmatpush1.msra.mxu0 %v130
  %809 = vmatprep.subr.mxu0 %v118
  %810 = vmatpush1.msra.mxu0 %v117
  %811 = vmatprep.subr.mxu0 %v105
  %812 = vmatpush1.msra.mxu0 %v104
  %813 = vmatprep.subr.mxu0 %v92
  %814 = vmatpush1.msra.mxu0 %v91
  %815 = vmatprep.subr.mxu0 %v79
  %816 = vmatpush1.msra.mxu0 %v78
  %817 = vmatprep.subr.mxu0 %v66
  %818 = vmatpush1.msra.mxu0 %v65
  %819 = vmatprep.subr.mxu0 %v53
  %820 = vmatpush1.msra.mxu0 %v52
  %821 = vmatprep.subr.mxu0 %v40
  %822 = vmatpush1.msra.mxu0 %v39
  %823 = vmatprep.subr.mxu0 %v27
  %824 = vmatpush1.msra.mxu0 %v26
  %825 = vmatprep.subr.mxu0 %v430
  %826 = vmatpush2.msra.mxu0 %v429
  %827 = vmatprep.subr.mxu0 %v417
  %828 = vmatpush2.msra.mxu0 %v416
  %829 = vmatprep.subr.mxu0 %v404
  %830 = vmatpush2.msra.mxu0 %v403
  %831 = vmatprep.subr.mxu0 %v391
  %832 = vmatpush2.msra.mxu0 %v390
  %833 = vmatprep.subr.mxu0 %v378
  %834 = vmatpush2.msra.mxu0 %v377
  %835 = vmatprep.subr.mxu0 %v365
  %836 = vmatpush2.msra.mxu0 %v364
  %837 = vmatprep.subr.mxu0 %v352
  %838 = vmatpush2.msra.mxu0 %v351
  %839 = vmatprep.subr.mxu0 %v339
  %840 = vmatpush2.msra.mxu0 %v338
  %841 = vmatprep.subr.mxu0 %v326
  %842 = vmatpush2.msra.mxu0 %v325
  %843 = vmatprep.subr.mxu0 %v313
  %844 = vmatpush2.msra.mxu0 %v312
  %845 = vmatprep.subr.mxu0 %v300
  %846 = vmatpush2.msra.mxu0 %v299
  %847 = vmatprep.subr.mxu0 %v287
  %848 = vmatpush2.msra.mxu0 %v286
  %849 = vmatprep.subr.mxu0 %v274
  %850 = vmatpush2.msra.mxu0 %v273
  %851 = vmatprep.subr.mxu0 %v261
  %852 = vmatpush2.msra.mxu0 %v260
  %853 = vmatprep.subr.mxu0 %v248
  %854 = vmatpush2.msra.mxu0 %v247
  %855 = vmatprep.subr.mxu0 %v235
  %856 = vmatpush2.msra.mxu0 %v234
  %857 = vmatprep.mubr.f32.mxu0 %v15
  %858 = vmatmul.mubr.f32.gmra.mxu0 %v14
  %v859 = vpop.f32.mrf.mxu0
  %v860 = vadd.f32 %v436, %v859
  %v861 = vpop.f32.mrf.mxu0
  %v862 = vadd.f32 %v436, %v861
  %863 = vdwg.mxu0
  %864 = vmatprep.subr.mxu0 0.0
  %865 = vmatpush1.msra.mxu0 %v223
  %866 = vmatprep.subr.mxu0 0.0
  %867 = vmatpush1.msra.mxu0 %v210
  %868 = vmatprep.subr.mxu0 0.0
  %869 = vmatpush1.msra.mxu0 %v197
  %870 = vmatprep.subr.mxu0 0.0
  %871 = vmatpush1.msra.mxu0 %v184
  %872 = vmatprep.subr.mxu0 0.0
  %873 = vmatpush1.msra.mxu0 %v171
  %874 = vmatprep.subr.mxu0 0.0
  %875 = vmatpush1.msra.mxu0 %v158
  %876 = vmatprep.subr.mxu0 0.0
  %877 = vmatpush1.msra.mxu0 %v145
  %878 = vmatprep.subr.mxu0 0.0
  %879 = vmatpush1.msra.mxu0 %v132
  %880 = vmatprep.subr.mxu0 0.0
  %881 = vmatpush1.msra.mxu0 %v119
  %882 = vmatprep.subr.mxu0 0.0
  %883 = vmatpush1.msra.mxu0 %v106
  %884 = vmatprep.subr.mxu0 0.0
  %885 = vmatpush1.msra.mxu0 %v93
  %886 = vmatprep.subr.mxu0 0.0
  %887 = vmatpush1.msra.mxu0 %v80
  %888 = vmatprep.subr.mxu0 0.0
  %889 = vmatpush1.msra.mxu0 %v67
  %890 = vmatprep.subr.mxu0 0.0
  %891 = vmatpush1.msra.mxu0 %v54
  %892 = vmatprep.subr.mxu0 0.0
  %893 = vmatpush1.msra.mxu0 %v41
  %894 = vmatprep.subr.mxu0 0.0
  %895 = vmatpush1.msra.mxu0 %v28
  %896 = vmatprep.subr.mxu0 0.0
  %897 = vmatpush2.msra.mxu0 %v431
  %898 = vmatprep.subr.mxu0 0.0
  %899 = vmatpush2.msra.mxu0 %v418
  %900 = vmatprep.subr.mxu0 0.0
  %901 = vmatpush2.msra.mxu0 %v405
  %902 = vmatprep.subr.mxu0 0.0
  %903 = vmatpush2.msra.mxu0 %v392
  %904 = vmatprep.subr.mxu0 0.0
  %905 = vmatpush2.msra.mxu0 %v379
  %906 = vmatprep.subr.mxu0 0.0
  %907 = vmatpush2.msra.mxu0 %v366
  %908 = vmatprep.subr.mxu0 0.0
  %909 = vmatpush2.msra.mxu0 %v353
  %910 = vmatprep.subr.mxu0 0.0
  %911 = vmatpush2.msra.mxu0 %v340
  %912 = vmatprep.subr.mxu0 0.0
  %913 = vmatpush2.msra.mxu0 %v327
  %914 = vmatprep.subr.mxu0 0.0
  %915 = vmatpush2.msra.mxu0 %v314
  %916 = vmatprep.subr.mxu0 0.0
  %917 = vmatpush2.msra.mxu0 %v301
  %918 = vmatprep.subr.mxu0 0.0
  %919 = vmatpush2.msra.mxu0 %v288
  %920 = vmatprep.subr.mxu0 0.0
  %921 = vmatpush2.msra.mxu0 %v275
  %922 = vmatprep.subr.mxu0 0.0
  %923 = vmatpush2.msra.mxu0 %v262
  %924 = vmatprep.subr.mxu0 0.0
  %925 = vmatpush2.msra.mxu0 %v249
  %926 = vmatprep.subr.mxu0 0.0
  %927 = vmatpush2.msra.mxu0 %v236
  %928 = vmatprep.mubr.f32.mxu0 %v15
  %929 = vmatmul.mubr.f32.gmra.mxu0 %v14
  %v930 = vpop.f32.mrf.mxu0
  %v931 = vadd.f32 %v436, %v930
  %v932 = vpop.f32.mrf.mxu0
  %933 = vdwg.mxu0
  %v934 = vtanh.pop %v505
  %v935 = vtanh.pop %v507
  %v936 = vtanh.pop %v576
  %v937 = vtanh.pop %v578
  %v938 = vtanh.pop %v647
  %v939 = vtanh.pop %v649
  %v940 = vtanh.pop %v718
  %v941 = vtanh.pop %v720
  %v942 = vtanh.pop %v789
  %v943 = vtanh.pop %v791
  %v944 = vtanh.pop %v860
  %v945 = vtanh.pop %v862
  %v946 = vtanh.pop %v931
  %947 = vst [vmem:[%s3] sm:$0xff] %v934
  %948 = vst [vmem:[%s3 + $0x8] sm:$0xff] %v935
  %949 = vst [vmem:[%s3 + $0x10] sm:$0xff] %v936
  %950 = vst [vmem:[%s3 + $0x18] sm:$0xff] %v937
  %951 = vst [vmem:[%s3 + $0x20] sm:$0xff] %v938
  %952 = vst [vmem:[%s3 + $0x28] sm:$0xff] %v939
  %953 = vst [vmem:[%s3 + $0x30] sm:$0xff] %v940
  %954 = vst [vmem:[%s3 + $0x38] sm:$0xff] %v941
  %955 = vst [vmem:[%s3 + $0x40] sm:$0xff] %v942
  %956 = vst [vmem:[%s3 + $0x48] sm:$0xff] %v943
  %957 = vst [vmem:[%s3 + $0x50] sm:$0xff] %v944
  %958 = vst [vmem:[%s3 + $0x58] sm:$0xff] %v945
  %959 = vst [vmem:[%s3 + $0x60] sm:$0xff] %v946
  // Predicated region
  $region14: #{generator_forward.7} parent=0 // pred_check
    _
  $region15: #{generator_forward.7} parent=0 // pred_check_branch
    %961 = sbr.rel (0) target = $region17
  $region16: #{generator_forward.7} parent=0 // pred_region
    _
  $region17: #{generator_forward.7} parent=0 // pred_fallthru
    _
  // Predicated region
  $region18: #{generator_forward.7} parent=0 // pred_check
    _
  $region19: #{generator_forward.7} parent=0 // pred_check_branch
    %963 = sbr.rel (0) target = $region21
  $region20: #{generator_forward.7} parent=0 // pred_region
    _
  $region21: #{generator_forward.7} parent=0 // pred_fallthru
    _

</llo_original>
